<compile_context>
chip_gen: v7x
topology: tpu7x:2x2x1
jax: 0.10.0
libtpu: 0.0.40
codegen_flags: <defaults>
</compile_context>

<pallas_src>
import jax
import jax.numpy as jnp
from jax.experimental import pallas as pl
from jax.experimental.pallas import tpu as pltpu


def _make_kernel(SB, N, D, K):
    KD = K * D

    def kernel(ob_ref, z_ref, wx_ref, wz_ref, b_ref, prior_ref, out_ref):
        # ---- fused linear layers: two MXU pushes, no ob/z lane-concat ----
        ob2 = ob_ref[...].reshape(SB * N, D)                       # [SB*N, D]
        z2 = z_ref[...].reshape(SB * N, K)                         # [SB*N, K]
        h = (jnp.dot(ob2, wx_ref[...], preferred_element_type=jnp.float32)
             + jnp.dot(z2, wz_ref[...], preferred_element_type=jnp.float32)
             + b_ref[...])                                         # [SB*N, D+K]
        nn_ob = h[:, :D]                                           # [SB*N, D]
        logits = h[:, D:]                                          # [SB*N, K]

        # ---- softmax over K (stabilized); divide moved to the EUP ----
        logits = logits - jnp.max(logits, axis=-1, keepdims=True)
        e = jnp.exp(logits)
        gamma = e * pl.reciprocal(jnp.sum(e, axis=-1, keepdims=True), approx=True)

        # ---- sufficient statistics (no lane-concat; 2 tiny contractions + 1 reduce) ----
        gamma3 = gamma.reshape(SB, N, K)
        nn3 = nn_ob.reshape(SB, N, D)
        dn = (((1,), (1,)), ((0,), (0,)))                          # contract N, batch SB
        stat1 = jnp.sum(gamma3, axis=1)                            # sum_n g        [SB, K]
        stat2 = jax.lax.dot_general(gamma3, nn3, dn,
                                    preferred_element_type=jnp.float32)   # [SB, K, D]
        stat3 = jax.lax.dot_general(gamma3, nn3 * nn3, dn,
                                    preferred_element_type=jnp.float32)   # [SB, K, D]

        # ---- Normal-Gamma posterior update (scalar priors from SMEM) ----
        pa = prior_ref[0]
        pb = prior_ref[1]
        pm = prior_ref[2]
        pn = prior_ref[3]

        s1 = jnp.broadcast_to(stat1[:, :, None], (SB, K, D))       # [SB, K, D]
        s1_nz = jnp.where(s1 == 0.0, 1.0, s1)
        x_bar = stat2 / s1_nz

        q_alpha = pa + 0.5 * s1
        q_nu = pn + s1
        q_mu = (pm * pn + stat2) / (s1 + pn)
        q_beta = (pb
                  + 0.5 * (stat3 - x_bar * x_bar * s1)
                  + 0.5 * (s1 * pn / (s1 + pn)) * (x_bar - pm) ** 2)

        # ---- lane-dense packed output: [SB, 4*K*D] (alpha|beta|mu|nu) ----
        out_ref[...] = jnp.concatenate(
            [q_alpha.reshape(SB, KD), q_beta.reshape(SB, KD),
             q_mu.reshape(SB, KD), q_nu.reshape(SB, KD)], axis=-1)

    return kernel


def prepare_params(params):
    """One-time parameter fusion (call at setup, not per forward).

    params: (w_ob, b_ob, w_g, b_g) stored (in, out) so y = x @ W + b, with the "ob"
            features first and the "z" features second (matching torch.cat((ob, z), -1)).
    Returns (W_x, W_z, b): row-split fused weight + fused bias for the kernel.
    """
    w_ob, b_ob, w_g, b_g = params
    D = w_ob.shape[1]
    F = w_ob.shape[0]
    W = jnp.concatenate([w_ob, w_g], axis=1).astype(jnp.float32)   # (D+K, D+K)
    W_x = W[:D, :]                                                 # multiplies ob rows
    W_z = W[D:, :]                                                 # multiplies z rows
    b = jnp.concatenate([b_ob, b_g]).reshape(1, F).astype(jnp.float32)
    return (W_x, W_z, b)


def prepare_prior(prior_ng):
    """One-time Normal-Gamma hyperparameter packing for SMEM."""
    return jnp.stack([jnp.asarray(p, jnp.float32).reshape(()) for p in prior_ng])


def enc_apg_eta_posterior_params(ob, z, prepared, prior):
    """Runs the Pallas kernel; returns (q_alpha, q_beta, q_mu, q_nu), each [SB, K, D]."""
    SB, N, D = ob.shape
    K = z.shape[-1]
    F = D + K
    KD = K * D
    W_x, W_z, b = prepared

    kernel = _make_kernel(SB, N, D, K)
    flops = (2 * SB * N * F * F            # fused linear layers
             + 2 * 2 * SB * N * K * D      # stat2 / stat3 contractions
             + SB * N * K)                 # stat1 reduction
    bytes_accessed = 4 * (SB * N * D + SB * N * K + F * F + F + 4 + SB * 4 * KD)

    packed = pl.pallas_call(
        kernel,
        out_shape=jax.ShapeDtypeStruct((SB, 4 * KD), jnp.float32),
        in_specs=[
            pl.BlockSpec(memory_space=pltpu.MemorySpace.VMEM),     # ob
            pl.BlockSpec(memory_space=pltpu.MemorySpace.VMEM),     # z
            pl.BlockSpec(memory_space=pltpu.MemorySpace.VMEM),     # W_x (ob rows of fused W)
            pl.BlockSpec(memory_space=pltpu.MemorySpace.VMEM),     # W_z (z rows of fused W)
            pl.BlockSpec(memory_space=pltpu.MemorySpace.VMEM),     # fused bias
            pl.BlockSpec(memory_space=pltpu.MemorySpace.SMEM),     # prior scalars
        ],
        out_specs=pl.BlockSpec(memory_space=pltpu.MemorySpace.VMEM),
        cost_estimate=pl.CostEstimate(flops=flops,
                                      transcendentals=SB * N * K,
                                      bytes_accessed=bytes_accessed),
    )(ob.astype(jnp.float32), z.astype(jnp.float32), W_x, W_z, b, prior)

    qa = packed[:, 0 * KD:1 * KD].reshape(SB, K, D)
    qb = packed[:, 1 * KD:2 * KD].reshape(SB, K, D)
    qm = packed[:, 2 * KD:3 * KD].reshape(SB, K, D)
    qn = packed[:, 3 * KD:4 * KD].reshape(SB, K, D)
    return qa, qb, qm, qn


def enc_apg_eta_forward(key, ob, z, prepared, prior, sampled=True,
                        tau_old=None, mu_old=None):
    """Full forward: posterior params (Pallas) + sampling (plain JAX glue)."""
    qa, qb, qm, qn = enc_apg_eta_posterior_params(ob, z, prepared, prior)
    if sampled:
        k1, k2 = jax.random.split(key)
        tau = jax.random.gamma(k1, qa) / qb                 # Gamma(alpha, rate=beta)
        sigma = 1.0 / jnp.sqrt(qn * tau)
        mu = qm + sigma * jax.random.normal(k2, qm.shape)
    else:
        tau = tau_old
        mu = mu_old
    return {"q_alpha": qa, "q_beta": qb, "q_mu": qm, "q_nu": qn,
            "precisions": tau, "means": mu}


def _reference_posterior_params(ob, z, params, prior_ng):
    """Pure-JAX reference of the same math, for a correctness check."""
    w_ob, b_ob, w_g, b_g = params
    pa, pb, pm, pn = prior_ng
    ob_z = jnp.concatenate([ob, z], axis=-1)
    nn_ob = jnp.einsum("bnf,fd->bnd", ob_z, w_ob,
                       precision=jax.lax.Precision.HIGHEST) + b_ob
    logits = jnp.einsum("bnf,fk->bnk", ob_z, w_g,
                        precision=jax.lax.Precision.HIGHEST) + b_g
    gamma = jax.nn.softmax(logits, axis=-1)
    stat1 = gamma.sum(-2)                                                   # [SB, K]
    stat2 = jnp.einsum("bnk,bnd->bkd", gamma, nn_ob,
                       precision=jax.lax.Precision.HIGHEST)                 # [SB, K, D]
    stat3 = jnp.einsum("bnk,bnd->bkd", gamma, nn_ob ** 2,
                       precision=jax.lax.Precision.HIGHEST)
    s1 = jnp.broadcast_to(stat1[..., None], stat2.shape)
    s1_nz = jnp.where(s1 == 0.0, 1.0, s1)
    x_bar = stat2 / s1_nz
    q_alpha = pa + s1 / 2.0
    q_nu = pn + s1
    q_mu = (pm * pn + stat2) / (s1 + pn)
    q_beta = pb + (stat3 - x_bar ** 2 * s1) / 2.0 \
        + (s1 * pn / (s1 + pn)) * (x_bar - pm) ** 2 / 2.0
    return q_alpha, q_beta, q_mu, q_nu


if __name__ == "__main__":
    # Small shapes consistent with the GMM module: S*B=6 traces, N=64 points, K=8, D=4.
    SB, N, K, D = 6, 64, 8, 4

    root = jax.random.PRNGKey(0)
    k_ob, k_z, k_w1, k_b1, k_w2, k_b2, k_sample = jax.random.split(root, 7)

    ob = jax.random.normal(k_ob, (SB, N, D), dtype=jnp.float32)
    z = jax.nn.one_hot(jax.random.randint(k_z, (SB, N), 0, K), K, dtype=jnp.float32)

    # Deterministic parameter init (shapes from nn.Linear(K+D, D) / nn.Linear(K+D, K)),
    # stored (in, out) so y = x @ W + b.
    lim = 1.0 / jnp.sqrt(jnp.float32(K + D))
    w_ob = jax.random.uniform(k_w1, (D + K, D), jnp.float32, -lim, lim)
    b_ob = jax.random.uniform(k_b1, (D,), jnp.float32, -lim, lim)
    w_g = jax.random.uniform(k_w2, (D + K, K), jnp.float32, -lim, lim)
    b_g = jax.random.uniform(k_b2, (K,), jnp.float32, -lim, lim)
    params = (w_ob, b_ob, w_g, b_g)

    # Normal-Gamma prior hyperparameters (scalars, passed to the kernel via SMEM).
    prior_ng = (jnp.float32(2.0),    # prior_alpha
                jnp.float32(2.0),    # prior_beta
                jnp.float32(0.0),    # prior_mu
                jnp.float32(0.1))    # prior_nu

    # One-time setup (hoisted out of the per-call path).
    prepared = prepare_params(params)
    prior = prepare_prior(prior_ng)

    out = enc_apg_eta_forward(k_sample, ob, z, prepared, prior, sampled=True)
    jax.block_until_ready(out)

    # Correctness check of the Pallas-computed posterior parameters.
    ref = _reference_posterior_params(ob, z, params, prior_ng)
    got = (out["q_alpha"], out["q_beta"], out["q_mu"], out["q_nu"])
    for r, g in zip(ref, got):
        assert jnp.allclose(r, g, rtol=1e-2, atol=1e-2), (
            float(jnp.max(jnp.abs(r - g))))

    print("KERNEL_OK")
</pallas_src>

<mosaic_0001>
module attributes {stable_mosaic.version = 11 : i64} {
  func.func @kernel(%arg0: memref<6x64x4xf32, #tpu.memory_space<vmem>>, %arg1: memref<6x64x8xf32, #tpu.memory_space<vmem>>, %arg2: memref<4x12xf32, #tpu.memory_space<vmem>>, %arg3: memref<8x12xf32, #tpu.memory_space<vmem>>, %arg4: memref<1x12xf32, #tpu.memory_space<vmem>>, %arg5: memref<4xf32, #tpu.memory_space<smem>>, %arg6: memref<6x128xf32, #tpu.memory_space<vmem>>) attributes {dimension_semantics = [], scalar_prefetch = 0 : i64, scratch_operands = 0 : i64, tpu.core_type = #tpu.core_type<tc>} {
    %c0 = arith.constant 0 : index
    %c0_0 = arith.constant 0 : index
    %c0_1 = arith.constant 0 : index
    %0 = vector.load %arg0[%c0, %c0_0, %c0_1] : memref<6x64x4xf32, #tpu.memory_space<vmem>>, vector<6x64x4xf32>
    %1 = vector.shape_cast %0 : vector<6x64x4xf32> to vector<384x4xf32>
    %c0_2 = arith.constant 0 : index
    %c0_3 = arith.constant 0 : index
    %c0_4 = arith.constant 0 : index
    %2 = vector.load %arg1[%c0_2, %c0_3, %c0_4] : memref<6x64x8xf32, #tpu.memory_space<vmem>>, vector<6x64x8xf32>
    %3 = vector.shape_cast %2 : vector<6x64x8xf32> to vector<384x8xf32>
    %c0_5 = arith.constant 0 : index
    %c0_6 = arith.constant 0 : index
    %4 = vector.load %arg2[%c0_5, %c0_6] : memref<4x12xf32, #tpu.memory_space<vmem>>, vector<4x12xf32>
    %cst = arith.constant dense<0.000000e+00> : vector<384x12xf32>
    %5 = tpu.matmul %1, %4, %cst {dimension_numbers = #tpu.dot_dimension_numbers<[1], [0], [0], [1], [0, 0, 1, 1], [], []>} : vector<384x4xf32>, vector<4x12xf32>, vector<384x12xf32> -> vector<384x12xf32>
    %c0_7 = arith.constant 0 : index
    %c0_8 = arith.constant 0 : index
    %6 = vector.load %arg3[%c0_7, %c0_8] : memref<8x12xf32, #tpu.memory_space<vmem>>, vector<8x12xf32>
    %cst_9 = arith.constant dense<0.000000e+00> : vector<384x12xf32>
    %7 = tpu.matmul %3, %6, %cst_9 {dimension_numbers = #tpu.dot_dimension_numbers<[1], [0], [0], [1], [0, 0, 1, 1], [], []>} : vector<384x8xf32>, vector<8x12xf32>, vector<384x12xf32> -> vector<384x12xf32>
    %8 = arith.addf %5, %7 : vector<384x12xf32>
    %c0_10 = arith.constant 0 : index
    %c0_11 = arith.constant 0 : index
    %9 = vector.load %arg4[%c0_10, %c0_11] : memref<1x12xf32, #tpu.memory_space<vmem>>, vector<1x12xf32>
    %10 = vector.broadcast %9 : vector<1x12xf32> to vector<384x12xf32>
    %11 = arith.addf %8, %10 : vector<384x12xf32>
    %12 = vector.extract_strided_slice %11 {offsets = [0, 0], sizes = [384, 4], strides = [1, 1]} : vector<384x12xf32> to vector<384x4xf32>
    %13 = vector.extract_strided_slice %11 {offsets = [0, 4], sizes = [384, 8], strides = [1, 1]} : vector<384x12xf32> to vector<384x8xf32>
    %cst_12 = arith.constant dense<0xFF800000> : vector<384xf32>
    %14 = vector.multi_reduction <maximumf>, %13, %cst_12 [1] : vector<384x8xf32> to vector<384xf32>
    %15 = vector.shape_cast %14 : vector<384xf32> to vector<384x1xf32>
    %16 = vector.broadcast %15 : vector<384x1xf32> to vector<384x8xf32>
    %17 = arith.subf %13, %16 : vector<384x8xf32>
    %18 = math.exp %17 : vector<384x8xf32>
    %cst_13 = arith.constant dense<0.000000e+00> : vector<384xf32>
    %19 = vector.multi_reduction <add>, %18, %cst_13 [1] : vector<384x8xf32> to vector<384xf32>
    %20 = vector.shape_cast %19 : vector<384xf32> to vector<384x1xf32>
    %21 = tpu.reciprocal %20 {approx = true} : vector<384x1xf32> -> vector<384x1xf32>
    %22 = vector.broadcast %21 : vector<384x1xf32> to vector<384x8xf32>
    %23 = arith.mulf %18, %22 : vector<384x8xf32>
    %24 = vector.shape_cast %23 : vector<384x8xf32> to vector<6x64x8xf32>
    %25 = vector.shape_cast %12 : vector<384x4xf32> to vector<6x64x4xf32>
    %cst_14 = arith.constant dense<0.000000e+00> : vector<6x8xf32>
    %26 = vector.multi_reduction <add>, %24, %cst_14 [1] : vector<6x64x8xf32> to vector<6x8xf32>
    %cst_15 = arith.constant dense<0.000000e+00> : vector<6x8x4xf32>
    %27 = tpu.matmul %24, %25, %cst_15 {dimension_numbers = #tpu.dot_dimension_numbers<[1], [1], [2], [2], [0, 0, 0, 2, 1, 2], [0], [0]>} : vector<6x64x8xf32>, vector<6x64x4xf32>, vector<6x8x4xf32> -> vector<6x8x4xf32>
    %28 = arith.mulf %25, %25 : vector<6x64x4xf32>
    %cst_16 = arith.constant dense<0.000000e+00> : vector<6x8x4xf32>
    %29 = tpu.matmul %24, %28, %cst_16 {dimension_numbers = #tpu.dot_dimension_numbers<[1], [1], [2], [2], [0, 0, 0, 2, 1, 2], [0], [0]>} : vector<6x64x8xf32>, vector<6x64x4xf32>, vector<6x8x4xf32> -> vector<6x8x4xf32>
    %c0_17 = arith.constant 0 : index
    %30 = memref.load %arg5[%c0_17] : memref<4xf32, #tpu.memory_space<smem>>
    %c1 = arith.constant 1 : index
    %31 = memref.load %arg5[%c1] : memref<4xf32, #tpu.memory_space<smem>>
    %c2 = arith.constant 2 : index
    %32 = memref.load %arg5[%c2] : memref<4xf32, #tpu.memory_space<smem>>
    %c3 = arith.constant 3 : index
    %33 = memref.load %arg5[%c3] : memref<4xf32, #tpu.memory_space<smem>>
    %34 = vector.shape_cast %26 : vector<6x8xf32> to vector<6x8x1xf32>
    %35 = vector.shape_cast %34 : vector<6x8x1xf32> to vector<6x8x1xf32>
    %36 = vector.broadcast %35 : vector<6x8x1xf32> to vector<6x8x4xf32>
    %cst_18 = arith.constant 0.000000e+00 : f32
    %37 = vector.broadcast %cst_18 : f32 to vector<6x8x4xf32>
    %38 = arith.cmpf oeq, %36, %37 : vector<6x8x4xf32>
    %cst_19 = arith.constant 1.000000e+00 : f32
    %39 = vector.broadcast %cst_19 : f32 to vector<6x8x4xf32>
    %40 = arith.select %38, %39, %36 : vector<6x8x4xi1>, vector<6x8x4xf32>
    %41 = arith.divf %27, %40 : vector<6x8x4xf32>
    %cst_20 = arith.constant 5.000000e-01 : f32
    %42 = vector.broadcast %cst_20 : f32 to vector<6x8x4xf32>
    %43 = arith.mulf %42, %36 : vector<6x8x4xf32>
    %44 = vector.broadcast %30 : f32 to vector<6x8x4xf32>
    %45 = arith.addf %44, %43 : vector<6x8x4xf32>
    %46 = vector.broadcast %33 : f32 to vector<6x8x4xf32>
    %47 = arith.addf %46, %36 : vector<6x8x4xf32>
    %48 = arith.mulf %32, %33 : f32
    %49 = vector.broadcast %48 : f32 to vector<6x8x4xf32>
    %50 = arith.addf %49, %27 : vector<6x8x4xf32>
    %51 = vector.broadcast %33 : f32 to vector<6x8x4xf32>
    %52 = arith.addf %36, %51 : vector<6x8x4xf32>
    %53 = arith.divf %50, %52 : vector<6x8x4xf32>
    %54 = arith.mulf %41, %41 : vector<6x8x4xf32>
    %55 = arith.mulf %54, %36 : vector<6x8x4xf32>
    %56 = arith.subf %29, %55 : vector<6x8x4xf32>
    %cst_21 = arith.constant 5.000000e-01 : f32
    %57 = vector.broadcast %cst_21 : f32 to vector<6x8x4xf32>
    %58 = arith.mulf %57, %56 : vector<6x8x4xf32>
    %59 = vector.broadcast %31 : f32 to vector<6x8x4xf32>
    %60 = arith.addf %59, %58 : vector<6x8x4xf32>
    %61 = vector.broadcast %33 : f32 to vector<6x8x4xf32>
    %62 = arith.mulf %36, %61 : vector<6x8x4xf32>
    %63 = vector.broadcast %33 : f32 to vector<6x8x4xf32>
    %64 = arith.addf %36, %63 : vector<6x8x4xf32>
    %65 = arith.divf %62, %64 : vector<6x8x4xf32>
    %cst_22 = arith.constant 5.000000e-01 : f32
    %66 = vector.broadcast %cst_22 : f32 to vector<6x8x4xf32>
    %67 = arith.mulf %66, %65 : vector<6x8x4xf32>
    %68 = vector.broadcast %32 : f32 to vector<6x8x4xf32>
    %69 = arith.subf %41, %68 : vector<6x8x4xf32>
    %70 = arith.mulf %69, %69 : vector<6x8x4xf32>
    %71 = arith.mulf %67, %70 : vector<6x8x4xf32>
    %72 = arith.addf %60, %71 : vector<6x8x4xf32>
    %73 = vector.shape_cast %45 : vector<6x8x4xf32> to vector<6x32xf32>
    %74 = vector.shape_cast %72 : vector<6x8x4xf32> to vector<6x32xf32>
    %75 = vector.shape_cast %53 : vector<6x8x4xf32> to vector<6x32xf32>
    %76 = vector.shape_cast %47 : vector<6x8x4xf32> to vector<6x32xf32>
    %77 = tpu.concatenate %73, %74, %75, %76 in 1 : vector<6x32xf32>, vector<6x32xf32>, vector<6x32xf32>, vector<6x32xf32> -> vector<6x128xf32>
    %c0_23 = arith.constant 0 : index
    %c0_24 = arith.constant 0 : index
    %78 = vector.load %arg6[%c0_23, %c0_24] : memref<6x128xf32, #tpu.memory_space<vmem>>, vector<6x128xf32>
    tpu.vector_store %arg6[%c0_23, %c0_24], %77 {strides = array<i32>} : memref<6x128xf32, #tpu.memory_space<vmem>>, vector<6x128xf32>,
    return
  }
}

</mosaic_0001>

<llo_original>
// kernel: tpu_custom_call.1
$region0: #{tpu_custom_call.1}
  #allocation0 [shape = 'u32[]', space=smem, size = 0x4, offset = 0x4, fixed_abs, tag = 'smem constant byte address 0x4 - core index']
  #allocation1 [shape = 'u32[144,128]{1,0:T(1,128)}', space=vmem, size = 0x12000, scoped, tag = 'internal scratch']
  %s0 = inlined_call_operand.vmem [shape: f32[6,64,4], index: 0, kind: input, shape index: {}]
  %s1 = inlined_call_operand.vmem [shape: f32[6,64,8], index: 1, kind: input, shape index: {}]
  %s2 = inlined_call_operand.vmem [shape: f32[4,12], index: 2, kind: input, shape index: {}]
  %s3 = inlined_call_operand.vmem [shape: f32[8,12], index: 3, kind: input, shape index: {}]
  %s4 = inlined_call_operand.vmem [shape: f32[1,12], index: 4, kind: input, shape index: {}]
  %s5 = inlined_call_operand.vmem [shape: f32[4], index: 5, kind: input, shape index: {}]
  %s6 = inlined_call_operand.hbm [shape: f32[6,128], index: 6, kind: output, shape index: {}]
  %s7 = sld [smem:[#allocation0]]
  $region38: #{tpu_custom_call.1} parent=0
    _
  %s9 = ssub.s32 1, %s7
  %s10 = scalar_select 0, %s9, %s7
  $region1: #{tpu_custom_call.1} parent=0
    #allocation2 [shape = 'u8[512]{0}', space=smem, size = 0x200, scoped, tag = 'input window, operand 5, single buffered']
    #allocation3 [shape = 's32[1]{0}', space=sflag, size = 0x4, scoped, tag = 'scoped memory for tpu_custom_call.1']
    #allocation4 [shape = 's32[1]{0}', space=sflag, size = 0x4, scoped, tag = 'scoped memory for tpu_custom_call.1']
    #allocation5 [shape = 'u8[4096]{0}', space=vmem, size = 0x1000, scoped, tag = 'output window, operand 0, single buffered']
    %11 = vsyncpa [#allocation4], 0
    %12 = vsyncpa [#allocation3], 0
    // Predicated region
    $region2: #{tpu_custom_call.1} parent=1 // pred_check
      _
    $region3: #{tpu_custom_call.1} parent=1 // pred_check_branch
      %14 = sbr.rel (0) target = $region5
    $region4: #{tpu_custom_call.1} parent=1 // pred_region
      _
    $region5: #{tpu_custom_call.1} parent=1 // pred_fallthru
      _
    // Predicated region
    $region6: #{tpu_custom_call.1} parent=1 // pred_check
      _
    $region7: #{tpu_custom_call.1} parent=1 // pred_check_branch
      %16 = sbr.rel (0) target = $region9
    $region8: #{tpu_custom_call.1} parent=1 // pred_region
      _
    $region9: #{tpu_custom_call.1} parent=1 // pred_fallthru
      _
    // Predicated region
    $region10: #{tpu_custom_call.1} parent=1 // pred_check
      _
    $region11: #{tpu_custom_call.1} parent=1 // pred_check_branch
      %18 = sbr.rel (0) target = $region13
    $region12: #{tpu_custom_call.1} parent=1 // pred_region
      _
    $region13: #{tpu_custom_call.1} parent=1 // pred_fallthru
      _
    // Predicated region
    $region14: #{tpu_custom_call.1} parent=1 // pred_check
      _
    $region15: #{tpu_custom_call.1} parent=1 // pred_check_branch
      %20 = sbr.rel (0) target = $region17
    $region16: #{tpu_custom_call.1} parent=1 // pred_region
      _
    $region17: #{tpu_custom_call.1} parent=1 // pred_fallthru
      _
    // Predicated region
    $region18: #{tpu_custom_call.1} parent=1 // pred_check
      _
    $region19: #{tpu_custom_call.1} parent=1 // pred_check_branch
      %22 = sbr.rel (0) target = $region21
    $region20: #{tpu_custom_call.1} parent=1 // pred_region
      _
    $region21: #{tpu_custom_call.1} parent=1 // pred_fallthru
      _
    // Predicated region
    $region22: #{tpu_custom_call.1} parent=1 // pred_check
      _
    $region23: #{tpu_custom_call.1} parent=1 // pred_check_branch
      %24 = sbr.rel (0) target = $region25
    $region24: #{tpu_custom_call.1} parent=1 // pred_region
      %s26 = ssub.s32 16, 16
      %27 = vsyncadd [#allocation4], %s26
      %s29 = sshll.u32 %s5, 4
      %s30 = int_to_ptr.vmem [resolvable:$true] %s29
      %32 = dma.vmem_to_smem %s30, 16, [#allocation2], [#allocation4]
    $region25: #{tpu_custom_call.1} parent=1 // pred_fallthru
      _
    // Predicated region
    $region26: #{tpu_custom_call.1} parent=1 // pred_check
      _
    $region27: #{tpu_custom_call.1} parent=1 // pred_check_branch
      %34 = sbr.rel (0) target = $region29
    $region28: #{tpu_custom_call.1} parent=1 // pred_region
      %35 = dma.done [#allocation4], 16
    $region29: #{tpu_custom_call.1} parent=1 // pred_fallthru
      _
    %36 = sfence
    %v37 = vld [vmem:[%s0] sm:$0xff]
    %v38 = vld [vmem:[%s0 + $0x8] sm:$0xff]
    %v39 = vld [vmem:[%s0 + $0x10] sm:$0xff]
    %v40 = vld [vmem:[%s0 + $0x18] sm:$0xff]
    %v41 = vld [vmem:[%s0 + $0x20] sm:$0xff]
    %v42 = vld [vmem:[%s0 + $0x28] sm:$0xff]
    %v43 = vld [vmem:[%s0 + $0x30] sm:$0xff]
    %v44 = vld [vmem:[%s0 + $0x38] sm:$0xff]
    %v45 = vld [vmem:[%s0 + $0x40] sm:$0xff]
    %v46 = vld [vmem:[%s0 + $0x48] sm:$0xff]
    %v47 = vld [vmem:[%s0 + $0x50] sm:$0xff]
    %v48 = vld [vmem:[%s0 + $0x58] sm:$0xff]
    %v49 = vld [vmem:[%s0 + $0x60] sm:$0xff]
    %v50 = vld [vmem:[%s0 + $0x68] sm:$0xff]
    %v51 = vld [vmem:[%s0 + $0x70] sm:$0xff]
    %v52 = vld [vmem:[%s0 + $0x78] sm:$0xff]
    %v53 = vld [vmem:[%s0 + $0x80] sm:$0xff]
    %v54 = vld [vmem:[%s0 + $0x88] sm:$0xff]
    %v55 = vld [vmem:[%s0 + $0x90] sm:$0xff]
    %v56 = vld [vmem:[%s0 + $0x98] sm:$0xff]
    %v57 = vld [vmem:[%s0 + $0xa0] sm:$0xff]
    %v58 = vld [vmem:[%s0 + $0xa8] sm:$0xff]
    %v59 = vld [vmem:[%s0 + $0xb0] sm:$0xff]
    %v60 = vld [vmem:[%s0 + $0xb8] sm:$0xff]
    %v61 = vld [vmem:[%s0 + $0xc0] sm:$0xff]
    %v62 = vld [vmem:[%s0 + $0xc8] sm:$0xff]
    %v63 = vld [vmem:[%s0 + $0xd0] sm:$0xff]
    %v64 = vld [vmem:[%s0 + $0xd8] sm:$0xff]
    %v65 = vld [vmem:[%s0 + $0xe0] sm:$0xff]
    %v66 = vld [vmem:[%s0 + $0xe8] sm:$0xff]
    %v67 = vld [vmem:[%s0 + $0xf0] sm:$0xff]
    %v68 = vld [vmem:[%s0 + $0xf8] sm:$0xff]
    %v69 = vld [vmem:[%s0 + $0x100] sm:$0xff]
    %v70 = vld [vmem:[%s0 + $0x108] sm:$0xff]
    %v71 = vld [vmem:[%s0 + $0x110] sm:$0xff]
    %v72 = vld [vmem:[%s0 + $0x118] sm:$0xff]
    %v73 = vld [vmem:[%s0 + $0x120] sm:$0xff]
    %v74 = vld [vmem:[%s0 + $0x128] sm:$0xff]
    %v75 = vld [vmem:[%s0 + $0x130] sm:$0xff]
    %v76 = vld [vmem:[%s0 + $0x138] sm:$0xff]
    %v77 = vld [vmem:[%s0 + $0x140] sm:$0xff]
    %v78 = vld [vmem:[%s0 + $0x148] sm:$0xff]
    %v79 = vld [vmem:[%s0 + $0x150] sm:$0xff]
    %v80 = vld [vmem:[%s0 + $0x158] sm:$0xff]
    %v81 = vld [vmem:[%s0 + $0x160] sm:$0xff]
    %v82 = vld [vmem:[%s0 + $0x168] sm:$0xff]
    %v83 = vld [vmem:[%s0 + $0x170] sm:$0xff]
    %v84 = vld [vmem:[%s0 + $0x178] sm:$0xff]
    %v85 = vld [vmem:[%s1] sm:$0xff]
    %v86 = vld [vmem:[%s1 + $0x8] sm:$0xff]
    %v87 = vld [vmem:[%s1 + $0x10] sm:$0xff]
    %v88 = vld [vmem:[%s1 + $0x18] sm:$0xff]
    %v89 = vld [vmem:[%s1 + $0x20] sm:$0xff]
    %v90 = vld [vmem:[%s1 + $0x28] sm:$0xff]
    %v91 = vld [vmem:[%s1 + $0x30] sm:$0xff]
    %v92 = vld [vmem:[%s1 + $0x38] sm:$0xff]
    %v93 = vld [vmem:[%s1 + $0x40] sm:$0xff]
    %v94 = vld [vmem:[%s1 + $0x48] sm:$0xff]
    %v95 = vld [vmem:[%s1 + $0x50] sm:$0xff]
    %v96 = vld [vmem:[%s1 + $0x58] sm:$0xff]
    %v97 = vld [vmem:[%s1 + $0x60] sm:$0xff]
    %v98 = vld [vmem:[%s1 + $0x68] sm:$0xff]
    %v99 = vld [vmem:[%s1 + $0x70] sm:$0xff]
    %v100 = vld [vmem:[%s1 + $0x78] sm:$0xff]
    %v101 = vld [vmem:[%s1 + $0x80] sm:$0xff]
    %v102 = vld [vmem:[%s1 + $0x88] sm:$0xff]
    %v103 = vld [vmem:[%s1 + $0x90] sm:$0xff]
    %v104 = vld [vmem:[%s1 + $0x98] sm:$0xff]
    %v105 = vld [vmem:[%s1 + $0xa0] sm:$0xff]
    %v106 = vld [vmem:[%s1 + $0xa8] sm:$0xff]
    %v107 = vld [vmem:[%s1 + $0xb0] sm:$0xff]
    %v108 = vld [vmem:[%s1 + $0xb8] sm:$0xff]
    %v109 = vld [vmem:[%s1 + $0xc0] sm:$0xff]
    %v110 = vld [vmem:[%s1 + $0xc8] sm:$0xff]
    %v111 = vld [vmem:[%s1 + $0xd0] sm:$0xff]
    %v112 = vld [vmem:[%s1 + $0xd8] sm:$0xff]
    %v113 = vld [vmem:[%s1 + $0xe0] sm:$0xff]
    %v114 = vld [vmem:[%s1 + $0xe8] sm:$0xff]
    %v115 = vld [vmem:[%s1 + $0xf0] sm:$0xff]
    %v116 = vld [vmem:[%s1 + $0xf8] sm:$0xff]
    %v117 = vld [vmem:[%s1 + $0x100] sm:$0xff]
    %v118 = vld [vmem:[%s1 + $0x108] sm:$0xff]
    %v119 = vld [vmem:[%s1 + $0x110] sm:$0xff]
    %v120 = vld [vmem:[%s1 + $0x118] sm:$0xff]
    %v121 = vld [vmem:[%s1 + $0x120] sm:$0xff]
    %v122 = vld [vmem:[%s1 + $0x128] sm:$0xff]
    %v123 = vld [vmem:[%s1 + $0x130] sm:$0xff]
    %v124 = vld [vmem:[%s1 + $0x138] sm:$0xff]
    %v125 = vld [vmem:[%s1 + $0x140] sm:$0xff]
    %v126 = vld [vmem:[%s1 + $0x148] sm:$0xff]
    %v127 = vld [vmem:[%s1 + $0x150] sm:$0xff]
    %v128 = vld [vmem:[%s1 + $0x158] sm:$0xff]
    %v129 = vld [vmem:[%s1 + $0x160] sm:$0xff]
    %v130 = vld [vmem:[%s1 + $0x168] sm:$0xff]
    %v131 = vld [vmem:[%s1 + $0x170] sm:$0xff]
    %v132 = vld [vmem:[%s1 + $0x178] sm:$0xff]
    %v133 = vld [vmem:[%s2] sm:$0xf]
    %v134 = vld [vmem:[%s3] sm:$0xff]
    %vm135 = vcmask 64512
    %v137 = vsel %vm135, %v85, 0
    %v140 = vsel %vm135, %v86, 0
    %v143 = vsel %vm135, %v87, 0
    %v146 = vsel %vm135, %v88, 0
    %v149 = vsel %vm135, %v89, 0
    %v152 = vsel %vm135, %v90, 0
    %v155 = vsel %vm135, %v91, 0
    %v158 = vsel %vm135, %v92, 0
    %v161 = vsel %vm135, %v93, 0
    %v164 = vsel %vm135, %v94, 0
    %v167 = vsel %vm135, %v95, 0
    %v170 = vsel %vm135, %v96, 0
    %v173 = vsel %vm135, %v97, 0
    %v176 = vsel %vm135, %v98, 0
    %v179 = vsel %vm135, %v99, 0
    %v182 = vsel %vm135, %v100, 0
    %v185 = vsel %vm135, %v101, 0
    %v188 = vsel %vm135, %v102, 0
    %v191 = vsel %vm135, %v103, 0
    %v194 = vsel %vm135, %v104, 0
    %v197 = vsel %vm135, %v105, 0
    %v200 = vsel %vm135, %v106, 0
    %v203 = vsel %vm135, %v107, 0
    %v206 = vsel %vm135, %v108, 0
    %v209 = vsel %vm135, %v109, 0
    %v212 = vsel %vm135, %v110, 0
    %v215 = vsel %vm135, %v111, 0
    %v218 = vsel %vm135, %v112, 0
    %v221 = vsel %vm135, %v113, 0
    %v224 = vsel %vm135, %v114, 0
    %v227 = vsel %vm135, %v115, 0
    %v230 = vsel %vm135, %v116, 0
    %v233 = vsel %vm135, %v117, 0
    %v236 = vsel %vm135, %v118, 0
    %v239 = vsel %vm135, %v119, 0
    %v242 = vsel %vm135, %v120, 0
    %v245 = vsel %vm135, %v121, 0
    %v248 = vsel %vm135, %v122, 0
    %v251 = vsel %vm135, %v123, 0
    %v254 = vsel %vm135, %v124, 0
    %v257 = vsel %vm135, %v125, 0
    %v260 = vsel %vm135, %v126, 0
    %v263 = vsel %vm135, %v127, 0
    %v266 = vsel %vm135, %v128, 0
    %v269 = vsel %vm135, %v129, 0
    %v272 = vsel %vm135, %v130, 0
    %v275 = vsel %vm135, %v131, 0
    %v278 = vsel %vm135, %v132, 0
    %280 = vmatprep.subr.mxu0 0.0
    %281 = vmatpush1.msra.mxu0 %v134
    %282 = vmatprep.subr.mxu0 0.0
    %283 = vmatpush1.msra.mxu0 0.0
    %284 = vmatprep.subr.mxu0 0.0
    %285 = vmatpush1.msra.mxu0 0.0
    %286 = vmatprep.subr.mxu0 0.0
    %287 = vmatpush1.msra.mxu0 0.0
    %288 = vmatprep.subr.mxu0 0.0
    %289 = vmatpush1.msra.mxu0 0.0
    %290 = vmatprep.subr.mxu0 0.0
    %291 = vmatpush1.msra.mxu0 0.0
    %292 = vmatprep.subr.mxu0 0.0
    %293 = vmatpush1.msra.mxu0 0.0
    %294 = vmatprep.subr.mxu0 0.0
    %295 = vmatpush1.msra.mxu0 0.0
    %296 = vmatprep.subr.mxu0 0.0
    %297 = vmatpush1.msra.mxu0 0.0
    %298 = vmatprep.subr.mxu0 0.0
    %299 = vmatpush1.msra.mxu0 0.0
    %300 = vmatprep.subr.mxu0 0.0
    %301 = vmatpush1.msra.mxu0 0.0
    %302 = vmatprep.subr.mxu0 0.0
    %303 = vmatpush1.msra.mxu0 0.0
    %304 = vmatprep.subr.mxu0 0.0
    %305 = vmatpush1.msra.mxu0 0.0
    %306 = vmatprep.subr.mxu0 0.0
    %307 = vmatpush1.msra.mxu0 0.0
    %308 = vmatprep.subr.mxu0 0.0
    %309 = vmatpush1.msra.mxu0 0.0
    %310 = vmatprep.subr.mxu0 0.0
    %311 = vmatpush1.msra.mxu0 0.0
    %312 = vmatprep.subr.mxu0 0.0
    %313 = vmatpush1.msra.mxu0 0.0
    %314 = vmatprep.subr.mxu0 0.0
    %315 = vmatpush1.msra.mxu0 0.0
    %316 = vmatprep.subr.mxu0 0.0
    %317 = vmatpush1.msra.mxu0 0.0
    %318 = vmatprep.subr.mxu0 0.0
    %319 = vmatpush1.msra.mxu0 0.0
    %320 = vmatprep.subr.mxu0 0.0
    %321 = vmatpush1.msra.mxu0 0.0
    %322 = vmatprep.subr.mxu0 0.0
    %323 = vmatpush1.msra.mxu0 0.0
    %324 = vmatprep.subr.mxu0 0.0
    %325 = vmatpush1.msra.mxu0 0.0
    %326 = vmatprep.subr.mxu0 0.0
    %327 = vmatpush1.msra.mxu0 0.0
    %328 = vmatprep.subr.mxu0 0.0
    %329 = vmatpush1.msra.mxu0 0.0
    %330 = vmatprep.subr.mxu0 0.0
    %331 = vmatpush1.msra.mxu0 0.0
    %332 = vmatprep.subr.mxu0 0.0
    %333 = vmatpush1.msra.mxu0 0.0
    %334 = vmatprep.subr.mxu0 0.0
    %335 = vmatpush1.msra.mxu0 0.0
    %336 = vmatprep.subr.mxu0 0.0
    %337 = vmatpush1.msra.mxu0 0.0
    %338 = vmatprep.subr.mxu0 0.0
    %339 = vmatpush1.msra.mxu0 0.0
    %340 = vmatprep.subr.mxu0 0.0
    %341 = vmatpush1.msra.mxu0 0.0
    %342 = vmatprep.subr.mxu0 0.0
    %343 = vmatpush1.msra.mxu0 0.0
    %344 = vmatprep.mubr.f32.mxu0 0.0
    %345 = vmatmul.mubr.f32.gmra.mrb[0].mxu0 %v137
    %v346 = vpop.f32.mrb[0].mxu0
    %v347 = vadd.f32 0.0, %v346
    %v348 = vpop.f32.mrb[0].mxu0
    %349 = vmatprep.mubr.f32.mxu0 0.0
    %350 = vmatmul.mubr.f32.gmra.mrb[0].mxu0 %v140
    %v351 = vpop.f32.mrb[0].mxu0
    %v352 = vadd.f32 0.0, %v351
    %v353 = vpop.f32.mrb[0].mxu0
    %354 = vmatprep.mubr.f32.mxu0 0.0
    %355 = vmatmul.mubr.f32.gmra.mrb[0].mxu0 %v143
    %v356 = vpop.f32.mrb[0].mxu0
    %v357 = vadd.f32 0.0, %v356
    %v358 = vpop.f32.mrb[0].mxu0
    %359 = vmatprep.mubr.f32.mxu0 0.0
    %360 = vmatmul.mubr.f32.gmra.mrb[0].mxu0 %v146
    %v361 = vpop.f32.mrb[0].mxu0
    %v362 = vadd.f32 0.0, %v361
    %v363 = vpop.f32.mrb[0].mxu0
    %364 = vmatprep.mubr.f32.mxu0 0.0
    %365 = vmatmul.mubr.f32.gmra.mrb[0].mxu0 %v149
    %v366 = vpop.f32.mrb[0].mxu0
    %v367 = vadd.f32 0.0, %v366
    %v368 = vpop.f32.mrb[0].mxu0
    %369 = vmatprep.mubr.f32.mxu0 0.0
    %370 = vmatmul.mubr.f32.gmra.mrb[0].mxu0 %v152
    %v371 = vpop.f32.mrb[0].mxu0
    %v372 = vadd.f32 0.0, %v371
    %v373 = vpop.f32.mrb[0].mxu0
    %374 = vmatprep.mubr.f32.mxu0 0.0
    %375 = vmatmul.mubr.f32.gmra.mrb[0].mxu0 %v155
    %v376 = vpop.f32.mrb[0].mxu0
    %v377 = vadd.f32 0.0, %v376
    %v378 = vpop.f32.mrb[0].mxu0
    %379 = vmatprep.mubr.f32.mxu0 0.0
    %380 = vmatmul.mubr.f32.gmra.mrb[0].mxu0 %v158
    %v381 = vpop.f32.mrb[0].mxu0
    %v382 = vadd.f32 0.0, %v381
    %v383 = vpop.f32.mrb[0].mxu0
    %384 = vmatprep.mubr.f32.mxu0 0.0
    %385 = vmatmul.mubr.f32.gmra.mrb[0].mxu0 %v161
    %v386 = vpop.f32.mrb[0].mxu0
    %v387 = vadd.f32 0.0, %v386
    %v388 = vpop.f32.mrb[0].mxu0
    %389 = vmatprep.mubr.f32.mxu0 0.0
    %390 = vmatmul.mubr.f32.gmra.mrb[0].mxu0 %v164
    %v391 = vpop.f32.mrb[0].mxu0
    %v392 = vadd.f32 0.0, %v391
    %v393 = vpop.f32.mrb[0].mxu0
    %394 = vmatprep.mubr.f32.mxu0 0.0
    %395 = vmatmul.mubr.f32.gmra.mrb[0].mxu0 %v167
    %v396 = vpop.f32.mrb[0].mxu0
    %v397 = vadd.f32 0.0, %v396
    %v398 = vpop.f32.mrb[0].mxu0
    %399 = vmatprep.mubr.f32.mxu0 0.0
    %400 = vmatmul.mubr.f32.gmra.mrb[0].mxu0 %v170
    %v401 = vpop.f32.mrb[0].mxu0
    %v402 = vadd.f32 0.0, %v401
    %v403 = vpop.f32.mrb[0].mxu0
    %404 = vmatprep.mubr.f32.mxu0 0.0
    %405 = vmatmul.mubr.f32.gmra.mrb[0].mxu0 %v173
    %v406 = vpop.f32.mrb[0].mxu0
    %v407 = vadd.f32 0.0, %v406
    %v408 = vpop.f32.mrb[0].mxu0
    %409 = vmatprep.mubr.f32.mxu0 0.0
    %410 = vmatmul.mubr.f32.gmra.mrb[0].mxu0 %v176
    %v411 = vpop.f32.mrb[0].mxu0
    %v412 = vadd.f32 0.0, %v411
    %v413 = vpop.f32.mrb[0].mxu0
    %414 = vmatprep.mubr.f32.mxu0 0.0
    %415 = vmatmul.mubr.f32.gmra.mrb[0].mxu0 %v179
    %v416 = vpop.f32.mrb[0].mxu0
    %v417 = vadd.f32 0.0, %v416
    %v418 = vpop.f32.mrb[0].mxu0
    %419 = vmatprep.mubr.f32.mxu0 0.0
    %420 = vmatmul.mubr.f32.gmra.mrb[0].mxu0 %v182
    %v421 = vpop.f32.mrb[0].mxu0
    %v422 = vadd.f32 0.0, %v421
    %v423 = vpop.f32.mrb[0].mxu0
    %424 = vmatprep.mubr.f32.mxu0 0.0
    %425 = vmatmul.mubr.f32.gmra.mrb[0].mxu0 %v185
    %v426 = vpop.f32.mrb[0].mxu0
    %v427 = vadd.f32 0.0, %v426
    %v428 = vpop.f32.mrb[0].mxu0
    %429 = vmatprep.mubr.f32.mxu0 0.0
    %430 = vmatmul.mubr.f32.gmra.mrb[0].mxu0 %v188
    %v431 = vpop.f32.mrb[0].mxu0
    %v432 = vadd.f32 0.0, %v431
    %v433 = vpop.f32.mrb[0].mxu0
    %434 = vmatprep.mubr.f32.mxu0 0.0
    %435 = vmatmul.mubr.f32.gmra.mrb[0].mxu0 %v191
    %v436 = vpop.f32.mrb[0].mxu0
    %v437 = vadd.f32 0.0, %v436
    %v438 = vpop.f32.mrb[0].mxu0
    %439 = vmatprep.mubr.f32.mxu0 0.0
    %440 = vmatmul.mubr.f32.gmra.mrb[0].mxu0 %v194
    %v441 = vpop.f32.mrb[0].mxu0
    %v442 = vadd.f32 0.0, %v441
    %v443 = vpop.f32.mrb[0].mxu0
    %444 = vmatprep.mubr.f32.mxu0 0.0
    %445 = vmatmul.mubr.f32.gmra.mrb[0].mxu0 %v197
    %v446 = vpop.f32.mrb[0].mxu0
    %v447 = vadd.f32 0.0, %v446
    %v448 = vpop.f32.mrb[0].mxu0
    %449 = vmatprep.mubr.f32.mxu0 0.0
    %450 = vmatmul.mubr.f32.gmra.mrb[0].mxu0 %v200
    %v451 = vpop.f32.mrb[0].mxu0
    %v452 = vadd.f32 0.0, %v451
    %v453 = vpop.f32.mrb[0].mxu0
    %454 = vmatprep.mubr.f32.mxu0 0.0
    %455 = vmatmul.mubr.f32.gmra.mrb[0].mxu0 %v203
    %v456 = vpop.f32.mrb[0].mxu0
    %v457 = vadd.f32 0.0, %v456
    %v458 = vpop.f32.mrb[0].mxu0
    %459 = vmatprep.mubr.f32.mxu0 0.0
    %460 = vmatmul.mubr.f32.gmra.mrb[0].mxu0 %v206
    %v461 = vpop.f32.mrb[0].mxu0
    %v462 = vadd.f32 0.0, %v461
    %v463 = vpop.f32.mrb[0].mxu0
    %464 = vmatprep.mubr.f32.mxu0 0.0
    %465 = vmatmul.mubr.f32.gmra.mrb[0].mxu0 %v209
    %v466 = vpop.f32.mrb[0].mxu0
    %v467 = vadd.f32 0.0, %v466
    %v468 = vpop.f32.mrb[0].mxu0
    %469 = vmatprep.mubr.f32.mxu0 0.0
    %470 = vmatmul.mubr.f32.gmra.mrb[0].mxu0 %v212
    %v471 = vpop.f32.mrb[0].mxu0
    %v472 = vadd.f32 0.0, %v471
    %v473 = vpop.f32.mrb[0].mxu0
    %474 = vmatprep.mubr.f32.mxu0 0.0
    %475 = vmatmul.mubr.f32.gmra.mrb[0].mxu0 %v215
    %v476 = vpop.f32.mrb[0].mxu0
    %v477 = vadd.f32 0.0, %v476
    %v478 = vpop.f32.mrb[0].mxu0
    %479 = vmatprep.mubr.f32.mxu0 0.0
    %480 = vmatmul.mubr.f32.gmra.mrb[0].mxu0 %v218
    %v481 = vpop.f32.mrb[0].mxu0
    %v482 = vadd.f32 0.0, %v481
    %v483 = vpop.f32.mrb[0].mxu0
    %484 = vmatprep.mubr.f32.mxu0 0.0
    %485 = vmatmul.mubr.f32.gmra.mrb[0].mxu0 %v221
    %v486 = vpop.f32.mrb[0].mxu0
    %v487 = vadd.f32 0.0, %v486
    %v488 = vpop.f32.mrb[0].mxu0
    %489 = vmatprep.mubr.f32.mxu0 0.0
    %490 = vmatmul.mubr.f32.gmra.mrb[0].mxu0 %v224
    %v491 = vpop.f32.mrb[0].mxu0
    %v492 = vadd.f32 0.0, %v491
    %v493 = vpop.f32.mrb[0].mxu0
    %494 = vmatprep.mubr.f32.mxu0 0.0
    %495 = vmatmul.mubr.f32.gmra.mrb[0].mxu0 %v227
    %v496 = vpop.f32.mrb[0].mxu0
    %v497 = vadd.f32 0.0, %v496
    %v498 = vpop.f32.mrb[0].mxu0
    %499 = vmatprep.mubr.f32.mxu0 0.0
    %500 = vmatmul.mubr.f32.gmra.mrb[0].mxu0 %v230
    %v501 = vpop.f32.mrb[0].mxu0
    %v502 = vadd.f32 0.0, %v501
    %v503 = vpop.f32.mrb[0].mxu0
    %504 = vmatprep.mubr.f32.mxu0 0.0
    %505 = vmatmul.mubr.f32.gmra.mrb[0].mxu0 %v233
    %v506 = vpop.f32.mrb[0].mxu0
    %v507 = vadd.f32 0.0, %v506
    %v508 = vpop.f32.mrb[0].mxu0
    %509 = vmatprep.mubr.f32.mxu0 0.0
    %510 = vmatmul.mubr.f32.gmra.mrb[0].mxu0 %v236
    %v511 = vpop.f32.mrb[0].mxu0
    %v512 = vadd.f32 0.0, %v511
    %v513 = vpop.f32.mrb[0].mxu0
    %514 = vmatprep.mubr.f32.mxu0 0.0
    %515 = vmatmul.mubr.f32.gmra.mrb[0].mxu0 %v239
    %v516 = vpop.f32.mrb[0].mxu0
    %v517 = vadd.f32 0.0, %v516
    %v518 = vpop.f32.mrb[0].mxu0
    %519 = vmatprep.mubr.f32.mxu0 0.0
    %520 = vmatmul.mubr.f32.gmra.mrb[0].mxu0 %v242
    %v521 = vpop.f32.mrb[0].mxu0
    %v522 = vadd.f32 0.0, %v521
    %v523 = vpop.f32.mrb[0].mxu0
    %524 = vmatprep.mubr.f32.mxu0 0.0
    %525 = vmatmul.mubr.f32.gmra.mrb[0].mxu0 %v245
    %v526 = vpop.f32.mrb[0].mxu0
    %v527 = vadd.f32 0.0, %v526
    %v528 = vpop.f32.mrb[0].mxu0
    %529 = vmatprep.mubr.f32.mxu0 0.0
    %530 = vmatmul.mubr.f32.gmra.mrb[0].mxu0 %v248
    %v531 = vpop.f32.mrb[0].mxu0
    %v532 = vadd.f32 0.0, %v531
    %v533 = vpop.f32.mrb[0].mxu0
    %534 = vmatprep.mubr.f32.mxu0 0.0
    %535 = vmatmul.mubr.f32.gmra.mrb[0].mxu0 %v251
    %v536 = vpop.f32.mrb[0].mxu0
    %v537 = vadd.f32 0.0, %v536
    %v538 = vpop.f32.mrb[0].mxu0
    %539 = vmatprep.mubr.f32.mxu0 0.0
    %540 = vmatmul.mubr.f32.gmra.mrb[0].mxu0 %v254
    %v541 = vpop.f32.mrb[0].mxu0
    %v542 = vadd.f32 0.0, %v541
    %v543 = vpop.f32.mrb[0].mxu0
    %544 = vmatprep.mubr.f32.mxu0 0.0
    %545 = vmatmul.mubr.f32.gmra.mrb[0].mxu0 %v257
    %v546 = vpop.f32.mrb[0].mxu0
    %v547 = vadd.f32 0.0, %v546
    %v548 = vpop.f32.mrb[0].mxu0
    %549 = vmatprep.mubr.f32.mxu0 0.0
    %550 = vmatmul.mubr.f32.gmra.mrb[0].mxu0 %v260
    %v551 = vpop.f32.mrb[0].mxu0
    %v552 = vadd.f32 0.0, %v551
    %v553 = vpop.f32.mrb[0].mxu0
    %554 = vmatprep.mubr.f32.mxu0 0.0
    %555 = vmatmul.mubr.f32.gmra.mrb[0].mxu0 %v263
    %v556 = vpop.f32.mrb[0].mxu0
    %v557 = vadd.f32 0.0, %v556
    %v558 = vpop.f32.mrb[0].mxu0
    %559 = vmatprep.mubr.f32.mxu0 0.0
    %560 = vmatmul.mubr.f32.gmra.mrb[0].mxu0 %v266
    %v561 = vpop.f32.mrb[0].mxu0
    %v562 = vadd.f32 0.0, %v561
    %v563 = vpop.f32.mrb[0].mxu0
    %564 = vmatprep.mubr.f32.mxu0 0.0
    %565 = vmatmul.mubr.f32.gmra.mrb[0].mxu0 %v269
    %v566 = vpop.f32.mrb[0].mxu0
    %v567 = vadd.f32 0.0, %v566
    %v568 = vpop.f32.mrb[0].mxu0
    %569 = vmatprep.mubr.f32.mxu0 0.0
    %570 = vmatmul.mubr.f32.gmra.mrb[0].mxu0 %v272
    %v571 = vpop.f32.mrb[0].mxu0
    %v572 = vadd.f32 0.0, %v571
    %v573 = vpop.f32.mrb[0].mxu0
    %574 = vmatprep.mubr.f32.mxu0 0.0
    %575 = vmatmul.mubr.f32.gmra.mrb[0].mxu0 %v275
    %v576 = vpop.f32.mrb[0].mxu0
    %v577 = vadd.f32 0.0, %v576
    %v578 = vpop.f32.mrb[0].mxu0
    %579 = vmatprep.mubr.f32.mxu0 0.0
    %580 = vmatmul.mubr.f32.gmra.mrb[0].mxu0 %v278
    %v581 = vpop.f32.mrb[0].mxu0
    %v582 = vadd.f32 0.0, %v581
    %v583 = vpop.f32.mrb[0].mxu0
    %584 = vdwg.mxu0
    %vm585 = vcmask 31744
    %v587 = vsel %vm585, %v37, 0
    %v590 = vsel %vm585, %v38, 0
    %v593 = vsel %vm585, %v39, 0
    %v596 = vsel %vm585, %v40, 0
    %v599 = vsel %vm585, %v41, 0
    %v602 = vsel %vm585, %v42, 0
    %v605 = vsel %vm585, %v43, 0
    %v608 = vsel %vm585, %v44, 0
    %v611 = vsel %vm585, %v45, 0
    %v614 = vsel %vm585, %v46, 0
    %v617 = vsel %vm585, %v47, 0
    %v620 = vsel %vm585, %v48, 0
    %v623 = vsel %vm585, %v49, 0
    %v626 = vsel %vm585, %v50, 0
    %v629 = vsel %vm585, %v51, 0
    %v632 = vsel %vm585, %v52, 0
    %v635 = vsel %vm585, %v53, 0
    %v638 = vsel %vm585, %v54, 0
    %v641 = vsel %vm585, %v55, 0
    %v644 = vsel %vm585, %v56, 0
    %v647 = vsel %vm585, %v57, 0
    %v650 = vsel %vm585, %v58, 0
    %v653 = vsel %vm585, %v59, 0
    %v656 = vsel %vm585, %v60, 0
    %v659 = vsel %vm585, %v61, 0
    %v662 = vsel %vm585, %v62, 0
    %v665 = vsel %vm585, %v63, 0
    %v668 = vsel %vm585, %v64, 0
    %v671 = vsel %vm585, %v65, 0
    %v674 = vsel %vm585, %v66, 0
    %v677 = vsel %vm585, %v67, 0
    %v680 = vsel %vm585, %v68, 0
    %v683 = vsel %vm585, %v69, 0
    %v686 = vsel %vm585, %v70, 0
    %v689 = vsel %vm585, %v71, 0
    %v692 = vsel %vm585, %v72, 0
    %v695 = vsel %vm585, %v73, 0
    %v698 = vsel %vm585, %v74, 0
    %v701 = vsel %vm585, %v75, 0
    %v704 = vsel %vm585, %v76, 0
    %v707 = vsel %vm585, %v77, 0
    %v710 = vsel %vm585, %v78, 0
    %v713 = vsel %vm585, %v79, 0
    %v716 = vsel %vm585, %v80, 0
    %v719 = vsel %vm585, %v81, 0
    %v722 = vsel %vm585, %v82, 0
    %v725 = vsel %vm585, %v83, 0
    %v728 = vsel %vm585, %v84, 0
    %vm730 = vcmask 1043456
    %v732 = vsel %vm730, %v133, 0
    %734 = vmatprep.subr.mxu0 0.0
    %735 = vmatpush1.msra.mxu0 %v732
    %736 = vmatprep.subr.mxu0 0.0
    %737 = vmatpush1.msra.mxu0 0.0
    %738 = vmatprep.subr.mxu0 0.0
    %739 = vmatpush1.msra.mxu0 0.0
    %740 = vmatprep.subr.mxu0 0.0
    %741 = vmatpush1.msra.mxu0 0.0
    %742 = vmatprep.subr.mxu0 0.0
    %743 = vmatpush1.msra.mxu0 0.0
    %744 = vmatprep.subr.mxu0 0.0
    %745 = vmatpush1.msra.mxu0 0.0
    %746 = vmatprep.subr.mxu0 0.0
    %747 = vmatpush1.msra.mxu0 0.0
    %748 = vmatprep.subr.mxu0 0.0
    %749 = vmatpush1.msra.mxu0 0.0
    %750 = vmatprep.subr.mxu0 0.0
    %751 = vmatpush1.msra.mxu0 0.0
    %752 = vmatprep.subr.mxu0 0.0
    %753 = vmatpush1.msra.mxu0 0.0
    %754 = vmatprep.subr.mxu0 0.0
    %755 = vmatpush1.msra.mxu0 0.0
    %756 = vmatprep.subr.mxu0 0.0
    %757 = vmatpush1.msra.mxu0 0.0
    %758 = vmatprep.subr.mxu0 0.0
    %759 = vmatpush1.msra.mxu0 0.0
    %760 = vmatprep.subr.mxu0 0.0
    %761 = vmatpush1.msra.mxu0 0.0
    %762 = vmatprep.subr.mxu0 0.0
    %763 = vmatpush1.msra.mxu0 0.0
    %764 = vmatprep.subr.mxu0 0.0
    %765 = vmatpush1.msra.mxu0 0.0
    %766 = vmatprep.subr.mxu0 0.0
    %767 = vmatpush1.msra.mxu0 0.0
    %768 = vmatprep.subr.mxu0 0.0
    %769 = vmatpush1.msra.mxu0 0.0
    %770 = vmatprep.subr.mxu0 0.0
    %771 = vmatpush1.msra.mxu0 0.0
    %772 = vmatprep.subr.mxu0 0.0
    %773 = vmatpush1.msra.mxu0 0.0
    %774 = vmatprep.subr.mxu0 0.0
    %775 = vmatpush1.msra.mxu0 0.0
    %776 = vmatprep.subr.mxu0 0.0
    %777 = vmatpush1.msra.mxu0 0.0
    %778 = vmatprep.subr.mxu0 0.0
    %779 = vmatpush1.msra.mxu0 0.0
    %780 = vmatprep.subr.mxu0 0.0
    %781 = vmatpush1.msra.mxu0 0.0
    %782 = vmatprep.subr.mxu0 0.0
    %783 = vmatpush1.msra.mxu0 0.0
    %784 = vmatprep.subr.mxu0 0.0
    %785 = vmatpush1.msra.mxu0 0.0
    %786 = vmatprep.subr.mxu0 0.0
    %787 = vmatpush1.msra.mxu0 0.0
    %788 = vmatprep.subr.mxu0 0.0
    %789 = vmatpush1.msra.mxu0 0.0
    %790 = vmatprep.subr.mxu0 0.0
    %791 = vmatpush1.msra.mxu0 0.0
    %792 = vmatprep.subr.mxu0 0.0
    %793 = vmatpush1.msra.mxu0 0.0
    %794 = vmatprep.subr.mxu0 0.0
    %795 = vmatpush1.msra.mxu0 0.0
    %796 = vmatprep.subr.mxu0 0.0
    %797 = vmatpush1.msra.mxu0 0.0
    %798 = vmatprep.mubr.f32.mxu0 0.0
    %799 = vmatmul.mubr.f32.gmra.mrb[0].mxu0 %v587
    %v800 = vpop.f32.mrb[0].mxu0
    %v801 = vadd.f32 %v347, %v800
    %v802 = vpop.f32.mrb[0].mxu0
    %803 = vmatprep.mubr.f32.mxu0 0.0
    %804 = vmatmul.mubr.f32.gmra.mrb[0].mxu0 %v590
    %v805 = vpop.f32.mrb[0].mxu0
    %v806 = vadd.f32 %v352, %v805
    %v807 = vpop.f32.mrb[0].mxu0
    %808 = vmatprep.mubr.f32.mxu0 0.0
    %809 = vmatmul.mubr.f32.gmra.mrb[0].mxu0 %v593
    %v810 = vpop.f32.mrb[0].mxu0
    %v811 = vadd.f32 %v357, %v810
    %v812 = vpop.f32.mrb[0].mxu0
    %813 = vmatprep.mubr.f32.mxu0 0.0
    %814 = vmatmul.mubr.f32.gmra.mrb[0].mxu0 %v596
    %v815 = vpop.f32.mrb[0].mxu0
    %v816 = vadd.f32 %v362, %v815
    %v817 = vpop.f32.mrb[0].mxu0
    %818 = vmatprep.mubr.f32.mxu0 0.0
    %819 = vmatmul.mubr.f32.gmra.mrb[0].mxu0 %v599
    %v820 = vpop.f32.mrb[0].mxu0
    %v821 = vadd.f32 %v367, %v820
    %v822 = vpop.f32.mrb[0].mxu0
    %823 = vmatprep.mubr.f32.mxu0 0.0
    %824 = vmatmul.mubr.f32.gmra.mrb[0].mxu0 %v602
    %v825 = vpop.f32.mrb[0].mxu0
    %v826 = vadd.f32 %v372, %v825
    %v827 = vpop.f32.mrb[0].mxu0
    %828 = vmatprep.mubr.f32.mxu0 0.0
    %829 = vmatmul.mubr.f32.gmra.mrb[0].mxu0 %v605
    %v830 = vpop.f32.mrb[0].mxu0
    %v831 = vadd.f32 %v377, %v830
    %v832 = vpop.f32.mrb[0].mxu0
    %833 = vmatprep.mubr.f32.mxu0 0.0
    %834 = vmatmul.mubr.f32.gmra.mrb[0].mxu0 %v608
    %v835 = vpop.f32.mrb[0].mxu0
    %v836 = vadd.f32 %v382, %v835
    %v837 = vpop.f32.mrb[0].mxu0
    %838 = vmatprep.mubr.f32.mxu0 0.0
    %839 = vmatmul.mubr.f32.gmra.mrb[0].mxu0 %v611
    %v840 = vpop.f32.mrb[0].mxu0
    %v841 = vadd.f32 %v387, %v840
    %v842 = vpop.f32.mrb[0].mxu0
    %843 = vmatprep.mubr.f32.mxu0 0.0
    %844 = vmatmul.mubr.f32.gmra.mrb[0].mxu0 %v614
    %v845 = vpop.f32.mrb[0].mxu0
    %v846 = vadd.f32 %v392, %v845
    %v847 = vpop.f32.mrb[0].mxu0
    %848 = vmatprep.mubr.f32.mxu0 0.0
    %849 = vmatmul.mubr.f32.gmra.mrb[0].mxu0 %v617
    %v850 = vpop.f32.mrb[0].mxu0
    %v851 = vadd.f32 %v397, %v850
    %v852 = vpop.f32.mrb[0].mxu0
    %853 = vmatprep.mubr.f32.mxu0 0.0
    %854 = vmatmul.mubr.f32.gmra.mrb[0].mxu0 %v620
    %v855 = vpop.f32.mrb[0].mxu0
    %v856 = vadd.f32 %v402, %v855
    %v857 = vpop.f32.mrb[0].mxu0
    %858 = vmatprep.mubr.f32.mxu0 0.0
    %859 = vmatmul.mubr.f32.gmra.mrb[0].mxu0 %v623
    %v860 = vpop.f32.mrb[0].mxu0
    %v861 = vadd.f32 %v407, %v860
    %v862 = vpop.f32.mrb[0].mxu0
    %863 = vmatprep.mubr.f32.mxu0 0.0
    %864 = vmatmul.mubr.f32.gmra.mrb[0].mxu0 %v626
    %v865 = vpop.f32.mrb[0].mxu0
    %v866 = vadd.f32 %v412, %v865
    %v867 = vpop.f32.mrb[0].mxu0
    %868 = vmatprep.mubr.f32.mxu0 0.0
    %869 = vmatmul.mubr.f32.gmra.mrb[0].mxu0 %v629
    %v870 = vpop.f32.mrb[0].mxu0
    %v871 = vadd.f32 %v417, %v870
    %v872 = vpop.f32.mrb[0].mxu0
    %873 = vmatprep.mubr.f32.mxu0 0.0
    %874 = vmatmul.mubr.f32.gmra.mrb[0].mxu0 %v632
    %v875 = vpop.f32.mrb[0].mxu0
    %v876 = vadd.f32 %v422, %v875
    %v877 = vpop.f32.mrb[0].mxu0
    %878 = vmatprep.mubr.f32.mxu0 0.0
    %879 = vmatmul.mubr.f32.gmra.mrb[0].mxu0 %v635
    %v880 = vpop.f32.mrb[0].mxu0
    %v881 = vadd.f32 %v427, %v880
    %v882 = vpop.f32.mrb[0].mxu0
    %883 = vmatprep.mubr.f32.mxu0 0.0
    %884 = vmatmul.mubr.f32.gmra.mrb[0].mxu0 %v638
    %v885 = vpop.f32.mrb[0].mxu0
    %v886 = vadd.f32 %v432, %v885
    %v887 = vpop.f32.mrb[0].mxu0
    %888 = vmatprep.mubr.f32.mxu0 0.0
    %889 = vmatmul.mubr.f32.gmra.mrb[0].mxu0 %v641
    %v890 = vpop.f32.mrb[0].mxu0
    %v891 = vadd.f32 %v437, %v890
    %v892 = vpop.f32.mrb[0].mxu0
    %893 = vmatprep.mubr.f32.mxu0 0.0
    %894 = vmatmul.mubr.f32.gmra.mrb[0].mxu0 %v644
    %v895 = vpop.f32.mrb[0].mxu0
    %v896 = vadd.f32 %v442, %v895
    %v897 = vpop.f32.mrb[0].mxu0
    %898 = vmatprep.mubr.f32.mxu0 0.0
    %899 = vmatmul.mubr.f32.gmra.mrb[0].mxu0 %v647
    %v900 = vpop.f32.mrb[0].mxu0
    %v901 = vadd.f32 %v447, %v900
    %v902 = vpop.f32.mrb[0].mxu0
    %903 = vmatprep.mubr.f32.mxu0 0.0
    %904 = vmatmul.mubr.f32.gmra.mrb[0].mxu0 %v650
    %v905 = vpop.f32.mrb[0].mxu0
    %v906 = vadd.f32 %v452, %v905
    %v907 = vpop.f32.mrb[0].mxu0
    %908 = vmatprep.mubr.f32.mxu0 0.0
    %909 = vmatmul.mubr.f32.gmra.mrb[0].mxu0 %v653
    %v910 = vpop.f32.mrb[0].mxu0
    %v911 = vadd.f32 %v457, %v910
    %v912 = vpop.f32.mrb[0].mxu0
    %913 = vmatprep.mubr.f32.mxu0 0.0
    %914 = vmatmul.mubr.f32.gmra.mrb[0].mxu0 %v656
    %v915 = vpop.f32.mrb[0].mxu0
    %v916 = vadd.f32 %v462, %v915
    %v917 = vpop.f32.mrb[0].mxu0
    %918 = vmatprep.mubr.f32.mxu0 0.0
    %919 = vmatmul.mubr.f32.gmra.mrb[0].mxu0 %v659
    %v920 = vpop.f32.mrb[0].mxu0
    %v921 = vadd.f32 %v467, %v920
    %v922 = vpop.f32.mrb[0].mxu0
    %923 = vmatprep.mubr.f32.mxu0 0.0
    %924 = vmatmul.mubr.f32.gmra.mrb[0].mxu0 %v662
    %v925 = vpop.f32.mrb[0].mxu0
    %v926 = vadd.f32 %v472, %v925
    %v927 = vpop.f32.mrb[0].mxu0
    %928 = vmatprep.mubr.f32.mxu0 0.0
    %929 = vmatmul.mubr.f32.gmra.mrb[0].mxu0 %v665
    %v930 = vpop.f32.mrb[0].mxu0
    %v931 = vadd.f32 %v477, %v930
    %v932 = vpop.f32.mrb[0].mxu0
    %933 = vmatprep.mubr.f32.mxu0 0.0
    %934 = vmatmul.mubr.f32.gmra.mrb[0].mxu0 %v668
    %v935 = vpop.f32.mrb[0].mxu0
    %v936 = vadd.f32 %v482, %v935
    %v937 = vpop.f32.mrb[0].mxu0
    %938 = vmatprep.mubr.f32.mxu0 0.0
    %939 = vmatmul.mubr.f32.gmra.mrb[0].mxu0 %v671
    %v940 = vpop.f32.mrb[0].mxu0
    %v941 = vadd.f32 %v487, %v940
    %v942 = vpop.f32.mrb[0].mxu0
    %943 = vmatprep.mubr.f32.mxu0 0.0
    %944 = vmatmul.mubr.f32.gmra.mrb[0].mxu0 %v674
    %v945 = vpop.f32.mrb[0].mxu0
    %v946 = vadd.f32 %v492, %v945
    %v947 = vpop.f32.mrb[0].mxu0
    %948 = vmatprep.mubr.f32.mxu0 0.0
    %949 = vmatmul.mubr.f32.gmra.mrb[0].mxu0 %v677
    %v950 = vpop.f32.mrb[0].mxu0
    %v951 = vadd.f32 %v497, %v950
    %v952 = vpop.f32.mrb[0].mxu0
    %953 = vmatprep.mubr.f32.mxu0 0.0
    %954 = vmatmul.mubr.f32.gmra.mrb[0].mxu0 %v680
    %v955 = vpop.f32.mrb[0].mxu0
    %v956 = vadd.f32 %v502, %v955
    %v957 = vpop.f32.mrb[0].mxu0
    %958 = vmatprep.mubr.f32.mxu0 0.0
    %959 = vmatmul.mubr.f32.gmra.mrb[0].mxu0 %v683
    %v960 = vpop.f32.mrb[0].mxu0
    %v961 = vadd.f32 %v507, %v960
    %v962 = vpop.f32.mrb[0].mxu0
    %963 = vmatprep.mubr.f32.mxu0 0.0
    %964 = vmatmul.mubr.f32.gmra.mrb[0].mxu0 %v686
    %v965 = vpop.f32.mrb[0].mxu0
    %v966 = vadd.f32 %v512, %v965
    %v967 = vpop.f32.mrb[0].mxu0
    %968 = vmatprep.mubr.f32.mxu0 0.0
    %969 = vmatmul.mubr.f32.gmra.mrb[0].mxu0 %v689
    %v970 = vpop.f32.mrb[0].mxu0
    %v971 = vadd.f32 %v517, %v970
    %v972 = vpop.f32.mrb[0].mxu0
    %973 = vmatprep.mubr.f32.mxu0 0.0
    %974 = vmatmul.mubr.f32.gmra.mrb[0].mxu0 %v692
    %v975 = vpop.f32.mrb[0].mxu0
    %v976 = vadd.f32 %v522, %v975
    %v977 = vpop.f32.mrb[0].mxu0
    %978 = vmatprep.mubr.f32.mxu0 0.0
    %979 = vmatmul.mubr.f32.gmra.mrb[0].mxu0 %v695
    %v980 = vpop.f32.mrb[0].mxu0
    %v981 = vadd.f32 %v527, %v980
    %v982 = vpop.f32.mrb[0].mxu0
    %983 = vmatprep.mubr.f32.mxu0 0.0
    %984 = vmatmul.mubr.f32.gmra.mrb[0].mxu0 %v698
    %v985 = vpop.f32.mrb[0].mxu0
    %v986 = vadd.f32 %v532, %v985
    %v987 = vpop.f32.mrb[0].mxu0
    %988 = vmatprep.mubr.f32.mxu0 0.0
    %989 = vmatmul.mubr.f32.gmra.mrb[0].mxu0 %v701
    %v990 = vpop.f32.mrb[0].mxu0
    %v991 = vadd.f32 %v537, %v990
    %v992 = vpop.f32.mrb[0].mxu0
    %993 = vmatprep.mubr.f32.mxu0 0.0
    %994 = vmatmul.mubr.f32.gmra.mrb[0].mxu0 %v704
    %v995 = vpop.f32.mrb[0].mxu0
    %v996 = vadd.f32 %v542, %v995
    %v997 = vpop.f32.mrb[0].mxu0
    %998 = vmatprep.mubr.f32.mxu0 0.0
    %999 = vmatmul.mubr.f32.gmra.mrb[0].mxu0 %v707
    %v1000 = vpop.f32.mrb[0].mxu0
    %v1001 = vadd.f32 %v547, %v1000
    %v1002 = vpop.f32.mrb[0].mxu0
    %1003 = vmatprep.mubr.f32.mxu0 0.0
    %1004 = vmatmul.mubr.f32.gmra.mrb[0].mxu0 %v710
    %v1005 = vpop.f32.mrb[0].mxu0
    %v1006 = vadd.f32 %v552, %v1005
    %v1007 = vpop.f32.mrb[0].mxu0
    %1008 = vmatprep.mubr.f32.mxu0 0.0
    %1009 = vmatmul.mubr.f32.gmra.mrb[0].mxu0 %v713
    %v1010 = vpop.f32.mrb[0].mxu0
    %v1011 = vadd.f32 %v557, %v1010
    %v1012 = vpop.f32.mrb[0].mxu0
    %1013 = vmatprep.mubr.f32.mxu0 0.0
    %1014 = vmatmul.mubr.f32.gmra.mrb[0].mxu0 %v716
    %v1015 = vpop.f32.mrb[0].mxu0
    %v1016 = vadd.f32 %v562, %v1015
    %v1017 = vpop.f32.mrb[0].mxu0
    %1018 = vmatprep.mubr.f32.mxu0 0.0
    %1019 = vmatmul.mubr.f32.gmra.mrb[0].mxu0 %v719
    %v1020 = vpop.f32.mrb[0].mxu0
    %v1021 = vadd.f32 %v567, %v1020
    %v1022 = vpop.f32.mrb[0].mxu0
    %1023 = vmatprep.mubr.f32.mxu0 0.0
    %1024 = vmatmul.mubr.f32.gmra.mrb[0].mxu0 %v722
    %v1025 = vpop.f32.mrb[0].mxu0
    %v1026 = vadd.f32 %v572, %v1025
    %v1027 = vpop.f32.mrb[0].mxu0
    %1028 = vmatprep.mubr.f32.mxu0 0.0
    %1029 = vmatmul.mubr.f32.gmra.mrb[0].mxu0 %v725
    %v1030 = vpop.f32.mrb[0].mxu0
    %v1031 = vadd.f32 %v577, %v1030
    %v1032 = vpop.f32.mrb[0].mxu0
    %1033 = vmatprep.mubr.f32.mxu0 0.0
    %1034 = vmatmul.mubr.f32.gmra.mrb[0].mxu0 %v728
    %v1035 = vpop.f32.mrb[0].mxu0
    %v1036 = vadd.f32 %v582, %v1035
    %v1037 = vpop.f32.mrb[0].mxu0
    %1038 = vdwg.mxu0
    %v1039 = vld [vmem:[%s4] sm:$0x1]
    %v1041 = vlaneseq
    %v1042 = vshrl.u32 %v1041, 7
    %v1043 = vsub.s32 0, %v1042
    %v1044 = vrot.slane %v1039, %v1043
    %v1046 = vadd.f32 %v801, %v1044
    %v1047 = vadd.f32 %v806, %v1044
    %v1048 = vadd.f32 %v811, %v1044
    %v1049 = vadd.f32 %v816, %v1044
    %v1050 = vadd.f32 %v821, %v1044
    %v1051 = vadd.f32 %v826, %v1044
    %v1052 = vadd.f32 %v831, %v1044
    %v1053 = vadd.f32 %v836, %v1044
    %v1054 = vadd.f32 %v841, %v1044
    %v1055 = vadd.f32 %v846, %v1044
    %v1056 = vadd.f32 %v851, %v1044
    %v1057 = vadd.f32 %v856, %v1044
    %v1058 = vadd.f32 %v861, %v1044
    %v1059 = vadd.f32 %v866, %v1044
    %v1060 = vadd.f32 %v871, %v1044
    %v1061 = vadd.f32 %v876, %v1044
    %v1062 = vadd.f32 %v881, %v1044
    %v1063 = vadd.f32 %v886, %v1044
    %v1064 = vadd.f32 %v891, %v1044
    %v1065 = vadd.f32 %v896, %v1044
    %v1066 = vadd.f32 %v901, %v1044
    %v1067 = vadd.f32 %v906, %v1044
    %v1068 = vadd.f32 %v911, %v1044
    %v1069 = vadd.f32 %v916, %v1044
    %v1070 = vadd.f32 %v921, %v1044
    %v1071 = vadd.f32 %v926, %v1044
    %v1072 = vadd.f32 %v931, %v1044
    %v1073 = vadd.f32 %v936, %v1044
    %v1074 = vadd.f32 %v941, %v1044
    %v1075 = vadd.f32 %v946, %v1044
    %v1076 = vadd.f32 %v951, %v1044
    %v1077 = vadd.f32 %v956, %v1044
    %v1078 = vadd.f32 %v961, %v1044
    %v1079 = vadd.f32 %v966, %v1044
    %v1080 = vadd.f32 %v971, %v1044
    %v1081 = vadd.f32 %v976, %v1044
    %v1082 = vadd.f32 %v981, %v1044
    %v1083 = vadd.f32 %v986, %v1044
    %v1084 = vadd.f32 %v991, %v1044
    %v1085 = vadd.f32 %v996, %v1044
    %v1086 = vadd.f32 %v1001, %v1044
    %v1087 = vadd.f32 %v1006, %v1044
    %v1088 = vadd.f32 %v1011, %v1044
    %v1089 = vadd.f32 %v1016, %v1044
    %v1090 = vadd.f32 %v1021, %v1044
    %v1091 = vadd.f32 %v1026, %v1044
    %v1092 = vadd.f32 %v1031, %v1044
    %v1093 = vadd.f32 %v1036, %v1044
    %vm1094 = vcmask 97312
    %v1095 = vsel %vm1094, %v1046, -inf
    %1096 = vmax.xlane.f32.xlu0 %v1095
    %v1097 = vpop.xlane.xlu0 %1096
    %v1098 = vsel %vm1094, %v1047, -inf
    %1099 = vmax.xlane.f32.xlu0 %v1098
    %v1100 = vpop.xlane.xlu0 %1099
    %v1101 = vsel %vm1094, %v1048, -inf
    %1102 = vmax.xlane.f32.xlu0 %v1101
    %v1103 = vpop.xlane.xlu0 %1102
    %v1104 = vsel %vm1094, %v1049, -inf
    %1105 = vmax.xlane.f32.xlu0 %v1104
    %v1106 = vpop.xlane.xlu0 %1105
    %v1107 = vsel %vm1094, %v1050, -inf
    %1108 = vmax.xlane.f32.xlu0 %v1107
    %v1109 = vpop.xlane.xlu0 %1108
    %v1110 = vsel %vm1094, %v1051, -inf
    %1111 = vmax.xlane.f32.xlu0 %v1110
    %v1112 = vpop.xlane.xlu0 %1111
    %v1113 = vsel %vm1094, %v1052, -inf
    %1114 = vmax.xlane.f32.xlu0 %v1113
    %v1115 = vpop.xlane.xlu0 %1114
    %v1116 = vsel %vm1094, %v1053, -inf
    %1117 = vmax.xlane.f32.xlu0 %v1116
    %v1118 = vpop.xlane.xlu0 %1117
    %v1119 = vsel %vm1094, %v1054, -inf
    %1120 = vmax.xlane.f32.xlu0 %v1119
    %v1121 = vpop.xlane.xlu0 %1120
    %v1122 = vsel %vm1094, %v1055, -inf
    %1123 = vmax.xlane.f32.xlu0 %v1122
    %v1124 = vpop.xlane.xlu0 %1123
    %v1125 = vsel %vm1094, %v1056, -inf
    %1126 = vmax.xlane.f32.xlu0 %v1125
    %v1127 = vpop.xlane.xlu0 %1126
    %v1128 = vsel %vm1094, %v1057, -inf
    %1129 = vmax.xlane.f32.xlu0 %v1128
    %v1130 = vpop.xlane.xlu0 %1129
    %v1131 = vsel %vm1094, %v1058, -inf
    %1132 = vmax.xlane.f32.xlu0 %v1131
    %v1133 = vpop.xlane.xlu0 %1132
    %v1134 = vsel %vm1094, %v1059, -inf
    %1135 = vmax.xlane.f32.xlu0 %v1134
    %v1136 = vpop.xlane.xlu0 %1135
    %v1137 = vsel %vm1094, %v1060, -inf
    %1138 = vmax.xlane.f32.xlu0 %v1137
    %v1139 = vpop.xlane.xlu0 %1138
    %v1140 = vsel %vm1094, %v1061, -inf
    %1141 = vmax.xlane.f32.xlu0 %v1140
    %v1142 = vpop.xlane.xlu0 %1141
    %v1143 = vsel %vm1094, %v1062, -inf
    %1144 = vmax.xlane.f32.xlu0 %v1143
    %v1145 = vpop.xlane.xlu0 %1144
    %v1146 = vsel %vm1094, %v1063, -inf
    %1147 = vmax.xlane.f32.xlu0 %v1146
    %v1148 = vpop.xlane.xlu0 %1147
    %v1149 = vsel %vm1094, %v1064, -inf
    %1150 = vmax.xlane.f32.xlu0 %v1149
    %v1151 = vpop.xlane.xlu0 %1150
    %v1152 = vsel %vm1094, %v1065, -inf
    %1153 = vmax.xlane.f32.xlu0 %v1152
    %v1154 = vpop.xlane.xlu0 %1153
    %v1155 = vsel %vm1094, %v1066, -inf
    %1156 = vmax.xlane.f32.xlu0 %v1155
    %v1157 = vpop.xlane.xlu0 %1156
    %v1158 = vsel %vm1094, %v1067, -inf
    %1159 = vmax.xlane.f32.xlu0 %v1158
    %v1160 = vpop.xlane.xlu0 %1159
    %v1161 = vsel %vm1094, %v1068, -inf
    %1162 = vmax.xlane.f32.xlu0 %v1161
    %v1163 = vpop.xlane.xlu0 %1162
    %v1164 = vsel %vm1094, %v1069, -inf
    %1165 = vmax.xlane.f32.xlu0 %v1164
    %v1166 = vpop.xlane.xlu0 %1165
    %v1167 = vsel %vm1094, %v1070, -inf
    %1168 = vmax.xlane.f32.xlu0 %v1167
    %v1169 = vpop.xlane.xlu0 %1168
    %v1170 = vsel %vm1094, %v1071, -inf
    %1171 = vmax.xlane.f32.xlu0 %v1170
    %v1172 = vpop.xlane.xlu0 %1171
    %v1173 = vsel %vm1094, %v1072, -inf
    %1174 = vmax.xlane.f32.xlu0 %v1173
    %v1175 = vpop.xlane.xlu0 %1174
    %v1176 = vsel %vm1094, %v1073, -inf
    %1177 = vmax.xlane.f32.xlu0 %v1176
    %v1178 = vpop.xlane.xlu0 %1177
    %v1179 = vsel %vm1094, %v1074, -inf
    %1180 = vmax.xlane.f32.xlu0 %v1179
    %v1181 = vpop.xlane.xlu0 %1180
    %v1182 = vsel %vm1094, %v1075, -inf
    %1183 = vmax.xlane.f32.xlu0 %v1182
    %v1184 = vpop.xlane.xlu0 %1183
    %v1185 = vsel %vm1094, %v1076, -inf
    %1186 = vmax.xlane.f32.xlu0 %v1185
    %v1187 = vpop.xlane.xlu0 %1186
    %v1188 = vsel %vm1094, %v1077, -inf
    %1189 = vmax.xlane.f32.xlu0 %v1188
    %v1190 = vpop.xlane.xlu0 %1189
    %v1191 = vsel %vm1094, %v1078, -inf
    %1192 = vmax.xlane.f32.xlu0 %v1191
    %v1193 = vpop.xlane.xlu0 %1192
    %v1194 = vsel %vm1094, %v1079, -inf
    %1195 = vmax.xlane.f32.xlu0 %v1194
    %v1196 = vpop.xlane.xlu0 %1195
    %v1197 = vsel %vm1094, %v1080, -inf
    %1198 = vmax.xlane.f32.xlu0 %v1197
    %v1199 = vpop.xlane.xlu0 %1198
    %v1200 = vsel %vm1094, %v1081, -inf
    %1201 = vmax.xlane.f32.xlu0 %v1200
    %v1202 = vpop.xlane.xlu0 %1201
    %v1203 = vsel %vm1094, %v1082, -inf
    %1204 = vmax.xlane.f32.xlu0 %v1203
    %v1205 = vpop.xlane.xlu0 %1204
    %v1206 = vsel %vm1094, %v1083, -inf
    %1207 = vmax.xlane.f32.xlu0 %v1206
    %v1208 = vpop.xlane.xlu0 %1207
    %v1209 = vsel %vm1094, %v1084, -inf
    %1210 = vmax.xlane.f32.xlu0 %v1209
    %v1211 = vpop.xlane.xlu0 %1210
    %v1212 = vsel %vm1094, %v1085, -inf
    %1213 = vmax.xlane.f32.xlu0 %v1212
    %v1214 = vpop.xlane.xlu0 %1213
    %v1215 = vsel %vm1094, %v1086, -inf
    %1216 = vmax.xlane.f32.xlu0 %v1215
    %v1217 = vpop.xlane.xlu0 %1216
    %v1218 = vsel %vm1094, %v1087, -inf
    %1219 = vmax.xlane.f32.xlu0 %v1218
    %v1220 = vpop.xlane.xlu0 %1219
    %v1221 = vsel %vm1094, %v1088, -inf
    %1222 = vmax.xlane.f32.xlu0 %v1221
    %v1223 = vpop.xlane.xlu0 %1222
    %v1224 = vsel %vm1094, %v1089, -inf
    %1225 = vmax.xlane.f32.xlu0 %v1224
    %v1226 = vpop.xlane.xlu0 %1225
    %v1227 = vsel %vm1094, %v1090, -inf
    %1228 = vmax.xlane.f32.xlu0 %v1227
    %v1229 = vpop.xlane.xlu0 %1228
    %v1230 = vsel %vm1094, %v1091, -inf
    %1231 = vmax.xlane.f32.xlu0 %v1230
    %v1232 = vpop.xlane.xlu0 %1231
    %v1233 = vsel %vm1094, %v1092, -inf
    %1234 = vmax.xlane.f32.xlu0 %v1233
    %v1235 = vpop.xlane.xlu0 %1234
    %v1236 = vsel %vm1094, %v1093, -inf
    %1237 = vmax.xlane.f32.xlu0 %v1236
    %v1238 = vpop.xlane.xlu0 %1237
    %v1239 = vsub.f32 %v1046, %v1097
    %v1240 = vsub.f32 %v1047, %v1100
    %v1241 = vsub.f32 %v1048, %v1103
    %v1242 = vsub.f32 %v1049, %v1106
    %v1243 = vsub.f32 %v1050, %v1109
    %v1244 = vsub.f32 %v1051, %v1112
    %v1245 = vsub.f32 %v1052, %v1115
    %v1246 = vsub.f32 %v1053, %v1118
    %v1247 = vsub.f32 %v1054, %v1121
    %v1248 = vsub.f32 %v1055, %v1124
    %v1249 = vsub.f32 %v1056, %v1127
    %v1250 = vsub.f32 %v1057, %v1130
    %v1251 = vsub.f32 %v1058, %v1133
    %v1252 = vsub.f32 %v1059, %v1136
    %v1253 = vsub.f32 %v1060, %v1139
    %v1254 = vsub.f32 %v1061, %v1142
    %v1255 = vsub.f32 %v1062, %v1145
    %v1256 = vsub.f32 %v1063, %v1148
    %v1257 = vsub.f32 %v1064, %v1151
    %v1258 = vsub.f32 %v1065, %v1154
    %v1259 = vsub.f32 %v1066, %v1157
    %v1260 = vsub.f32 %v1067, %v1160
    %v1261 = vsub.f32 %v1068, %v1163
    %v1262 = vsub.f32 %v1069, %v1166
    %v1263 = vsub.f32 %v1070, %v1169
    %v1264 = vsub.f32 %v1071, %v1172
    %v1265 = vsub.f32 %v1072, %v1175
    %v1266 = vsub.f32 %v1073, %v1178
    %v1267 = vsub.f32 %v1074, %v1181
    %v1268 = vsub.f32 %v1075, %v1184
    %v1269 = vsub.f32 %v1076, %v1187
    %v1270 = vsub.f32 %v1077, %v1190
    %v1271 = vsub.f32 %v1078, %v1193
    %v1272 = vsub.f32 %v1079, %v1196
    %v1273 = vsub.f32 %v1080, %v1199
    %v1274 = vsub.f32 %v1081, %v1202
    %v1275 = vsub.f32 %v1082, %v1205
    %v1276 = vsub.f32 %v1083, %v1208
    %v1277 = vsub.f32 %v1084, %v1211
    %v1278 = vsub.f32 %v1085, %v1214
    %v1279 = vsub.f32 %v1086, %v1217
    %v1280 = vsub.f32 %v1087, %v1220
    %v1281 = vsub.f32 %v1088, %v1223
    %v1282 = vsub.f32 %v1089, %v1226
    %v1283 = vsub.f32 %v1090, %v1229
    %v1284 = vsub.f32 %v1091, %v1232
    %v1285 = vsub.f32 %v1092, %v1235
    %v1286 = vsub.f32 %v1093, %v1238
    %v1287 = vmul.f32 %v1239, 1.442695
    %v1288 = vpow.pop %v1287
    %v1289 = vmul.f32 %v1240, 1.442695
    %v1290 = vpow.pop %v1289
    %v1291 = vmul.f32 %v1241, 1.442695
    %v1292 = vpow.pop %v1291
    %v1293 = vmul.f32 %v1242, 1.442695
    %v1294 = vpow.pop %v1293
    %v1295 = vmul.f32 %v1243, 1.442695
    %v1296 = vpow.pop %v1295
    %v1297 = vmul.f32 %v1244, 1.442695
    %v1298 = vpow.pop %v1297
    %v1299 = vmul.f32 %v1245, 1.442695
    %v1300 = vpow.pop %v1299
    %v1301 = vmul.f32 %v1246, 1.442695
    %v1302 = vpow.pop %v1301
    %v1303 = vmul.f32 %v1247, 1.442695
    %v1304 = vpow.pop %v1303
    %v1305 = vmul.f32 %v1248, 1.442695
    %v1306 = vpow.pop %v1305
    %v1307 = vmul.f32 %v1249, 1.442695
    %v1308 = vpow.pop %v1307
    %v1309 = vmul.f32 %v1250, 1.442695
    %v1310 = vpow.pop %v1309
    %v1311 = vmul.f32 %v1251, 1.442695
    %v1312 = vpow.pop %v1311
    %v1313 = vmul.f32 %v1252, 1.442695
    %v1314 = vpow.pop %v1313
    %v1315 = vmul.f32 %v1253, 1.442695
    %v1316 = vpow.pop %v1315
    %v1317 = vmul.f32 %v1254, 1.442695
    %v1318 = vpow.pop %v1317
    %v1319 = vmul.f32 %v1255, 1.442695
    %v1320 = vpow.pop %v1319
    %v1321 = vmul.f32 %v1256, 1.442695
    %v1322 = vpow.pop %v1321
    %v1323 = vmul.f32 %v1257, 1.442695
    %v1324 = vpow.pop %v1323
    %v1325 = vmul.f32 %v1258, 1.442695
    %v1326 = vpow.pop %v1325
    %v1327 = vmul.f32 %v1259, 1.442695
    %v1328 = vpow.pop %v1327
    %v1329 = vmul.f32 %v1260, 1.442695
    %v1330 = vpow.pop %v1329
    %v1331 = vmul.f32 %v1261, 1.442695
    %v1332 = vpow.pop %v1331
    %v1333 = vmul.f32 %v1262, 1.442695
    %v1334 = vpow.pop %v1333
    %v1335 = vmul.f32 %v1263, 1.442695
    %v1336 = vpow.pop %v1335
    %v1337 = vmul.f32 %v1264, 1.442695
    %v1338 = vpow.pop %v1337
    %v1339 = vmul.f32 %v1265, 1.442695
    %v1340 = vpow.pop %v1339
    %v1341 = vmul.f32 %v1266, 1.442695
    %v1342 = vpow.pop %v1341
    %v1343 = vmul.f32 %v1267, 1.442695
    %v1344 = vpow.pop %v1343
    %v1345 = vmul.f32 %v1268, 1.442695
    %v1346 = vpow.pop %v1345
    %v1347 = vmul.f32 %v1269, 1.442695
    %v1348 = vpow.pop %v1347
    %v1349 = vmul.f32 %v1270, 1.442695
    %v1350 = vpow.pop %v1349
    %v1351 = vmul.f32 %v1271, 1.442695
    %v1352 = vpow.pop %v1351
    %v1353 = vmul.f32 %v1272, 1.442695
    %v1354 = vpow.pop %v1353
    %v1355 = vmul.f32 %v1273, 1.442695
    %v1356 = vpow.pop %v1355
    %v1357 = vmul.f32 %v1274, 1.442695
    %v1358 = vpow.pop %v1357
    %v1359 = vmul.f32 %v1275, 1.442695
    %v1360 = vpow.pop %v1359
    %v1361 = vmul.f32 %v1276, 1.442695
    %v1362 = vpow.pop %v1361
    %v1363 = vmul.f32 %v1277, 1.442695
    %v1364 = vpow.pop %v1363
    %v1365 = vmul.f32 %v1278, 1.442695
    %v1366 = vpow.pop %v1365
    %v1367 = vmul.f32 %v1279, 1.442695
    %v1368 = vpow.pop %v1367
    %v1369 = vmul.f32 %v1280, 1.442695
    %v1370 = vpow.pop %v1369
    %v1371 = vmul.f32 %v1281, 1.442695
    %v1372 = vpow.pop %v1371
    %v1373 = vmul.f32 %v1282, 1.442695
    %v1374 = vpow.pop %v1373
    %v1375 = vmul.f32 %v1283, 1.442695
    %v1376 = vpow.pop %v1375
    %v1377 = vmul.f32 %v1284, 1.442695
    %v1378 = vpow.pop %v1377
    %v1379 = vmul.f32 %v1285, 1.442695
    %v1380 = vpow.pop %v1379
    %v1381 = vmul.f32 %v1286, 1.442695
    %v1382 = vpow.pop %v1381
    %1431 = vrot.lane.b32.xlu0 %v1288, 124
    %v1432 = vpop.permute.xlu0 %1431
    %1433 = vrot.lane.b32.xlu0 %v1290, 124
    %v1434 = vpop.permute.xlu0 %1433
    %1435 = vrot.lane.b32.xlu0 %v1292, 124
    %v1436 = vpop.permute.xlu0 %1435
    %1437 = vrot.lane.b32.xlu0 %v1294, 124
    %v1438 = vpop.permute.xlu0 %1437
    %1439 = vrot.lane.b32.xlu0 %v1296, 124
    %v1440 = vpop.permute.xlu0 %1439
    %1441 = vrot.lane.b32.xlu0 %v1298, 124
    %v1442 = vpop.permute.xlu0 %1441
    %1443 = vrot.lane.b32.xlu0 %v1300, 124
    %v1444 = vpop.permute.xlu0 %1443
    %1445 = vrot.lane.b32.xlu0 %v1302, 124
    %v1446 = vpop.permute.xlu0 %1445
    %1447 = vrot.lane.b32.xlu0 %v1304, 124
    %v1448 = vpop.permute.xlu0 %1447
    %1449 = vrot.lane.b32.xlu0 %v1306, 124
    %v1450 = vpop.permute.xlu0 %1449
    %1451 = vrot.lane.b32.xlu0 %v1308, 124
    %v1452 = vpop.permute.xlu0 %1451
    %1453 = vrot.lane.b32.xlu0 %v1310, 124
    %v1454 = vpop.permute.xlu0 %1453
    %1455 = vrot.lane.b32.xlu0 %v1312, 124
    %v1456 = vpop.permute.xlu0 %1455
    %1457 = vrot.lane.b32.xlu0 %v1314, 124
    %v1458 = vpop.permute.xlu0 %1457
    %1459 = vrot.lane.b32.xlu0 %v1316, 124
    %v1460 = vpop.permute.xlu0 %1459
    %1461 = vrot.lane.b32.xlu0 %v1318, 124
    %v1462 = vpop.permute.xlu0 %1461
    %1463 = vrot.lane.b32.xlu0 %v1320, 124
    %v1464 = vpop.permute.xlu0 %1463
    %1465 = vrot.lane.b32.xlu0 %v1322, 124
    %v1466 = vpop.permute.xlu0 %1465
    %1467 = vrot.lane.b32.xlu0 %v1324, 124
    %v1468 = vpop.permute.xlu0 %1467
    %1469 = vrot.lane.b32.xlu0 %v1326, 124
    %v1470 = vpop.permute.xlu0 %1469
    %1471 = vrot.lane.b32.xlu0 %v1328, 124
    %v1472 = vpop.permute.xlu0 %1471
    %1473 = vrot.lane.b32.xlu0 %v1330, 124
    %v1474 = vpop.permute.xlu0 %1473
    %1475 = vrot.lane.b32.xlu0 %v1332, 124
    %v1476 = vpop.permute.xlu0 %1475
    %1477 = vrot.lane.b32.xlu0 %v1334, 124
    %v1478 = vpop.permute.xlu0 %1477
    %1479 = vrot.lane.b32.xlu0 %v1336, 124
    %v1480 = vpop.permute.xlu0 %1479
    %1481 = vrot.lane.b32.xlu0 %v1338, 124
    %v1482 = vpop.permute.xlu0 %1481
    %1483 = vrot.lane.b32.xlu0 %v1340, 124
    %v1484 = vpop.permute.xlu0 %1483
    %1485 = vrot.lane.b32.xlu0 %v1342, 124
    %v1486 = vpop.permute.xlu0 %1485
    %1487 = vrot.lane.b32.xlu0 %v1344, 124
    %v1488 = vpop.permute.xlu0 %1487
    %1489 = vrot.lane.b32.xlu0 %v1346, 124
    %v1490 = vpop.permute.xlu0 %1489
    %1491 = vrot.lane.b32.xlu0 %v1348, 124
    %v1492 = vpop.permute.xlu0 %1491
    %1493 = vrot.lane.b32.xlu0 %v1350, 124
    %v1494 = vpop.permute.xlu0 %1493
    %1495 = vrot.lane.b32.xlu0 %v1352, 124
    %v1496 = vpop.permute.xlu0 %1495
    %1497 = vrot.lane.b32.xlu0 %v1354, 124
    %v1498 = vpop.permute.xlu0 %1497
    %1499 = vrot.lane.b32.xlu0 %v1356, 124
    %v1500 = vpop.permute.xlu0 %1499
    %1501 = vrot.lane.b32.xlu0 %v1358, 124
    %v1502 = vpop.permute.xlu0 %1501
    %1503 = vrot.lane.b32.xlu0 %v1360, 124
    %v1504 = vpop.permute.xlu0 %1503
    %1505 = vrot.lane.b32.xlu0 %v1362, 124
    %v1506 = vpop.permute.xlu0 %1505
    %1507 = vrot.lane.b32.xlu0 %v1364, 124
    %v1508 = vpop.permute.xlu0 %1507
    %1509 = vrot.lane.b32.xlu0 %v1366, 124
    %v1510 = vpop.permute.xlu0 %1509
    %1511 = vrot.lane.b32.xlu0 %v1368, 124
    %v1512 = vpop.permute.xlu0 %1511
    %1513 = vrot.lane.b32.xlu0 %v1370, 124
    %v1514 = vpop.permute.xlu0 %1513
    %1515 = vrot.lane.b32.xlu0 %v1372, 124
    %v1516 = vpop.permute.xlu0 %1515
    %1517 = vrot.lane.b32.xlu0 %v1374, 124
    %v1518 = vpop.permute.xlu0 %1517
    %1519 = vrot.lane.b32.xlu0 %v1376, 124
    %v1520 = vpop.permute.xlu0 %1519
    %1521 = vrot.lane.b32.xlu0 %v1378, 124
    %v1522 = vpop.permute.xlu0 %1521
    %1523 = vrot.lane.b32.xlu0 %v1380, 124
    %v1524 = vpop.permute.xlu0 %1523
    %1525 = vrot.lane.b32.xlu0 %v1382, 124
    %v1526 = vpop.permute.xlu0 %1525
    %v1575 = vsel %vm135, %v1432, 0.0
    %1576 = vadd.xlane.f32.xlu0 %v1575
    %v1577 = vpop.xlane.xlu0 %1576
    %v1578 = vsel %vm135, %v1434, 0.0
    %1579 = vadd.xlane.f32.xlu0 %v1578
    %v1580 = vpop.xlane.xlu0 %1579
    %v1581 = vsel %vm135, %v1436, 0.0
    %1582 = vadd.xlane.f32.xlu0 %v1581
    %v1583 = vpop.xlane.xlu0 %1582
    %v1584 = vsel %vm135, %v1438, 0.0
    %1585 = vadd.xlane.f32.xlu0 %v1584
    %v1586 = vpop.xlane.xlu0 %1585
    %v1587 = vsel %vm135, %v1440, 0.0
    %1588 = vadd.xlane.f32.xlu0 %v1587
    %v1589 = vpop.xlane.xlu0 %1588
    %v1590 = vsel %vm135, %v1442, 0.0
    %1591 = vadd.xlane.f32.xlu0 %v1590
    %v1592 = vpop.xlane.xlu0 %1591
    %v1593 = vsel %vm135, %v1444, 0.0
    %1594 = vadd.xlane.f32.xlu0 %v1593
    %v1595 = vpop.xlane.xlu0 %1594
    %v1596 = vsel %vm135, %v1446, 0.0
    %1597 = vadd.xlane.f32.xlu0 %v1596
    %v1598 = vpop.xlane.xlu0 %1597
    %v1599 = vsel %vm135, %v1448, 0.0
    %1600 = vadd.xlane.f32.xlu0 %v1599
    %v1601 = vpop.xlane.xlu0 %1600
    %v1602 = vsel %vm135, %v1450, 0.0
    %1603 = vadd.xlane.f32.xlu0 %v1602
    %v1604 = vpop.xlane.xlu0 %1603
    %v1605 = vsel %vm135, %v1452, 0.0
    %1606 = vadd.xlane.f32.xlu0 %v1605
    %v1607 = vpop.xlane.xlu0 %1606
    %v1608 = vsel %vm135, %v1454, 0.0
    %1609 = vadd.xlane.f32.xlu0 %v1608
    %v1610 = vpop.xlane.xlu0 %1609
    %v1611 = vsel %vm135, %v1456, 0.0
    %1612 = vadd.xlane.f32.xlu0 %v1611
    %v1613 = vpop.xlane.xlu0 %1612
    %v1614 = vsel %vm135, %v1458, 0.0
    %1615 = vadd.xlane.f32.xlu0 %v1614
    %v1616 = vpop.xlane.xlu0 %1615
    %v1617 = vsel %vm135, %v1460, 0.0
    %1618 = vadd.xlane.f32.xlu0 %v1617
    %v1619 = vpop.xlane.xlu0 %1618
    %v1620 = vsel %vm135, %v1462, 0.0
    %1621 = vadd.xlane.f32.xlu0 %v1620
    %v1622 = vpop.xlane.xlu0 %1621
    %v1623 = vsel %vm135, %v1464, 0.0
    %1624 = vadd.xlane.f32.xlu0 %v1623
    %v1625 = vpop.xlane.xlu0 %1624
    %v1626 = vsel %vm135, %v1466, 0.0
    %1627 = vadd.xlane.f32.xlu0 %v1626
    %v1628 = vpop.xlane.xlu0 %1627
    %v1629 = vsel %vm135, %v1468, 0.0
    %1630 = vadd.xlane.f32.xlu0 %v1629
    %v1631 = vpop.xlane.xlu0 %1630
    %v1632 = vsel %vm135, %v1470, 0.0
    %1633 = vadd.xlane.f32.xlu0 %v1632
    %v1634 = vpop.xlane.xlu0 %1633
    %v1635 = vsel %vm135, %v1472, 0.0
    %1636 = vadd.xlane.f32.xlu0 %v1635
    %v1637 = vpop.xlane.xlu0 %1636
    %v1638 = vsel %vm135, %v1474, 0.0
    %1639 = vadd.xlane.f32.xlu0 %v1638
    %v1640 = vpop.xlane.xlu0 %1639
    %v1641 = vsel %vm135, %v1476, 0.0
    %1642 = vadd.xlane.f32.xlu0 %v1641
    %v1643 = vpop.xlane.xlu0 %1642
    %v1644 = vsel %vm135, %v1478, 0.0
    %1645 = vadd.xlane.f32.xlu0 %v1644
    %v1646 = vpop.xlane.xlu0 %1645
    %v1647 = vsel %vm135, %v1480, 0.0
    %1648 = vadd.xlane.f32.xlu0 %v1647
    %v1649 = vpop.xlane.xlu0 %1648
    %v1650 = vsel %vm135, %v1482, 0.0
    %1651 = vadd.xlane.f32.xlu0 %v1650
    %v1652 = vpop.xlane.xlu0 %1651
    %v1653 = vsel %vm135, %v1484, 0.0
    %1654 = vadd.xlane.f32.xlu0 %v1653
    %v1655 = vpop.xlane.xlu0 %1654
    %v1656 = vsel %vm135, %v1486, 0.0
    %1657 = vadd.xlane.f32.xlu0 %v1656
    %v1658 = vpop.xlane.xlu0 %1657
    %v1659 = vsel %vm135, %v1488, 0.0
    %1660 = vadd.xlane.f32.xlu0 %v1659
    %v1661 = vpop.xlane.xlu0 %1660
    %v1662 = vsel %vm135, %v1490, 0.0
    %1663 = vadd.xlane.f32.xlu0 %v1662
    %v1664 = vpop.xlane.xlu0 %1663
    %v1665 = vsel %vm135, %v1492, 0.0
    %1666 = vadd.xlane.f32.xlu0 %v1665
    %v1667 = vpop.xlane.xlu0 %1666
    %v1668 = vsel %vm135, %v1494, 0.0
    %1669 = vadd.xlane.f32.xlu0 %v1668
    %v1670 = vpop.xlane.xlu0 %1669
    %v1671 = vsel %vm135, %v1496, 0.0
    %1672 = vadd.xlane.f32.xlu0 %v1671
    %v1673 = vpop.xlane.xlu0 %1672
    %v1674 = vsel %vm135, %v1498, 0.0
    %1675 = vadd.xlane.f32.xlu0 %v1674
    %v1676 = vpop.xlane.xlu0 %1675
    %v1677 = vsel %vm135, %v1500, 0.0
    %1678 = vadd.xlane.f32.xlu0 %v1677
    %v1679 = vpop.xlane.xlu0 %1678
    %v1680 = vsel %vm135, %v1502, 0.0
    %1681 = vadd.xlane.f32.xlu0 %v1680
    %v1682 = vpop.xlane.xlu0 %1681
    %v1683 = vsel %vm135, %v1504, 0.0
    %1684 = vadd.xlane.f32.xlu0 %v1683
    %v1685 = vpop.xlane.xlu0 %1684
    %v1686 = vsel %vm135, %v1506, 0.0
    %1687 = vadd.xlane.f32.xlu0 %v1686
    %v1688 = vpop.xlane.xlu0 %1687
    %v1689 = vsel %vm135, %v1508, 0.0
    %1690 = vadd.xlane.f32.xlu0 %v1689
    %v1691 = vpop.xlane.xlu0 %1690
    %v1692 = vsel %vm135, %v1510, 0.0
    %1693 = vadd.xlane.f32.xlu0 %v1692
    %v1694 = vpop.xlane.xlu0 %1693
    %v1695 = vsel %vm135, %v1512, 0.0
    %1696 = vadd.xlane.f32.xlu0 %v1695
    %v1697 = vpop.xlane.xlu0 %1696
    %v1698 = vsel %vm135, %v1514, 0.0
    %1699 = vadd.xlane.f32.xlu0 %v1698
    %v1700 = vpop.xlane.xlu0 %1699
    %v1701 = vsel %vm135, %v1516, 0.0
    %1702 = vadd.xlane.f32.xlu0 %v1701
    %v1703 = vpop.xlane.xlu0 %1702
    %v1704 = vsel %vm135, %v1518, 0.0
    %1705 = vadd.xlane.f32.xlu0 %v1704
    %v1706 = vpop.xlane.xlu0 %1705
    %v1707 = vsel %vm135, %v1520, 0.0
    %1708 = vadd.xlane.f32.xlu0 %v1707
    %v1709 = vpop.xlane.xlu0 %1708
    %v1710 = vsel %vm135, %v1522, 0.0
    %1711 = vadd.xlane.f32.xlu0 %v1710
    %v1712 = vpop.xlane.xlu0 %1711
    %v1713 = vsel %vm135, %v1524, 0.0
    %1714 = vadd.xlane.f32.xlu0 %v1713
    %v1715 = vpop.xlane.xlu0 %1714
    %v1716 = vsel %vm135, %v1526, 0.0
    %1717 = vadd.xlane.f32.xlu0 %v1716
    %v1718 = vpop.xlane.xlu0 %1717
    %v1719 = vrcp.pop %v1577
    %v1720 = vrcp.pop %v1580
    %v1721 = vrcp.pop %v1583
    %v1722 = vrcp.pop %v1586
    %v1723 = vrcp.pop %v1589
    %v1724 = vrcp.pop %v1592
    %v1725 = vrcp.pop %v1595
    %v1726 = vrcp.pop %v1598
    %v1727 = vrcp.pop %v1601
    %v1728 = vrcp.pop %v1604
    %v1729 = vrcp.pop %v1607
    %v1730 = vrcp.pop %v1610
    %v1731 = vrcp.pop %v1613
    %v1732 = vrcp.pop %v1616
    %v1733 = vrcp.pop %v1619
    %v1734 = vrcp.pop %v1622
    %v1735 = vrcp.pop %v1625
    %v1736 = vrcp.pop %v1628
    %v1737 = vrcp.pop %v1631
    %v1738 = vrcp.pop %v1634
    %v1739 = vrcp.pop %v1637
    %v1740 = vrcp.pop %v1640
    %v1741 = vrcp.pop %v1643
    %v1742 = vrcp.pop %v1646
    %v1743 = vrcp.pop %v1649
    %v1744 = vrcp.pop %v1652
    %v1745 = vrcp.pop %v1655
    %v1746 = vrcp.pop %v1658
    %v1747 = vrcp.pop %v1661
    %v1748 = vrcp.pop %v1664
    %v1749 = vrcp.pop %v1667
    %v1750 = vrcp.pop %v1670
    %v1751 = vrcp.pop %v1673
    %v1752 = vrcp.pop %v1676
    %v1753 = vrcp.pop %v1679
    %v1754 = vrcp.pop %v1682
    %v1755 = vrcp.pop %v1685
    %v1756 = vrcp.pop %v1688
    %v1757 = vrcp.pop %v1691
    %v1758 = vrcp.pop %v1694
    %v1759 = vrcp.pop %v1697
    %v1760 = vrcp.pop %v1700
    %v1761 = vrcp.pop %v1703
    %v1762 = vrcp.pop %v1706
    %v1763 = vrcp.pop %v1709
    %v1764 = vrcp.pop %v1712
    %v1765 = vrcp.pop %v1715
    %v1766 = vrcp.pop %v1718
    %v1767 = vmul.f32 %v1288, %v1719
    %v1768 = vmul.f32 %v1290, %v1720
    %v1769 = vmul.f32 %v1292, %v1721
    %v1770 = vmul.f32 %v1294, %v1722
    %v1771 = vmul.f32 %v1296, %v1723
    %v1772 = vmul.f32 %v1298, %v1724
    %v1773 = vmul.f32 %v1300, %v1725
    %v1774 = vmul.f32 %v1302, %v1726
    %v1775 = vmul.f32 %v1304, %v1727
    %v1776 = vmul.f32 %v1306, %v1728
    %v1777 = vmul.f32 %v1308, %v1729
    %v1778 = vmul.f32 %v1310, %v1730
    %v1779 = vmul.f32 %v1312, %v1731
    %v1780 = vmul.f32 %v1314, %v1732
    %v1781 = vmul.f32 %v1316, %v1733
    %v1782 = vmul.f32 %v1318, %v1734
    %v1783 = vmul.f32 %v1320, %v1735
    %v1784 = vmul.f32 %v1322, %v1736
    %v1785 = vmul.f32 %v1324, %v1737
    %v1786 = vmul.f32 %v1326, %v1738
    %v1787 = vmul.f32 %v1328, %v1739
    %v1788 = vmul.f32 %v1330, %v1740
    %v1789 = vmul.f32 %v1332, %v1741
    %v1790 = vmul.f32 %v1334, %v1742
    %v1791 = vmul.f32 %v1336, %v1743
    %v1792 = vmul.f32 %v1338, %v1744
    %v1793 = vmul.f32 %v1340, %v1745
    %v1794 = vmul.f32 %v1342, %v1746
    %v1795 = vmul.f32 %v1344, %v1747
    %v1796 = vmul.f32 %v1346, %v1748
    %v1797 = vmul.f32 %v1348, %v1749
    %v1798 = vmul.f32 %v1350, %v1750
    %v1799 = vmul.f32 %v1352, %v1751
    %v1800 = vmul.f32 %v1354, %v1752
    %v1801 = vmul.f32 %v1356, %v1753
    %v1802 = vmul.f32 %v1358, %v1754
    %v1803 = vmul.f32 %v1360, %v1755
    %v1804 = vmul.f32 %v1362, %v1756
    %v1805 = vmul.f32 %v1364, %v1757
    %v1806 = vmul.f32 %v1366, %v1758
    %v1807 = vmul.f32 %v1368, %v1759
    %v1808 = vmul.f32 %v1370, %v1760
    %v1809 = vmul.f32 %v1372, %v1761
    %v1810 = vmul.f32 %v1374, %v1762
    %v1811 = vmul.f32 %v1376, %v1763
    %v1812 = vmul.f32 %v1378, %v1764
    %v1813 = vmul.f32 %v1380, %v1765
    %v1814 = vmul.f32 %v1382, %v1766
    %v1815 = vsel %vm1094, %v1767, 0.0
    %v1816 = vsel %vm1094, %v1768, 0.0
    %v1817 = vadd.f32 %v1815, %v1816
    %v1818 = vsel %vm1094, %v1769, 0.0
    %v1819 = vadd.f32 %v1817, %v1818
    %v1820 = vsel %vm1094, %v1770, 0.0
    %v1821 = vadd.f32 %v1819, %v1820
    %v1822 = vsel %vm1094, %v1771, 0.0
    %v1823 = vadd.f32 %v1821, %v1822
    %v1824 = vsel %vm1094, %v1772, 0.0
    %v1825 = vadd.f32 %v1823, %v1824
    %v1826 = vsel %vm1094, %v1773, 0.0
    %v1827 = vadd.f32 %v1825, %v1826
    %v1828 = vsel %vm1094, %v1774, 0.0
    %v1829 = vadd.f32 %v1827, %v1828
    %v1830 = vrot.slane %v1829, 4
    %v1831 = vadd.f32 %v1829, %v1830
    %v1832 = vrot.slane %v1831, 2
    %v1833 = vadd.f32 %v1831, %v1832
    %v1834 = vrot.slane %v1833, 1
    %v1835 = vadd.f32 %v1833, %v1834
    %v1836 = vsel %vm1094, %v1775, 0.0
    %v1837 = vsel %vm1094, %v1776, 0.0
    %v1838 = vadd.f32 %v1836, %v1837
    %v1839 = vsel %vm1094, %v1777, 0.0
    %v1840 = vadd.f32 %v1838, %v1839
    %v1841 = vsel %vm1094, %v1778, 0.0
    %v1842 = vadd.f32 %v1840, %v1841
    %v1843 = vsel %vm1094, %v1779, 0.0
    %v1844 = vadd.f32 %v1842, %v1843
    %v1845 = vsel %vm1094, %v1780, 0.0
    %v1846 = vadd.f32 %v1844, %v1845
    %v1847 = vsel %vm1094, %v1781, 0.0
    %v1848 = vadd.f32 %v1846, %v1847
    %v1849 = vsel %vm1094, %v1782, 0.0
    %v1850 = vadd.f32 %v1848, %v1849
    %v1851 = vrot.slane %v1850, 4
    %v1852 = vadd.f32 %v1850, %v1851
    %v1853 = vrot.slane %v1852, 2
    %v1854 = vadd.f32 %v1852, %v1853
    %v1855 = vrot.slane %v1854, 1
    %v1856 = vadd.f32 %v1854, %v1855
    %v1857 = vsel %vm1094, %v1783, 0.0
    %v1858 = vsel %vm1094, %v1784, 0.0
    %v1859 = vadd.f32 %v1857, %v1858
    %v1860 = vsel %vm1094, %v1785, 0.0
    %v1861 = vadd.f32 %v1859, %v1860
    %v1862 = vsel %vm1094, %v1786, 0.0
    %v1863 = vadd.f32 %v1861, %v1862
    %v1864 = vsel %vm1094, %v1787, 0.0
    %v1865 = vadd.f32 %v1863, %v1864
    %v1866 = vsel %vm1094, %v1788, 0.0
    %v1867 = vadd.f32 %v1865, %v1866
    %v1868 = vsel %vm1094, %v1789, 0.0
    %v1869 = vadd.f32 %v1867, %v1868
    %v1870 = vsel %vm1094, %v1790, 0.0
    %v1871 = vadd.f32 %v1869, %v1870
    %v1872 = vrot.slane %v1871, 4
    %v1873 = vadd.f32 %v1871, %v1872
    %v1874 = vrot.slane %v1873, 2
    %v1875 = vadd.f32 %v1873, %v1874
    %v1876 = vrot.slane %v1875, 1
    %v1877 = vadd.f32 %v1875, %v1876
    %v1878 = vsel %vm1094, %v1791, 0.0
    %v1879 = vsel %vm1094, %v1792, 0.0
    %v1880 = vadd.f32 %v1878, %v1879
    %v1881 = vsel %vm1094, %v1793, 0.0
    %v1882 = vadd.f32 %v1880, %v1881
    %v1883 = vsel %vm1094, %v1794, 0.0
    %v1884 = vadd.f32 %v1882, %v1883
    %v1885 = vsel %vm1094, %v1795, 0.0
    %v1886 = vadd.f32 %v1884, %v1885
    %v1887 = vsel %vm1094, %v1796, 0.0
    %v1888 = vadd.f32 %v1886, %v1887
    %v1889 = vsel %vm1094, %v1797, 0.0
    %v1890 = vadd.f32 %v1888, %v1889
    %v1891 = vsel %vm1094, %v1798, 0.0
    %v1892 = vadd.f32 %v1890, %v1891
    %v1893 = vrot.slane %v1892, 4
    %v1894 = vadd.f32 %v1892, %v1893
    %v1895 = vrot.slane %v1894, 2
    %v1896 = vadd.f32 %v1894, %v1895
    %v1897 = vrot.slane %v1896, 1
    %v1898 = vadd.f32 %v1896, %v1897
    %v1899 = vsel %vm1094, %v1799, 0.0
    %v1900 = vsel %vm1094, %v1800, 0.0
    %v1901 = vadd.f32 %v1899, %v1900
    %v1902 = vsel %vm1094, %v1801, 0.0
    %v1903 = vadd.f32 %v1901, %v1902
    %v1904 = vsel %vm1094, %v1802, 0.0
    %v1905 = vadd.f32 %v1903, %v1904
    %v1906 = vsel %vm1094, %v1803, 0.0
    %v1907 = vadd.f32 %v1905, %v1906
    %v1908 = vsel %vm1094, %v1804, 0.0
    %v1909 = vadd.f32 %v1907, %v1908
    %v1910 = vsel %vm1094, %v1805, 0.0
    %v1911 = vadd.f32 %v1909, %v1910
    %v1912 = vsel %vm1094, %v1806, 0.0
    %v1913 = vadd.f32 %v1911, %v1912
    %v1914 = vrot.slane %v1913, 4
    %v1915 = vadd.f32 %v1913, %v1914
    %v1916 = vrot.slane %v1915, 2
    %v1917 = vadd.f32 %v1915, %v1916
    %v1918 = vrot.slane %v1917, 1
    %v1919 = vadd.f32 %v1917, %v1918
    %v1920 = vsel %vm1094, %v1807, 0.0
    %v1921 = vsel %vm1094, %v1808, 0.0
    %v1922 = vadd.f32 %v1920, %v1921
    %v1923 = vsel %vm1094, %v1809, 0.0
    %v1924 = vadd.f32 %v1922, %v1923
    %v1925 = vsel %vm1094, %v1810, 0.0
    %v1926 = vadd.f32 %v1924, %v1925
    %v1927 = vsel %vm1094, %v1811, 0.0
    %v1928 = vadd.f32 %v1926, %v1927
    %v1929 = vsel %vm1094, %v1812, 0.0
    %v1930 = vadd.f32 %v1928, %v1929
    %v1931 = vsel %vm1094, %v1813, 0.0
    %v1932 = vadd.f32 %v1930, %v1931
    %v1933 = vsel %vm1094, %v1814, 0.0
    %v1934 = vadd.f32 %v1932, %v1933
    %v1935 = vrot.slane %v1934, 4
    %v1936 = vadd.f32 %v1934, %v1935
    %v1937 = vrot.slane %v1936, 2
    %v1938 = vadd.f32 %v1936, %v1937
    %v1939 = vrot.slane %v1938, 1
    %v1940 = vadd.f32 %v1938, %v1939
    %1949 = vrot.lane.b32.xlu0 %v1767, 124
    %v1950 = vpop.permute.xlu0 %1949
    %1951 = vrot.lane.b32.xlu0 %v1768, 124
    %v1952 = vpop.permute.xlu0 %1951
    %1953 = vrot.lane.b32.xlu0 %v1769, 124
    %v1954 = vpop.permute.xlu0 %1953
    %1955 = vrot.lane.b32.xlu0 %v1770, 124
    %v1956 = vpop.permute.xlu0 %1955
    %1957 = vrot.lane.b32.xlu0 %v1771, 124
    %v1958 = vpop.permute.xlu0 %1957
    %1959 = vrot.lane.b32.xlu0 %v1772, 124
    %v1960 = vpop.permute.xlu0 %1959
    %1961 = vrot.lane.b32.xlu0 %v1773, 124
    %v1962 = vpop.permute.xlu0 %1961
    %1963 = vrot.lane.b32.xlu0 %v1774, 124
    %v1964 = vpop.permute.xlu0 %1963
    %1973 = vxpose.xlu0.b32.start [1/16] %v1950, 128
    %1974 = vxpose.xlu0.b32.cont [2/16] %v1952, 128
    %1975 = vxpose.xlu0.b32.cont [3/16] %v1954, 128
    %1976 = vxpose.xlu0.b32.cont [4/16] %v1956, 128
    %1977 = vxpose.xlu0.b32.cont [5/16] %v1958, 128
    %1978 = vxpose.xlu0.b32.cont [6/16] %v1960, 128
    %1979 = vxpose.xlu0.b32.cont [7/16] %v1962, 128
    %1980 = vxpose.xlu0.b32.cont [8/16] %v1964, 128
    %1981 = vxpose.xlu0.b32.cont [9/16] 0.0, 128
    %1982 = vxpose.xlu0.b32.cont [10/16] 0.0, 128
    %1983 = vxpose.xlu0.b32.cont [11/16] 0.0, 128
    %1984 = vxpose.xlu0.b32.cont [12/16] 0.0, 128
    %1985 = vxpose.xlu0.b32.cont [13/16] 0.0, 128
    %1986 = vxpose.xlu0.b32.cont [14/16] 0.0, 128
    %1987 = vxpose.xlu0.b32.cont [15/16] 0.0, 128
    %1988 = vxpose.xlu0.b32.end [16/16] 0.0, 128
    %v1989 = vpop.trf.xlu0
    %v1990 = vpop.trf.xlu0
    %v1991 = vpop.trf.xlu0
    %v1992 = vpop.trf.xlu0
    %v1993 = vpop.trf.xlu0
    %v1994 = vpop.trf.xlu0
    %v1995 = vpop.trf.xlu0
    %v1996 = vpop.trf.xlu0
    %v1997 = vpop.trf.xlu0
    %v1998 = vpop.trf.xlu0
    %v1999 = vpop.trf.xlu0
    %v2000 = vpop.trf.xlu0
    %v2001 = vpop.trf.xlu0
    %v2002 = vpop.trf.xlu0
    %v2003 = vpop.trf.xlu0
    %v2004 = vpop.trf.xlu0
    %vm2005 = vcmask 523264
    %v2007 = vsel %vm2005, %v1989, 0
    %2009 = vmatprep.subr.mxu0 0.0
    %2010 = vmatpush1.msra.mxu0 %v1046
    %2011 = vmatprep.subr.mxu0 0.0
    %2012 = vmatpush1.msra.mxu0 %v1047
    %2013 = vmatprep.subr.mxu0 0.0
    %2014 = vmatpush1.msra.mxu0 %v1048
    %2015 = vmatprep.subr.mxu0 0.0
    %2016 = vmatpush1.msra.mxu0 %v1049
    %2017 = vmatprep.subr.mxu0 0.0
    %2018 = vmatpush1.msra.mxu0 %v1050
    %2019 = vmatprep.subr.mxu0 0.0
    %2020 = vmatpush1.msra.mxu0 %v1051
    %2021 = vmatprep.subr.mxu0 0.0
    %2022 = vmatpush1.msra.mxu0 %v1052
    %2023 = vmatprep.subr.mxu0 0.0
    %2024 = vmatpush1.msra.mxu0 %v1053
    %2025 = vmatprep.subr.mxu0 0.0
    %2026 = vmatpush1.msra.mxu0 0.0
    %2027 = vmatprep.subr.mxu0 0.0
    %2028 = vmatpush1.msra.mxu0 0.0
    %2029 = vmatprep.subr.mxu0 0.0
    %2030 = vmatpush1.msra.mxu0 0.0
    %2031 = vmatprep.subr.mxu0 0.0
    %2032 = vmatpush1.msra.mxu0 0.0
    %2033 = vmatprep.subr.mxu0 0.0
    %2034 = vmatpush1.msra.mxu0 0.0
    %2035 = vmatprep.subr.mxu0 0.0
    %2036 = vmatpush1.msra.mxu0 0.0
    %2037 = vmatprep.subr.mxu0 0.0
    %2038 = vmatpush1.msra.mxu0 0.0
    %2039 = vmatprep.subr.mxu0 0.0
    %2040 = vmatpush1.msra.mxu0 0.0
    %2041 = vmatprep.subr.mxu0 0.0
    %2042 = vmatpush1.msra.mxu0 0.0
    %2043 = vmatprep.subr.mxu0 0.0
    %2044 = vmatpush1.msra.mxu0 0.0
    %2045 = vmatprep.subr.mxu0 0.0
    %2046 = vmatpush1.msra.mxu0 0.0
    %2047 = vmatprep.subr.mxu0 0.0
    %2048 = vmatpush1.msra.mxu0 0.0
    %2049 = vmatprep.subr.mxu0 0.0
    %2050 = vmatpush1.msra.mxu0 0.0
    %2051 = vmatprep.subr.mxu0 0.0
    %2052 = vmatpush1.msra.mxu0 0.0
    %2053 = vmatprep.subr.mxu0 0.0
    %2054 = vmatpush1.msra.mxu0 0.0
    %2055 = vmatprep.subr.mxu0 0.0
    %2056 = vmatpush1.msra.mxu0 0.0
    %2057 = vmatprep.subr.mxu0 0.0
    %2058 = vmatpush1.msra.mxu0 0.0
    %2059 = vmatprep.subr.mxu0 0.0
    %2060 = vmatpush1.msra.mxu0 0.0
    %2061 = vmatprep.subr.mxu0 0.0
    %2062 = vmatpush1.msra.mxu0 0.0
    %2063 = vmatprep.subr.mxu0 0.0
    %2064 = vmatpush1.msra.mxu0 0.0
    %2065 = vmatprep.subr.mxu0 0.0
    %2066 = vmatpush1.msra.mxu0 0.0
    %2067 = vmatprep.subr.mxu0 0.0
    %2068 = vmatpush1.msra.mxu0 0.0
    %2069 = vmatprep.subr.mxu0 0.0
    %2070 = vmatpush1.msra.mxu0 0.0
    %2071 = vmatprep.subr.mxu0 0.0
    %2072 = vmatpush1.msra.mxu0 0.0
    %2073 = vmatprep.mubr.f32.mxu0 0.0
    %2074 = vmatmul.mubr.f32.gmra.mrb[0].mxu0 %v2007
    %v2075 = vpop.f32.mrb[0].mxu0
    %v2076 = vadd.f32 0.0, %v2075
    %v2077 = vpop.f32.mrb[0].mxu0
    %2078 = vdwg.mxu0
    %2087 = vrot.lane.b32.xlu0 %v1775, 124
    %v2088 = vpop.permute.xlu0 %2087
    %2089 = vrot.lane.b32.xlu0 %v1776, 124
    %v2090 = vpop.permute.xlu0 %2089
    %2091 = vrot.lane.b32.xlu0 %v1777, 124
    %v2092 = vpop.permute.xlu0 %2091
    %2093 = vrot.lane.b32.xlu0 %v1778, 124
    %v2094 = vpop.permute.xlu0 %2093
    %2095 = vrot.lane.b32.xlu0 %v1779, 124
    %v2096 = vpop.permute.xlu0 %2095
    %2097 = vrot.lane.b32.xlu0 %v1780, 124
    %v2098 = vpop.permute.xlu0 %2097
    %2099 = vrot.lane.b32.xlu0 %v1781, 124
    %v2100 = vpop.permute.xlu0 %2099
    %2101 = vrot.lane.b32.xlu0 %v1782, 124
    %v2102 = vpop.permute.xlu0 %2101
    %2111 = vxpose.xlu0.b32.start [1/16] %v2088, 128
    %2112 = vxpose.xlu0.b32.cont [2/16] %v2090, 128
    %2113 = vxpose.xlu0.b32.cont [3/16] %v2092, 128
    %2114 = vxpose.xlu0.b32.cont [4/16] %v2094, 128
    %2115 = vxpose.xlu0.b32.cont [5/16] %v2096, 128
    %2116 = vxpose.xlu0.b32.cont [6/16] %v2098, 128
    %2117 = vxpose.xlu0.b32.cont [7/16] %v2100, 128
    %2118 = vxpose.xlu0.b32.cont [8/16] %v2102, 128
    %2119 = vxpose.xlu0.b32.cont [9/16] 0.0, 128
    %2120 = vxpose.xlu0.b32.cont [10/16] 0.0, 128
    %2121 = vxpose.xlu0.b32.cont [11/16] 0.0, 128
    %2122 = vxpose.xlu0.b32.cont [12/16] 0.0, 128
    %2123 = vxpose.xlu0.b32.cont [13/16] 0.0, 128
    %2124 = vxpose.xlu0.b32.cont [14/16] 0.0, 128
    %2125 = vxpose.xlu0.b32.cont [15/16] 0.0, 128
    %2126 = vxpose.xlu0.b32.end [16/16] 0.0, 128
    %v2127 = vpop.trf.xlu0
    %v2128 = vpop.trf.xlu0
    %v2129 = vpop.trf.xlu0
    %v2130 = vpop.trf.xlu0
    %v2131 = vpop.trf.xlu0
    %v2132 = vpop.trf.xlu0
    %v2133 = vpop.trf.xlu0
    %v2134 = vpop.trf.xlu0
    %v2135 = vpop.trf.xlu0
    %v2136 = vpop.trf.xlu0
    %v2137 = vpop.trf.xlu0
    %v2138 = vpop.trf.xlu0
    %v2139 = vpop.trf.xlu0
    %v2140 = vpop.trf.xlu0
    %v2141 = vpop.trf.xlu0
    %v2142 = vpop.trf.xlu0
    %v2144 = vsel %vm2005, %v2127, 0
    %2146 = vmatprep.subr.mxu0 0.0
    %2147 = vmatpush1.msra.mxu0 %v1054
    %2148 = vmatprep.subr.mxu0 0.0
    %2149 = vmatpush1.msra.mxu0 %v1055
    %2150 = vmatprep.subr.mxu0 0.0
    %2151 = vmatpush1.msra.mxu0 %v1056
    %2152 = vmatprep.subr.mxu0 0.0
    %2153 = vmatpush1.msra.mxu0 %v1057
    %2154 = vmatprep.subr.mxu0 0.0
    %2155 = vmatpush1.msra.mxu0 %v1058
    %2156 = vmatprep.subr.mxu0 0.0
    %2157 = vmatpush1.msra.mxu0 %v1059
    %2158 = vmatprep.subr.mxu0 0.0
    %2159 = vmatpush1.msra.mxu0 %v1060
    %2160 = vmatprep.subr.mxu0 0.0
    %2161 = vmatpush1.msra.mxu0 %v1061
    %2162 = vmatprep.subr.mxu0 0.0
    %2163 = vmatpush1.msra.mxu0 0.0
    %2164 = vmatprep.subr.mxu0 0.0
    %2165 = vmatpush1.msra.mxu0 0.0
    %2166 = vmatprep.subr.mxu0 0.0
    %2167 = vmatpush1.msra.mxu0 0.0
    %2168 = vmatprep.subr.mxu0 0.0
    %2169 = vmatpush1.msra.mxu0 0.0
    %2170 = vmatprep.subr.mxu0 0.0
    %2171 = vmatpush1.msra.mxu0 0.0
    %2172 = vmatprep.subr.mxu0 0.0
    %2173 = vmatpush1.msra.mxu0 0.0
    %2174 = vmatprep.subr.mxu0 0.0
    %2175 = vmatpush1.msra.mxu0 0.0
    %2176 = vmatprep.subr.mxu0 0.0
    %2177 = vmatpush1.msra.mxu0 0.0
    %2178 = vmatprep.subr.mxu0 0.0
    %2179 = vmatpush1.msra.mxu0 0.0
    %2180 = vmatprep.subr.mxu0 0.0
    %2181 = vmatpush1.msra.mxu0 0.0
    %2182 = vmatprep.subr.mxu0 0.0
    %2183 = vmatpush1.msra.mxu0 0.0
    %2184 = vmatprep.subr.mxu0 0.0
    %2185 = vmatpush1.msra.mxu0 0.0
    %2186 = vmatprep.subr.mxu0 0.0
    %2187 = vmatpush1.msra.mxu0 0.0
    %2188 = vmatprep.subr.mxu0 0.0
    %2189 = vmatpush1.msra.mxu0 0.0
    %2190 = vmatprep.subr.mxu0 0.0
    %2191 = vmatpush1.msra.mxu0 0.0
    %2192 = vmatprep.subr.mxu0 0.0
    %2193 = vmatpush1.msra.mxu0 0.0
    %2194 = vmatprep.subr.mxu0 0.0
    %2195 = vmatpush1.msra.mxu0 0.0
    %2196 = vmatprep.subr.mxu0 0.0
    %2197 = vmatpush1.msra.mxu0 0.0
    %2198 = vmatprep.subr.mxu0 0.0
    %2199 = vmatpush1.msra.mxu0 0.0
    %2200 = vmatprep.subr.mxu0 0.0
    %2201 = vmatpush1.msra.mxu0 0.0
    %2202 = vmatprep.subr.mxu0 0.0
    %2203 = vmatpush1.msra.mxu0 0.0
    %2204 = vmatprep.subr.mxu0 0.0
    %2205 = vmatpush1.msra.mxu0 0.0
    %2206 = vmatprep.subr.mxu0 0.0
    %2207 = vmatpush1.msra.mxu0 0.0
    %2208 = vmatprep.subr.mxu0 0.0
    %2209 = vmatpush1.msra.mxu0 0.0
    %2210 = vmatprep.mubr.f32.mxu0 0.0
    %2211 = vmatmul.mubr.f32.gmra.mrb[0].mxu0 %v2144
    %v2212 = vpop.f32.mrb[0].mxu0
    %v2213 = vadd.f32 0.0, %v2212
    %v2214 = vpop.f32.mrb[0].mxu0
    %2215 = vdwg.mxu0
    %2224 = vrot.lane.b32.xlu0 %v1783, 124
    %v2225 = vpop.permute.xlu0 %2224
    %2226 = vrot.lane.b32.xlu0 %v1784, 124
    %v2227 = vpop.permute.xlu0 %2226
    %2228 = vrot.lane.b32.xlu0 %v1785, 124
    %v2229 = vpop.permute.xlu0 %2228
    %2230 = vrot.lane.b32.xlu0 %v1786, 124
    %v2231 = vpop.permute.xlu0 %2230
    %2232 = vrot.lane.b32.xlu0 %v1787, 124
    %v2233 = vpop.permute.xlu0 %2232
    %2234 = vrot.lane.b32.xlu0 %v1788, 124
    %v2235 = vpop.permute.xlu0 %2234
    %2236 = vrot.lane.b32.xlu0 %v1789, 124
    %v2237 = vpop.permute.xlu0 %2236
    %2238 = vrot.lane.b32.xlu0 %v1790, 124
    %v2239 = vpop.permute.xlu0 %2238
    %2248 = vxpose.xlu0.b32.start [1/16] %v2225, 128
    %2249 = vxpose.xlu0.b32.cont [2/16] %v2227, 128
    %2250 = vxpose.xlu0.b32.cont [3/16] %v2229, 128
    %2251 = vxpose.xlu0.b32.cont [4/16] %v2231, 128
    %2252 = vxpose.xlu0.b32.cont [5/16] %v2233, 128
    %2253 = vxpose.xlu0.b32.cont [6/16] %v2235, 128
    %2254 = vxpose.xlu0.b32.cont [7/16] %v2237, 128
    %2255 = vxpose.xlu0.b32.cont [8/16] %v2239, 128
    %2256 = vxpose.xlu0.b32.cont [9/16] 0.0, 128
    %2257 = vxpose.xlu0.b32.cont [10/16] 0.0, 128
    %2258 = vxpose.xlu0.b32.cont [11/16] 0.0, 128
    %2259 = vxpose.xlu0.b32.cont [12/16] 0.0, 128
    %2260 = vxpose.xlu0.b32.cont [13/16] 0.0, 128
    %2261 = vxpose.xlu0.b32.cont [14/16] 0.0, 128
    %2262 = vxpose.xlu0.b32.cont [15/16] 0.0, 128
    %2263 = vxpose.xlu0.b32.end [16/16] 0.0, 128
    %v2264 = vpop.trf.xlu0
    %v2265 = vpop.trf.xlu0
    %v2266 = vpop.trf.xlu0
    %v2267 = vpop.trf.xlu0
    %v2268 = vpop.trf.xlu0
    %v2269 = vpop.trf.xlu0
    %v2270 = vpop.trf.xlu0
    %v2271 = vpop.trf.xlu0
    %v2272 = vpop.trf.xlu0
    %v2273 = vpop.trf.xlu0
    %v2274 = vpop.trf.xlu0
    %v2275 = vpop.trf.xlu0
    %v2276 = vpop.trf.xlu0
    %v2277 = vpop.trf.xlu0
    %v2278 = vpop.trf.xlu0
    %v2279 = vpop.trf.xlu0
    %v2281 = vsel %vm2005, %v2264, 0
    %2283 = vmatprep.subr.mxu0 0.0
    %2284 = vmatpush1.msra.mxu0 %v1062
    %2285 = vmatprep.subr.mxu0 0.0
    %2286 = vmatpush1.msra.mxu0 %v1063
    %2287 = vmatprep.subr.mxu0 0.0
    %2288 = vmatpush1.msra.mxu0 %v1064
    %2289 = vmatprep.subr.mxu0 0.0
    %2290 = vmatpush1.msra.mxu0 %v1065
    %2291 = vmatprep.subr.mxu0 0.0
    %2292 = vmatpush1.msra.mxu0 %v1066
    %2293 = vmatprep.subr.mxu0 0.0
    %2294 = vmatpush1.msra.mxu0 %v1067
    %2295 = vmatprep.subr.mxu0 0.0
    %2296 = vmatpush1.msra.mxu0 %v1068
    %2297 = vmatprep.subr.mxu0 0.0
    %2298 = vmatpush1.msra.mxu0 %v1069
    %2299 = vmatprep.subr.mxu0 0.0
    %2300 = vmatpush1.msra.mxu0 0.0
    %2301 = vmatprep.subr.mxu0 0.0
    %2302 = vmatpush1.msra.mxu0 0.0
    %2303 = vmatprep.subr.mxu0 0.0
    %2304 = vmatpush1.msra.mxu0 0.0
    %2305 = vmatprep.subr.mxu0 0.0
    %2306 = vmatpush1.msra.mxu0 0.0
    %2307 = vmatprep.subr.mxu0 0.0
    %2308 = vmatpush1.msra.mxu0 0.0
    %2309 = vmatprep.subr.mxu0 0.0
    %2310 = vmatpush1.msra.mxu0 0.0
    %2311 = vmatprep.subr.mxu0 0.0
    %2312 = vmatpush1.msra.mxu0 0.0
    %2313 = vmatprep.subr.mxu0 0.0
    %2314 = vmatpush1.msra.mxu0 0.0
    %2315 = vmatprep.subr.mxu0 0.0
    %2316 = vmatpush1.msra.mxu0 0.0
    %2317 = vmatprep.subr.mxu0 0.0
    %2318 = vmatpush1.msra.mxu0 0.0
    %2319 = vmatprep.subr.mxu0 0.0
    %2320 = vmatpush1.msra.mxu0 0.0
    %2321 = vmatprep.subr.mxu0 0.0
    %2322 = vmatpush1.msra.mxu0 0.0
    %2323 = vmatprep.subr.mxu0 0.0
    %2324 = vmatpush1.msra.mxu0 0.0
    %2325 = vmatprep.subr.mxu0 0.0
    %2326 = vmatpush1.msra.mxu0 0.0
    %2327 = vmatprep.subr.mxu0 0.0
    %2328 = vmatpush1.msra.mxu0 0.0
    %2329 = vmatprep.subr.mxu0 0.0
    %2330 = vmatpush1.msra.mxu0 0.0
    %2331 = vmatprep.subr.mxu0 0.0
    %2332 = vmatpush1.msra.mxu0 0.0
    %2333 = vmatprep.subr.mxu0 0.0
    %2334 = vmatpush1.msra.mxu0 0.0
    %2335 = vmatprep.subr.mxu0 0.0
    %2336 = vmatpush1.msra.mxu0 0.0
    %2337 = vmatprep.subr.mxu0 0.0
    %2338 = vmatpush1.msra.mxu0 0.0
    %2339 = vmatprep.subr.mxu0 0.0
    %2340 = vmatpush1.msra.mxu0 0.0
    %2341 = vmatprep.subr.mxu0 0.0
    %2342 = vmatpush1.msra.mxu0 0.0
    %2343 = vmatprep.subr.mxu0 0.0
    %2344 = vmatpush1.msra.mxu0 0.0
    %2345 = vmatprep.subr.mxu0 0.0
    %2346 = vmatpush1.msra.mxu0 0.0
    %2347 = vmatprep.mubr.f32.mxu0 0.0
    %2348 = vmatmul.mubr.f32.gmra.mrb[0].mxu0 %v2281
    %v2349 = vpop.f32.mrb[0].mxu0
    %v2350 = vadd.f32 0.0, %v2349
    %v2351 = vpop.f32.mrb[0].mxu0
    %2352 = vdwg.mxu0
    %2361 = vrot.lane.b32.xlu0 %v1791, 124
    %v2362 = vpop.permute.xlu0 %2361
    %2363 = vrot.lane.b32.xlu0 %v1792, 124
    %v2364 = vpop.permute.xlu0 %2363
    %2365 = vrot.lane.b32.xlu0 %v1793, 124
    %v2366 = vpop.permute.xlu0 %2365
    %2367 = vrot.lane.b32.xlu0 %v1794, 124
    %v2368 = vpop.permute.xlu0 %2367
    %2369 = vrot.lane.b32.xlu0 %v1795, 124
    %v2370 = vpop.permute.xlu0 %2369
    %2371 = vrot.lane.b32.xlu0 %v1796, 124
    %v2372 = vpop.permute.xlu0 %2371
    %2373 = vrot.lane.b32.xlu0 %v1797, 124
    %v2374 = vpop.permute.xlu0 %2373
    %2375 = vrot.lane.b32.xlu0 %v1798, 124
    %v2376 = vpop.permute.xlu0 %2375
    %2385 = vxpose.xlu0.b32.start [1/16] %v2362, 128
    %2386 = vxpose.xlu0.b32.cont [2/16] %v2364, 128
    %2387 = vxpose.xlu0.b32.cont [3/16] %v2366, 128
    %2388 = vxpose.xlu0.b32.cont [4/16] %v2368, 128
    %2389 = vxpose.xlu0.b32.cont [5/16] %v2370, 128
    %2390 = vxpose.xlu0.b32.cont [6/16] %v2372, 128
    %2391 = vxpose.xlu0.b32.cont [7/16] %v2374, 128
    %2392 = vxpose.xlu0.b32.cont [8/16] %v2376, 128
    %2393 = vxpose.xlu0.b32.cont [9/16] 0.0, 128
    %2394 = vxpose.xlu0.b32.cont [10/16] 0.0, 128
    %2395 = vxpose.xlu0.b32.cont [11/16] 0.0, 128
    %2396 = vxpose.xlu0.b32.cont [12/16] 0.0, 128
    %2397 = vxpose.xlu0.b32.cont [13/16] 0.0, 128
    %2398 = vxpose.xlu0.b32.cont [14/16] 0.0, 128
    %2399 = vxpose.xlu0.b32.cont [15/16] 0.0, 128
    %2400 = vxpose.xlu0.b32.end [16/16] 0.0, 128
    %v2401 = vpop.trf.xlu0
    %v2402 = vpop.trf.xlu0
    %v2403 = vpop.trf.xlu0
    %v2404 = vpop.trf.xlu0
    %v2405 = vpop.trf.xlu0
    %v2406 = vpop.trf.xlu0
    %v2407 = vpop.trf.xlu0
    %v2408 = vpop.trf.xlu0
    %v2409 = vpop.trf.xlu0
    %v2410 = vpop.trf.xlu0
    %v2411 = vpop.trf.xlu0
    %v2412 = vpop.trf.xlu0
    %v2413 = vpop.trf.xlu0
    %v2414 = vpop.trf.xlu0
    %v2415 = vpop.trf.xlu0
    %v2416 = vpop.trf.xlu0
    %v2418 = vsel %vm2005, %v2401, 0
    %2420 = vmatprep.subr.mxu0 0.0
    %2421 = vmatpush1.msra.mxu0 %v1070
    %2422 = vmatprep.subr.mxu0 0.0
    %2423 = vmatpush1.msra.mxu0 %v1071
    %2424 = vmatprep.subr.mxu0 0.0
    %2425 = vmatpush1.msra.mxu0 %v1072
    %2426 = vmatprep.subr.mxu0 0.0
    %2427 = vmatpush1.msra.mxu0 %v1073
    %2428 = vmatprep.subr.mxu0 0.0
    %2429 = vmatpush1.msra.mxu0 %v1074
    %2430 = vmatprep.subr.mxu0 0.0
    %2431 = vmatpush1.msra.mxu0 %v1075
    %2432 = vmatprep.subr.mxu0 0.0
    %2433 = vmatpush1.msra.mxu0 %v1076
    %2434 = vmatprep.subr.mxu0 0.0
    %2435 = vmatpush1.msra.mxu0 %v1077
    %2436 = vmatprep.subr.mxu0 0.0
    %2437 = vmatpush1.msra.mxu0 0.0
    %2438 = vmatprep.subr.mxu0 0.0
    %2439 = vmatpush1.msra.mxu0 0.0
    %2440 = vmatprep.subr.mxu0 0.0
    %2441 = vmatpush1.msra.mxu0 0.0
    %2442 = vmatprep.subr.mxu0 0.0
    %2443 = vmatpush1.msra.mxu0 0.0
    %2444 = vmatprep.subr.mxu0 0.0
    %2445 = vmatpush1.msra.mxu0 0.0
    %2446 = vmatprep.subr.mxu0 0.0
    %2447 = vmatpush1.msra.mxu0 0.0
    %2448 = vmatprep.subr.mxu0 0.0
    %2449 = vmatpush1.msra.mxu0 0.0
    %2450 = vmatprep.subr.mxu0 0.0
    %2451 = vmatpush1.msra.mxu0 0.0
    %2452 = vmatprep.subr.mxu0 0.0
    %2453 = vmatpush1.msra.mxu0 0.0
    %2454 = vmatprep.subr.mxu0 0.0
    %2455 = vmatpush1.msra.mxu0 0.0
    %2456 = vmatprep.subr.mxu0 0.0
    %2457 = vmatpush1.msra.mxu0 0.0
    %2458 = vmatprep.subr.mxu0 0.0
    %2459 = vmatpush1.msra.mxu0 0.0
    %2460 = vmatprep.subr.mxu0 0.0
    %2461 = vmatpush1.msra.mxu0 0.0
    %2462 = vmatprep.subr.mxu0 0.0
    %2463 = vmatpush1.msra.mxu0 0.0
    %2464 = vmatprep.subr.mxu0 0.0
    %2465 = vmatpush1.msra.mxu0 0.0
    %2466 = vmatprep.subr.mxu0 0.0
    %2467 = vmatpush1.msra.mxu0 0.0
    %2468 = vmatprep.subr.mxu0 0.0
    %2469 = vmatpush1.msra.mxu0 0.0
    %2470 = vmatprep.subr.mxu0 0.0
    %2471 = vmatpush1.msra.mxu0 0.0
    %2472 = vmatprep.subr.mxu0 0.0
    %2473 = vmatpush1.msra.mxu0 0.0
    %2474 = vmatprep.subr.mxu0 0.0
    %2475 = vmatpush1.msra.mxu0 0.0
    %2476 = vmatprep.subr.mxu0 0.0
    %2477 = vmatpush1.msra.mxu0 0.0
    %2478 = vmatprep.subr.mxu0 0.0
    %2479 = vmatpush1.msra.mxu0 0.0
    %2480 = vmatprep.subr.mxu0 0.0
    %2481 = vmatpush1.msra.mxu0 0.0
    %2482 = vmatprep.subr.mxu0 0.0
    %2483 = vmatpush1.msra.mxu0 0.0
    %2484 = vmatprep.mubr.f32.mxu0 0.0
    %2485 = vmatmul.mubr.f32.gmra.mrb[0].mxu0 %v2418
    %v2486 = vpop.f32.mrb[0].mxu0
    %v2487 = vadd.f32 0.0, %v2486
    %v2488 = vpop.f32.mrb[0].mxu0
    %2489 = vdwg.mxu0
    %2498 = vrot.lane.b32.xlu0 %v1799, 124
    %v2499 = vpop.permute.xlu0 %2498
    %2500 = vrot.lane.b32.xlu0 %v1800, 124
    %v2501 = vpop.permute.xlu0 %2500
    %2502 = vrot.lane.b32.xlu0 %v1801, 124
    %v2503 = vpop.permute.xlu0 %2502
    %2504 = vrot.lane.b32.xlu0 %v1802, 124
    %v2505 = vpop.permute.xlu0 %2504
    %2506 = vrot.lane.b32.xlu0 %v1803, 124
    %v2507 = vpop.permute.xlu0 %2506
    %2508 = vrot.lane.b32.xlu0 %v1804, 124
    %v2509 = vpop.permute.xlu0 %2508
    %2510 = vrot.lane.b32.xlu0 %v1805, 124
    %v2511 = vpop.permute.xlu0 %2510
    %2512 = vrot.lane.b32.xlu0 %v1806, 124
    %v2513 = vpop.permute.xlu0 %2512
    %2522 = vxpose.xlu0.b32.start [1/16] %v2499, 128
    %2523 = vxpose.xlu0.b32.cont [2/16] %v2501, 128
    %2524 = vxpose.xlu0.b32.cont [3/16] %v2503, 128
    %2525 = vxpose.xlu0.b32.cont [4/16] %v2505, 128
    %2526 = vxpose.xlu0.b32.cont [5/16] %v2507, 128
    %2527 = vxpose.xlu0.b32.cont [6/16] %v2509, 128
    %2528 = vxpose.xlu0.b32.cont [7/16] %v2511, 128
    %2529 = vxpose.xlu0.b32.cont [8/16] %v2513, 128
    %2530 = vxpose.xlu0.b32.cont [9/16] 0.0, 128
    %2531 = vxpose.xlu0.b32.cont [10/16] 0.0, 128
    %2532 = vxpose.xlu0.b32.cont [11/16] 0.0, 128
    %2533 = vxpose.xlu0.b32.cont [12/16] 0.0, 128
    %2534 = vxpose.xlu0.b32.cont [13/16] 0.0, 128
    %2535 = vxpose.xlu0.b32.cont [14/16] 0.0, 128
    %2536 = vxpose.xlu0.b32.cont [15/16] 0.0, 128
    %2537 = vxpose.xlu0.b32.end [16/16] 0.0, 128
    %v2538 = vpop.trf.xlu0
    %v2539 = vpop.trf.xlu0
    %v2540 = vpop.trf.xlu0
    %v2541 = vpop.trf.xlu0
    %v2542 = vpop.trf.xlu0
    %v2543 = vpop.trf.xlu0
    %v2544 = vpop.trf.xlu0
    %v2545 = vpop.trf.xlu0
    %v2546 = vpop.trf.xlu0
    %v2547 = vpop.trf.xlu0
    %v2548 = vpop.trf.xlu0
    %v2549 = vpop.trf.xlu0
    %v2550 = vpop.trf.xlu0
    %v2551 = vpop.trf.xlu0
    %v2552 = vpop.trf.xlu0
    %v2553 = vpop.trf.xlu0
    %v2555 = vsel %vm2005, %v2538, 0
    %2557 = vmatprep.subr.mxu0 0.0
    %2558 = vmatpush1.msra.mxu0 %v1078
    %2559 = vmatprep.subr.mxu0 0.0
    %2560 = vmatpush1.msra.mxu0 %v1079
    %2561 = vmatprep.subr.mxu0 0.0
    %2562 = vmatpush1.msra.mxu0 %v1080
    %2563 = vmatprep.subr.mxu0 0.0
    %2564 = vmatpush1.msra.mxu0 %v1081
    %2565 = vmatprep.subr.mxu0 0.0
    %2566 = vmatpush1.msra.mxu0 %v1082
    %2567 = vmatprep.subr.mxu0 0.0
    %2568 = vmatpush1.msra.mxu0 %v1083
    %2569 = vmatprep.subr.mxu0 0.0
    %2570 = vmatpush1.msra.mxu0 %v1084
    %2571 = vmatprep.subr.mxu0 0.0
    %2572 = vmatpush1.msra.mxu0 %v1085
    %2573 = vmatprep.subr.mxu0 0.0
    %2574 = vmatpush1.msra.mxu0 0.0
    %2575 = vmatprep.subr.mxu0 0.0
    %2576 = vmatpush1.msra.mxu0 0.0
    %2577 = vmatprep.subr.mxu0 0.0
    %2578 = vmatpush1.msra.mxu0 0.0
    %2579 = vmatprep.subr.mxu0 0.0
    %2580 = vmatpush1.msra.mxu0 0.0
    %2581 = vmatprep.subr.mxu0 0.0
    %2582 = vmatpush1.msra.mxu0 0.0
    %2583 = vmatprep.subr.mxu0 0.0
    %2584 = vmatpush1.msra.mxu0 0.0
    %2585 = vmatprep.subr.mxu0 0.0
    %2586 = vmatpush1.msra.mxu0 0.0
    %2587 = vmatprep.subr.mxu0 0.0
    %2588 = vmatpush1.msra.mxu0 0.0
    %2589 = vmatprep.subr.mxu0 0.0
    %2590 = vmatpush1.msra.mxu0 0.0
    %2591 = vmatprep.subr.mxu0 0.0
    %2592 = vmatpush1.msra.mxu0 0.0
    %2593 = vmatprep.subr.mxu0 0.0
    %2594 = vmatpush1.msra.mxu0 0.0
    %2595 = vmatprep.subr.mxu0 0.0
    %2596 = vmatpush1.msra.mxu0 0.0
    %2597 = vmatprep.subr.mxu0 0.0
    %2598 = vmatpush1.msra.mxu0 0.0
    %2599 = vmatprep.subr.mxu0 0.0
    %2600 = vmatpush1.msra.mxu0 0.0
    %2601 = vmatprep.subr.mxu0 0.0
    %2602 = vmatpush1.msra.mxu0 0.0
    %2603 = vmatprep.subr.mxu0 0.0
    %2604 = vmatpush1.msra.mxu0 0.0
    %2605 = vmatprep.subr.mxu0 0.0
    %2606 = vmatpush1.msra.mxu0 0.0
    %2607 = vmatprep.subr.mxu0 0.0
    %2608 = vmatpush1.msra.mxu0 0.0
    %2609 = vmatprep.subr.mxu0 0.0
    %2610 = vmatpush1.msra.mxu0 0.0
    %2611 = vmatprep.subr.mxu0 0.0
    %2612 = vmatpush1.msra.mxu0 0.0
    %2613 = vmatprep.subr.mxu0 0.0
    %2614 = vmatpush1.msra.mxu0 0.0
    %2615 = vmatprep.subr.mxu0 0.0
    %2616 = vmatpush1.msra.mxu0 0.0
    %2617 = vmatprep.subr.mxu0 0.0
    %2618 = vmatpush1.msra.mxu0 0.0
    %2619 = vmatprep.subr.mxu0 0.0
    %2620 = vmatpush1.msra.mxu0 0.0
    %2621 = vmatprep.mubr.f32.mxu0 0.0
    %2622 = vmatmul.mubr.f32.gmra.mrb[0].mxu0 %v2555
    %v2623 = vpop.f32.mrb[0].mxu0
    %v2624 = vadd.f32 0.0, %v2623
    %v2625 = vpop.f32.mrb[0].mxu0
    %2626 = vdwg.mxu0
    %2635 = vrot.lane.b32.xlu0 %v1807, 124
    %v2636 = vpop.permute.xlu0 %2635
    %2637 = vrot.lane.b32.xlu0 %v1808, 124
    %v2638 = vpop.permute.xlu0 %2637
    %2639 = vrot.lane.b32.xlu0 %v1809, 124
    %v2640 = vpop.permute.xlu0 %2639
    %2641 = vrot.lane.b32.xlu0 %v1810, 124
    %v2642 = vpop.permute.xlu0 %2641
    %2643 = vrot.lane.b32.xlu0 %v1811, 124
    %v2644 = vpop.permute.xlu0 %2643
    %2645 = vrot.lane.b32.xlu0 %v1812, 124
    %v2646 = vpop.permute.xlu0 %2645
    %2647 = vrot.lane.b32.xlu0 %v1813, 124
    %v2648 = vpop.permute.xlu0 %2647
    %2649 = vrot.lane.b32.xlu0 %v1814, 124
    %v2650 = vpop.permute.xlu0 %2649
    %2659 = vxpose.xlu0.b32.start [1/16] %v2636, 128
    %2660 = vxpose.xlu0.b32.cont [2/16] %v2638, 128
    %2661 = vxpose.xlu0.b32.cont [3/16] %v2640, 128
    %2662 = vxpose.xlu0.b32.cont [4/16] %v2642, 128
    %2663 = vxpose.xlu0.b32.cont [5/16] %v2644, 128
    %2664 = vxpose.xlu0.b32.cont [6/16] %v2646, 128
    %2665 = vxpose.xlu0.b32.cont [7/16] %v2648, 128
    %2666 = vxpose.xlu0.b32.cont [8/16] %v2650, 128
    %2667 = vxpose.xlu0.b32.cont [9/16] 0.0, 128
    %2668 = vxpose.xlu0.b32.cont [10/16] 0.0, 128
    %2669 = vxpose.xlu0.b32.cont [11/16] 0.0, 128
    %2670 = vxpose.xlu0.b32.cont [12/16] 0.0, 128
    %2671 = vxpose.xlu0.b32.cont [13/16] 0.0, 128
    %2672 = vxpose.xlu0.b32.cont [14/16] 0.0, 128
    %2673 = vxpose.xlu0.b32.cont [15/16] 0.0, 128
    %2674 = vxpose.xlu0.b32.end [16/16] 0.0, 128
    %v2675 = vpop.trf.xlu0
    %v2676 = vpop.trf.xlu0
    %v2677 = vpop.trf.xlu0
    %v2678 = vpop.trf.xlu0
    %v2679 = vpop.trf.xlu0
    %v2680 = vpop.trf.xlu0
    %v2681 = vpop.trf.xlu0
    %v2682 = vpop.trf.xlu0
    %v2683 = vpop.trf.xlu0
    %v2684 = vpop.trf.xlu0
    %v2685 = vpop.trf.xlu0
    %v2686 = vpop.trf.xlu0
    %v2687 = vpop.trf.xlu0
    %v2688 = vpop.trf.xlu0
    %v2689 = vpop.trf.xlu0
    %v2690 = vpop.trf.xlu0
    %v2692 = vsel %vm2005, %v2675, 0
    %2694 = vmatprep.subr.mxu0 0.0
    %2695 = vmatpush1.msra.mxu0 %v1086
    %2696 = vmatprep.subr.mxu0 0.0
    %2697 = vmatpush1.msra.mxu0 %v1087
    %2698 = vmatprep.subr.mxu0 0.0
    %2699 = vmatpush1.msra.mxu0 %v1088
    %2700 = vmatprep.subr.mxu0 0.0
    %2701 = vmatpush1.msra.mxu0 %v1089
    %2702 = vmatprep.subr.mxu0 0.0
    %2703 = vmatpush1.msra.mxu0 %v1090
    %2704 = vmatprep.subr.mxu0 0.0
    %2705 = vmatpush1.msra.mxu0 %v1091
    %2706 = vmatprep.subr.mxu0 0.0
    %2707 = vmatpush1.msra.mxu0 %v1092
    %2708 = vmatprep.subr.mxu0 0.0
    %2709 = vmatpush1.msra.mxu0 %v1093
    %2710 = vmatprep.subr.mxu0 0.0
    %2711 = vmatpush1.msra.mxu0 0.0
    %2712 = vmatprep.subr.mxu0 0.0
    %2713 = vmatpush1.msra.mxu0 0.0
    %2714 = vmatprep.subr.mxu0 0.0
    %2715 = vmatpush1.msra.mxu0 0.0
    %2716 = vmatprep.subr.mxu0 0.0
    %2717 = vmatpush1.msra.mxu0 0.0
    %2718 = vmatprep.subr.mxu0 0.0
    %2719 = vmatpush1.msra.mxu0 0.0
    %2720 = vmatprep.subr.mxu0 0.0
    %2721 = vmatpush1.msra.mxu0 0.0
    %2722 = vmatprep.subr.mxu0 0.0
    %2723 = vmatpush1.msra.mxu0 0.0
    %2724 = vmatprep.subr.mxu0 0.0
    %2725 = vmatpush1.msra.mxu0 0.0
    %2726 = vmatprep.subr.mxu0 0.0
    %2727 = vmatpush1.msra.mxu0 0.0
    %2728 = vmatprep.subr.mxu0 0.0
    %2729 = vmatpush1.msra.mxu0 0.0
    %2730 = vmatprep.subr.mxu0 0.0
    %2731 = vmatpush1.msra.mxu0 0.0
    %2732 = vmatprep.subr.mxu0 0.0
    %2733 = vmatpush1.msra.mxu0 0.0
    %2734 = vmatprep.subr.mxu0 0.0
    %2735 = vmatpush1.msra.mxu0 0.0
    %2736 = vmatprep.subr.mxu0 0.0
    %2737 = vmatpush1.msra.mxu0 0.0
    %2738 = vmatprep.subr.mxu0 0.0
    %2739 = vmatpush1.msra.mxu0 0.0
    %2740 = vmatprep.subr.mxu0 0.0
    %2741 = vmatpush1.msra.mxu0 0.0
    %2742 = vmatprep.subr.mxu0 0.0
    %2743 = vmatpush1.msra.mxu0 0.0
    %2744 = vmatprep.subr.mxu0 0.0
    %2745 = vmatpush1.msra.mxu0 0.0
    %2746 = vmatprep.subr.mxu0 0.0
    %2747 = vmatpush1.msra.mxu0 0.0
    %2748 = vmatprep.subr.mxu0 0.0
    %2749 = vmatpush1.msra.mxu0 0.0
    %2750 = vmatprep.subr.mxu0 0.0
    %2751 = vmatpush1.msra.mxu0 0.0
    %2752 = vmatprep.subr.mxu0 0.0
    %2753 = vmatpush1.msra.mxu0 0.0
    %2754 = vmatprep.subr.mxu0 0.0
    %2755 = vmatpush1.msra.mxu0 0.0
    %2756 = vmatprep.subr.mxu0 0.0
    %2757 = vmatpush1.msra.mxu0 0.0
    %2758 = vmatprep.mubr.f32.mxu0 0.0
    %2759 = vmatmul.mubr.f32.gmra.mrb[0].mxu0 %v2692
    %v2760 = vpop.f32.mrb[0].mxu0
    %v2761 = vadd.f32 0.0, %v2760
    %v2762 = vpop.f32.mrb[0].mxu0
    %2763 = vdwg.mxu0
    %v2764 = vmul.f32 %v1046, %v1046
    %v2765 = vmul.f32 %v1047, %v1047
    %v2766 = vmul.f32 %v1048, %v1048
    %v2767 = vmul.f32 %v1049, %v1049
    %v2768 = vmul.f32 %v1050, %v1050
    %v2769 = vmul.f32 %v1051, %v1051
    %v2770 = vmul.f32 %v1052, %v1052
    %v2771 = vmul.f32 %v1053, %v1053
    %v2772 = vmul.f32 %v1054, %v1054
    %v2773 = vmul.f32 %v1055, %v1055
    %v2774 = vmul.f32 %v1056, %v1056
    %v2775 = vmul.f32 %v1057, %v1057
    %v2776 = vmul.f32 %v1058, %v1058
    %v2777 = vmul.f32 %v1059, %v1059
    %v2778 = vmul.f32 %v1060, %v1060
    %v2779 = vmul.f32 %v1061, %v1061
    %v2780 = vmul.f32 %v1062, %v1062
    %v2781 = vmul.f32 %v1063, %v1063
    %v2782 = vmul.f32 %v1064, %v1064
    %v2783 = vmul.f32 %v1065, %v1065
    %v2784 = vmul.f32 %v1066, %v1066
    %v2785 = vmul.f32 %v1067, %v1067
    %v2786 = vmul.f32 %v1068, %v1068
    %v2787 = vmul.f32 %v1069, %v1069
    %v2788 = vmul.f32 %v1070, %v1070
    %v2789 = vmul.f32 %v1071, %v1071
    %v2790 = vmul.f32 %v1072, %v1072
    %v2791 = vmul.f32 %v1073, %v1073
    %v2792 = vmul.f32 %v1074, %v1074
    %v2793 = vmul.f32 %v1075, %v1075
    %v2794 = vmul.f32 %v1076, %v1076
    %v2795 = vmul.f32 %v1077, %v1077
    %v2796 = vmul.f32 %v1078, %v1078
    %v2797 = vmul.f32 %v1079, %v1079
    %v2798 = vmul.f32 %v1080, %v1080
    %v2799 = vmul.f32 %v1081, %v1081
    %v2800 = vmul.f32 %v1082, %v1082
    %v2801 = vmul.f32 %v1083, %v1083
    %v2802 = vmul.f32 %v1084, %v1084
    %v2803 = vmul.f32 %v1085, %v1085
    %v2804 = vmul.f32 %v1086, %v1086
    %v2805 = vmul.f32 %v1087, %v1087
    %v2806 = vmul.f32 %v1088, %v1088
    %v2807 = vmul.f32 %v1089, %v1089
    %v2808 = vmul.f32 %v1090, %v1090
    %v2809 = vmul.f32 %v1091, %v1091
    %v2810 = vmul.f32 %v1092, %v1092
    %v2811 = vmul.f32 %v1093, %v1093
    %2812 = vmatprep.subr.mxu0 0.0
    %2813 = vmatpush1.msra.mxu0 %v2764
    %2814 = vmatprep.subr.mxu0 0.0
    %2815 = vmatpush1.msra.mxu0 %v2765
    %2816 = vmatprep.subr.mxu0 0.0
    %2817 = vmatpush1.msra.mxu0 %v2766
    %2818 = vmatprep.subr.mxu0 0.0
    %2819 = vmatpush1.msra.mxu0 %v2767
    %2820 = vmatprep.subr.mxu0 0.0
    %2821 = vmatpush1.msra.mxu0 %v2768
    %2822 = vmatprep.subr.mxu0 0.0
    %2823 = vmatpush1.msra.mxu0 %v2769
    %2824 = vmatprep.subr.mxu0 0.0
    %2825 = vmatpush1.msra.mxu0 %v2770
    %2826 = vmatprep.subr.mxu0 0.0
    %2827 = vmatpush1.msra.mxu0 %v2771
    %2828 = vmatprep.subr.mxu0 0.0
    %2829 = vmatpush1.msra.mxu0 0.0
    %2830 = vmatprep.subr.mxu0 0.0
    %2831 = vmatpush1.msra.mxu0 0.0
    %2832 = vmatprep.subr.mxu0 0.0
    %2833 = vmatpush1.msra.mxu0 0.0
    %2834 = vmatprep.subr.mxu0 0.0
    %2835 = vmatpush1.msra.mxu0 0.0
    %2836 = vmatprep.subr.mxu0 0.0
    %2837 = vmatpush1.msra.mxu0 0.0
    %2838 = vmatprep.subr.mxu0 0.0
    %2839 = vmatpush1.msra.mxu0 0.0
    %2840 = vmatprep.subr.mxu0 0.0
    %2841 = vmatpush1.msra.mxu0 0.0
    %2842 = vmatprep.subr.mxu0 0.0
    %2843 = vmatpush1.msra.mxu0 0.0
    %2844 = vmatprep.subr.mxu0 0.0
    %2845 = vmatpush1.msra.mxu0 0.0
    %2846 = vmatprep.subr.mxu0 0.0
    %2847 = vmatpush1.msra.mxu0 0.0
    %2848 = vmatprep.subr.mxu0 0.0
    %2849 = vmatpush1.msra.mxu0 0.0
    %2850 = vmatprep.subr.mxu0 0.0
    %2851 = vmatpush1.msra.mxu0 0.0
    %2852 = vmatprep.subr.mxu0 0.0
    %2853 = vmatpush1.msra.mxu0 0.0
    %2854 = vmatprep.subr.mxu0 0.0
    %2855 = vmatpush1.msra.mxu0 0.0
    %2856 = vmatprep.subr.mxu0 0.0
    %2857 = vmatpush1.msra.mxu0 0.0
    %2858 = vmatprep.subr.mxu0 0.0
    %2859 = vmatpush1.msra.mxu0 0.0
    %2860 = vmatprep.subr.mxu0 0.0
    %2861 = vmatpush1.msra.mxu0 0.0
    %2862 = vmatprep.subr.mxu0 0.0
    %2863 = vmatpush1.msra.mxu0 0.0
    %2864 = vmatprep.subr.mxu0 0.0
    %2865 = vmatpush1.msra.mxu0 0.0
    %2866 = vmatprep.subr.mxu0 0.0
    %2867 = vmatpush1.msra.mxu0 0.0
    %2868 = vmatprep.subr.mxu0 0.0
    %2869 = vmatpush1.msra.mxu0 0.0
    %2870 = vmatprep.subr.mxu0 0.0
    %2871 = vmatpush1.msra.mxu0 0.0
    %2872 = vmatprep.subr.mxu0 0.0
    %2873 = vmatpush1.msra.mxu0 0.0
    %2874 = vmatprep.subr.mxu0 0.0
    %2875 = vmatpush1.msra.mxu0 0.0
    %2876 = vmatprep.mubr.f32.mxu0 0.0
    %2877 = vmatmul.mubr.f32.gmra.mrb[0].mxu0 %v2007
    %v2878 = vpop.f32.mrb[0].mxu0
    %v2879 = vadd.f32 0.0, %v2878
    %v2880 = vpop.f32.mrb[0].mxu0
    %2881 = vdwg.mxu0
    %2882 = vmatprep.subr.mxu0 0.0
    %2883 = vmatpush1.msra.mxu0 %v2772
    %2884 = vmatprep.subr.mxu0 0.0
    %2885 = vmatpush1.msra.mxu0 %v2773
    %2886 = vmatprep.subr.mxu0 0.0
    %2887 = vmatpush1.msra.mxu0 %v2774
    %2888 = vmatprep.subr.mxu0 0.0
    %2889 = vmatpush1.msra.mxu0 %v2775
    %2890 = vmatprep.subr.mxu0 0.0
    %2891 = vmatpush1.msra.mxu0 %v2776
    %2892 = vmatprep.subr.mxu0 0.0
    %2893 = vmatpush1.msra.mxu0 %v2777
    %2894 = vmatprep.subr.mxu0 0.0
    %2895 = vmatpush1.msra.mxu0 %v2778
    %2896 = vmatprep.subr.mxu0 0.0
    %2897 = vmatpush1.msra.mxu0 %v2779
    %2898 = vmatprep.subr.mxu0 0.0
    %2899 = vmatpush1.msra.mxu0 0.0
    %2900 = vmatprep.subr.mxu0 0.0
    %2901 = vmatpush1.msra.mxu0 0.0
    %2902 = vmatprep.subr.mxu0 0.0
    %2903 = vmatpush1.msra.mxu0 0.0
    %2904 = vmatprep.subr.mxu0 0.0
    %2905 = vmatpush1.msra.mxu0 0.0
    %2906 = vmatprep.subr.mxu0 0.0
    %2907 = vmatpush1.msra.mxu0 0.0
    %2908 = vmatprep.subr.mxu0 0.0
    %2909 = vmatpush1.msra.mxu0 0.0
    %2910 = vmatprep.subr.mxu0 0.0
    %2911 = vmatpush1.msra.mxu0 0.0
    %2912 = vmatprep.subr.mxu0 0.0
    %2913 = vmatpush1.msra.mxu0 0.0
    %2914 = vmatprep.subr.mxu0 0.0
    %2915 = vmatpush1.msra.mxu0 0.0
    %2916 = vmatprep.subr.mxu0 0.0
    %2917 = vmatpush1.msra.mxu0 0.0
    %2918 = vmatprep.subr.mxu0 0.0
    %2919 = vmatpush1.msra.mxu0 0.0
    %2920 = vmatprep.subr.mxu0 0.0
    %2921 = vmatpush1.msra.mxu0 0.0
    %2922 = vmatprep.subr.mxu0 0.0
    %2923 = vmatpush1.msra.mxu0 0.0
    %2924 = vmatprep.subr.mxu0 0.0
    %2925 = vmatpush1.msra.mxu0 0.0
    %2926 = vmatprep.subr.mxu0 0.0
    %2927 = vmatpush1.msra.mxu0 0.0
    %2928 = vmatprep.subr.mxu0 0.0
    %2929 = vmatpush1.msra.mxu0 0.0
    %2930 = vmatprep.subr.mxu0 0.0
    %2931 = vmatpush1.msra.mxu0 0.0
    %2932 = vmatprep.subr.mxu0 0.0
    %2933 = vmatpush1.msra.mxu0 0.0
    %2934 = vmatprep.subr.mxu0 0.0
    %2935 = vmatpush1.msra.mxu0 0.0
    %2936 = vmatprep.subr.mxu0 0.0
    %2937 = vmatpush1.msra.mxu0 0.0
    %2938 = vmatprep.subr.mxu0 0.0
    %2939 = vmatpush1.msra.mxu0 0.0
    %2940 = vmatprep.subr.mxu0 0.0
    %2941 = vmatpush1.msra.mxu0 0.0
    %2942 = vmatprep.subr.mxu0 0.0
    %2943 = vmatpush1.msra.mxu0 0.0
    %2944 = vmatprep.subr.mxu0 0.0
    %2945 = vmatpush1.msra.mxu0 0.0
    %2946 = vmatprep.mubr.f32.mxu0 0.0
    %2947 = vmatmul.mubr.f32.gmra.mrb[0].mxu0 %v2144
    %v2948 = vpop.f32.mrb[0].mxu0
    %v2949 = vadd.f32 0.0, %v2948
    %v2950 = vpop.f32.mrb[0].mxu0
    %2951 = vdwg.mxu0
    %2952 = vmatprep.subr.mxu0 0.0
    %2953 = vmatpush1.msra.mxu0 %v2780
    %2954 = vmatprep.subr.mxu0 0.0
    %2955 = vmatpush1.msra.mxu0 %v2781
    %2956 = vmatprep.subr.mxu0 0.0
    %2957 = vmatpush1.msra.mxu0 %v2782
    %2958 = vmatprep.subr.mxu0 0.0
    %2959 = vmatpush1.msra.mxu0 %v2783
    %2960 = vmatprep.subr.mxu0 0.0
    %2961 = vmatpush1.msra.mxu0 %v2784
    %2962 = vmatprep.subr.mxu0 0.0
    %2963 = vmatpush1.msra.mxu0 %v2785
    %2964 = vmatprep.subr.mxu0 0.0
    %2965 = vmatpush1.msra.mxu0 %v2786
    %2966 = vmatprep.subr.mxu0 0.0
    %2967 = vmatpush1.msra.mxu0 %v2787
    %2968 = vmatprep.subr.mxu0 0.0
    %2969 = vmatpush1.msra.mxu0 0.0
    %2970 = vmatprep.subr.mxu0 0.0
    %2971 = vmatpush1.msra.mxu0 0.0
    %2972 = vmatprep.subr.mxu0 0.0
    %2973 = vmatpush1.msra.mxu0 0.0
    %2974 = vmatprep.subr.mxu0 0.0
    %2975 = vmatpush1.msra.mxu0 0.0
    %2976 = vmatprep.subr.mxu0 0.0
    %2977 = vmatpush1.msra.mxu0 0.0
    %2978 = vmatprep.subr.mxu0 0.0
    %2979 = vmatpush1.msra.mxu0 0.0
    %2980 = vmatprep.subr.mxu0 0.0
    %2981 = vmatpush1.msra.mxu0 0.0
    %2982 = vmatprep.subr.mxu0 0.0
    %2983 = vmatpush1.msra.mxu0 0.0
    %2984 = vmatprep.subr.mxu0 0.0
    %2985 = vmatpush1.msra.mxu0 0.0
    %2986 = vmatprep.subr.mxu0 0.0
    %2987 = vmatpush1.msra.mxu0 0.0
    %2988 = vmatprep.subr.mxu0 0.0
    %2989 = vmatpush1.msra.mxu0 0.0
    %2990 = vmatprep.subr.mxu0 0.0
    %2991 = vmatpush1.msra.mxu0 0.0
    %2992 = vmatprep.subr.mxu0 0.0
    %2993 = vmatpush1.msra.mxu0 0.0
    %2994 = vmatprep.subr.mxu0 0.0
    %2995 = vmatpush1.msra.mxu0 0.0
    %2996 = vmatprep.subr.mxu0 0.0
    %2997 = vmatpush1.msra.mxu0 0.0
    %2998 = vmatprep.subr.mxu0 0.0
    %2999 = vmatpush1.msra.mxu0 0.0
    %3000 = vmatprep.subr.mxu0 0.0
    %3001 = vmatpush1.msra.mxu0 0.0
    %3002 = vmatprep.subr.mxu0 0.0
    %3003 = vmatpush1.msra.mxu0 0.0
    %3004 = vmatprep.subr.mxu0 0.0
    %3005 = vmatpush1.msra.mxu0 0.0
    %3006 = vmatprep.subr.mxu0 0.0
    %3007 = vmatpush1.msra.mxu0 0.0
    %3008 = vmatprep.subr.mxu0 0.0
    %3009 = vmatpush1.msra.mxu0 0.0
    %3010 = vmatprep.subr.mxu0 0.0
    %3011 = vmatpush1.msra.mxu0 0.0
    %3012 = vmatprep.subr.mxu0 0.0
    %3013 = vmatpush1.msra.mxu0 0.0
    %3014 = vmatprep.subr.mxu0 0.0
    %3015 = vmatpush1.msra.mxu0 0.0
    %3016 = vmatprep.mubr.f32.mxu0 0.0
    %3017 = vmatmul.mubr.f32.gmra.mrb[0].mxu0 %v2281
    %v3018 = vpop.f32.mrb[0].mxu0
    %v3019 = vadd.f32 0.0, %v3018
    %v3020 = vpop.f32.mrb[0].mxu0
    %3021 = vdwg.mxu0
    %3022 = vmatprep.subr.mxu0 0.0
    %3023 = vmatpush1.msra.mxu0 %v2788
    %3024 = vmatprep.subr.mxu0 0.0
    %3025 = vmatpush1.msra.mxu0 %v2789
    %3026 = vmatprep.subr.mxu0 0.0
    %3027 = vmatpush1.msra.mxu0 %v2790
    %3028 = vmatprep.subr.mxu0 0.0
    %3029 = vmatpush1.msra.mxu0 %v2791
    %3030 = vmatprep.subr.mxu0 0.0
    %3031 = vmatpush1.msra.mxu0 %v2792
    %3032 = vmatprep.subr.mxu0 0.0
    %3033 = vmatpush1.msra.mxu0 %v2793
    %3034 = vmatprep.subr.mxu0 0.0
    %3035 = vmatpush1.msra.mxu0 %v2794
    %3036 = vmatprep.subr.mxu0 0.0
    %3037 = vmatpush1.msra.mxu0 %v2795
    %3038 = vmatprep.subr.mxu0 0.0
    %3039 = vmatpush1.msra.mxu0 0.0
    %3040 = vmatprep.subr.mxu0 0.0
    %3041 = vmatpush1.msra.mxu0 0.0
    %3042 = vmatprep.subr.mxu0 0.0
    %3043 = vmatpush1.msra.mxu0 0.0
    %3044 = vmatprep.subr.mxu0 0.0
    %3045 = vmatpush1.msra.mxu0 0.0
    %3046 = vmatprep.subr.mxu0 0.0
    %3047 = vmatpush1.msra.mxu0 0.0
    %3048 = vmatprep.subr.mxu0 0.0
    %3049 = vmatpush1.msra.mxu0 0.0
    %3050 = vmatprep.subr.mxu0 0.0
    %3051 = vmatpush1.msra.mxu0 0.0
    %3052 = vmatprep.subr.mxu0 0.0
    %3053 = vmatpush1.msra.mxu0 0.0
    %3054 = vmatprep.subr.mxu0 0.0
    %3055 = vmatpush1.msra.mxu0 0.0
    %3056 = vmatprep.subr.mxu0 0.0
    %3057 = vmatpush1.msra.mxu0 0.0
    %3058 = vmatprep.subr.mxu0 0.0
    %3059 = vmatpush1.msra.mxu0 0.0
    %3060 = vmatprep.subr.mxu0 0.0
    %3061 = vmatpush1.msra.mxu0 0.0
    %3062 = vmatprep.subr.mxu0 0.0
    %3063 = vmatpush1.msra.mxu0 0.0
    %3064 = vmatprep.subr.mxu0 0.0
    %3065 = vmatpush1.msra.mxu0 0.0
    %3066 = vmatprep.subr.mxu0 0.0
    %3067 = vmatpush1.msra.mxu0 0.0
    %3068 = vmatprep.subr.mxu0 0.0
    %3069 = vmatpush1.msra.mxu0 0.0
    %3070 = vmatprep.subr.mxu0 0.0
    %3071 = vmatpush1.msra.mxu0 0.0
    %3072 = vmatprep.subr.mxu0 0.0
    %3073 = vmatpush1.msra.mxu0 0.0
    %3074 = vmatprep.subr.mxu0 0.0
    %3075 = vmatpush1.msra.mxu0 0.0
    %3076 = vmatprep.subr.mxu0 0.0
    %3077 = vmatpush1.msra.mxu0 0.0
    %3078 = vmatprep.subr.mxu0 0.0
    %3079 = vmatpush1.msra.mxu0 0.0
    %3080 = vmatprep.subr.mxu0 0.0
    %3081 = vmatpush1.msra.mxu0 0.0
    %3082 = vmatprep.subr.mxu0 0.0
    %3083 = vmatpush1.msra.mxu0 0.0
    %3084 = vmatprep.subr.mxu0 0.0
    %3085 = vmatpush1.msra.mxu0 0.0
    %3086 = vmatprep.mubr.f32.mxu0 0.0
    %3087 = vmatmul.mubr.f32.gmra.mrb[0].mxu0 %v2418
    %v3088 = vpop.f32.mrb[0].mxu0
    %v3089 = vadd.f32 0.0, %v3088
    %v3090 = vpop.f32.mrb[0].mxu0
    %3091 = vdwg.mxu0
    %3092 = vmatprep.subr.mxu0 0.0
    %3093 = vmatpush1.msra.mxu0 %v2796
    %3094 = vmatprep.subr.mxu0 0.0
    %3095 = vmatpush1.msra.mxu0 %v2797
    %3096 = vmatprep.subr.mxu0 0.0
    %3097 = vmatpush1.msra.mxu0 %v2798
    %3098 = vmatprep.subr.mxu0 0.0
    %3099 = vmatpush1.msra.mxu0 %v2799
    %3100 = vmatprep.subr.mxu0 0.0
    %3101 = vmatpush1.msra.mxu0 %v2800
    %3102 = vmatprep.subr.mxu0 0.0
    %3103 = vmatpush1.msra.mxu0 %v2801
    %3104 = vmatprep.subr.mxu0 0.0
    %3105 = vmatpush1.msra.mxu0 %v2802
    %3106 = vmatprep.subr.mxu0 0.0
    %3107 = vmatpush1.msra.mxu0 %v2803
    %3108 = vmatprep.subr.mxu0 0.0
    %3109 = vmatpush1.msra.mxu0 0.0
    %3110 = vmatprep.subr.mxu0 0.0
    %3111 = vmatpush1.msra.mxu0 0.0
    %3112 = vmatprep.subr.mxu0 0.0
    %3113 = vmatpush1.msra.mxu0 0.0
    %3114 = vmatprep.subr.mxu0 0.0
    %3115 = vmatpush1.msra.mxu0 0.0
    %3116 = vmatprep.subr.mxu0 0.0
    %3117 = vmatpush1.msra.mxu0 0.0
    %3118 = vmatprep.subr.mxu0 0.0
    %3119 = vmatpush1.msra.mxu0 0.0
    %3120 = vmatprep.subr.mxu0 0.0
    %3121 = vmatpush1.msra.mxu0 0.0
    %3122 = vmatprep.subr.mxu0 0.0
    %3123 = vmatpush1.msra.mxu0 0.0
    %3124 = vmatprep.subr.mxu0 0.0
    %3125 = vmatpush1.msra.mxu0 0.0
    %3126 = vmatprep.subr.mxu0 0.0
    %3127 = vmatpush1.msra.mxu0 0.0
    %3128 = vmatprep.subr.mxu0 0.0
    %3129 = vmatpush1.msra.mxu0 0.0
    %3130 = vmatprep.subr.mxu0 0.0
    %3131 = vmatpush1.msra.mxu0 0.0
    %3132 = vmatprep.subr.mxu0 0.0
    %3133 = vmatpush1.msra.mxu0 0.0
    %3134 = vmatprep.subr.mxu0 0.0
    %3135 = vmatpush1.msra.mxu0 0.0
    %3136 = vmatprep.subr.mxu0 0.0
    %3137 = vmatpush1.msra.mxu0 0.0
    %3138 = vmatprep.subr.mxu0 0.0
    %3139 = vmatpush1.msra.mxu0 0.0
    %3140 = vmatprep.subr.mxu0 0.0
    %3141 = vmatpush1.msra.mxu0 0.0
    %3142 = vmatprep.subr.mxu0 0.0
    %3143 = vmatpush1.msra.mxu0 0.0
    %3144 = vmatprep.subr.mxu0 0.0
    %3145 = vmatpush1.msra.mxu0 0.0
    %3146 = vmatprep.subr.mxu0 0.0
    %3147 = vmatpush1.msra.mxu0 0.0
    %3148 = vmatprep.subr.mxu0 0.0
    %3149 = vmatpush1.msra.mxu0 0.0
    %3150 = vmatprep.subr.mxu0 0.0
    %3151 = vmatpush1.msra.mxu0 0.0
    %3152 = vmatprep.subr.mxu0 0.0
    %3153 = vmatpush1.msra.mxu0 0.0
    %3154 = vmatprep.subr.mxu0 0.0
    %3155 = vmatpush1.msra.mxu0 0.0
    %3156 = vmatprep.mubr.f32.mxu0 0.0
    %3157 = vmatmul.mubr.f32.gmra.mrb[0].mxu0 %v2555
    %v3158 = vpop.f32.mrb[0].mxu0
    %v3159 = vadd.f32 0.0, %v3158
    %v3160 = vpop.f32.mrb[0].mxu0
    %3161 = vdwg.mxu0
    %3162 = vmatprep.subr.mxu0 0.0
    %3163 = vmatpush1.msra.mxu0 %v2804
    %3164 = vmatprep.subr.mxu0 0.0
    %3165 = vmatpush1.msra.mxu0 %v2805
    %3166 = vmatprep.subr.mxu0 0.0
    %3167 = vmatpush1.msra.mxu0 %v2806
    %3168 = vmatprep.subr.mxu0 0.0
    %3169 = vmatpush1.msra.mxu0 %v2807
    %3170 = vmatprep.subr.mxu0 0.0
    %3171 = vmatpush1.msra.mxu0 %v2808
    %3172 = vmatprep.subr.mxu0 0.0
    %3173 = vmatpush1.msra.mxu0 %v2809
    %3174 = vmatprep.subr.mxu0 0.0
    %3175 = vmatpush1.msra.mxu0 %v2810
    %3176 = vmatprep.subr.mxu0 0.0
    %3177 = vmatpush1.msra.mxu0 %v2811
    %3178 = vmatprep.subr.mxu0 0.0
    %3179 = vmatpush1.msra.mxu0 0.0
    %3180 = vmatprep.subr.mxu0 0.0
    %3181 = vmatpush1.msra.mxu0 0.0
    %3182 = vmatprep.subr.mxu0 0.0
    %3183 = vmatpush1.msra.mxu0 0.0
    %3184 = vmatprep.subr.mxu0 0.0
    %3185 = vmatpush1.msra.mxu0 0.0
    %3186 = vmatprep.subr.mxu0 0.0
    %3187 = vmatpush1.msra.mxu0 0.0
    %3188 = vmatprep.subr.mxu0 0.0
    %3189 = vmatpush1.msra.mxu0 0.0
    %3190 = vmatprep.subr.mxu0 0.0
    %3191 = vmatpush1.msra.mxu0 0.0
    %3192 = vmatprep.subr.mxu0 0.0
    %3193 = vmatpush1.msra.mxu0 0.0
    %3194 = vmatprep.subr.mxu0 0.0
    %3195 = vmatpush1.msra.mxu0 0.0
    %3196 = vmatprep.subr.mxu0 0.0
    %3197 = vmatpush1.msra.mxu0 0.0
    %3198 = vmatprep.subr.mxu0 0.0
    %3199 = vmatpush1.msra.mxu0 0.0
    %3200 = vmatprep.subr.mxu0 0.0
    %3201 = vmatpush1.msra.mxu0 0.0
    %3202 = vmatprep.subr.mxu0 0.0
    %3203 = vmatpush1.msra.mxu0 0.0
    %3204 = vmatprep.subr.mxu0 0.0
    %3205 = vmatpush1.msra.mxu0 0.0
    %3206 = vmatprep.subr.mxu0 0.0
    %3207 = vmatpush1.msra.mxu0 0.0
    %3208 = vmatprep.subr.mxu0 0.0
    %3209 = vmatpush1.msra.mxu0 0.0
    %3210 = vmatprep.subr.mxu0 0.0
    %3211 = vmatpush1.msra.mxu0 0.0
    %3212 = vmatprep.subr.mxu0 0.0
    %3213 = vmatpush1.msra.mxu0 0.0
    %3214 = vmatprep.subr.mxu0 0.0
    %3215 = vmatpush1.msra.mxu0 0.0
    %3216 = vmatprep.subr.mxu0 0.0
    %3217 = vmatpush1.msra.mxu0 0.0
    %3218 = vmatprep.subr.mxu0 0.0
    %3219 = vmatpush1.msra.mxu0 0.0
    %3220 = vmatprep.subr.mxu0 0.0
    %3221 = vmatpush1.msra.mxu0 0.0
    %3222 = vmatprep.subr.mxu0 0.0
    %3223 = vmatpush1.msra.mxu0 0.0
    %3224 = vmatprep.subr.mxu0 0.0
    %3225 = vmatpush1.msra.mxu0 0.0
    %3226 = vmatprep.mubr.f32.mxu0 0.0
    %3227 = vmatmul.mubr.f32.gmra.mrb[0].mxu0 %v2692
    %v3228 = vpop.f32.mrb[0].mxu0
    %v3229 = vadd.f32 0.0, %v3228
    %v3230 = vpop.f32.mrb[0].mxu0
    %3231 = vdwg.mxu0
    %s3232 = sld [smem:[#allocation2]]
    %s3233 = sld [smem:[#allocation2 + $0x1]]
    %s3234 = sld [smem:[#allocation2 + $0x2]]
    %s3235 = sld [smem:[#allocation2 + $0x3]]
    %s3237 = sor.u32 256, 4
    %3238 = vbcast.lane.b32.xlu0 %v1835, %s3237
    %v3239 = vpop.permute.xlu0 %3238
    %s3241 = sor.u32 256, 4
    %3242 = vbcast.lane.b32.xlu0 %v1856, %s3241
    %v3243 = vpop.permute.xlu0 %3242
    %s3245 = sor.u32 256, 4
    %3246 = vbcast.lane.b32.xlu0 %v1877, %s3245
    %v3247 = vpop.permute.xlu0 %3246
    %s3249 = sor.u32 256, 4
    %3250 = vbcast.lane.b32.xlu0 %v1898, %s3249
    %v3251 = vpop.permute.xlu0 %3250
    %s3253 = sor.u32 256, 4
    %3254 = vbcast.lane.b32.xlu0 %v1919, %s3253
    %v3255 = vpop.permute.xlu0 %3254
    %s3257 = sor.u32 256, 4
    %3258 = vbcast.lane.b32.xlu0 %v1940, %s3257
    %v3259 = vpop.permute.xlu0 %3258
    %vm3260 = vcmp.eq.f32.partialorder %v3239, 0.0
    %vm3261 = vcmp.eq.f32.partialorder %v3243, 0.0
    %vm3262 = vcmp.eq.f32.partialorder %v3247, 0.0
    %vm3263 = vcmp.eq.f32.partialorder %v3251, 0.0
    %vm3264 = vcmp.eq.f32.partialorder %v3255, 0.0
    %vm3265 = vcmp.eq.f32.partialorder %v3259, 0.0
    %v3266 = vsel %vm3260, 1.0, %v3239
    %v3267 = vsel %vm3261, 1.0, %v3243
    %v3268 = vsel %vm3262, 1.0, %v3247
    %v3269 = vsel %vm3263, 1.0, %v3251
    %v3270 = vsel %vm3264, 1.0, %v3255
    %v3271 = vsel %vm3265, 1.0, %v3259
    %v3272 = vrcp.pop %v3266
    %v3273 = vmul.f32 %v2076, %v3272
    %v3274 = vrcp.pop %v3267
    %v3275 = vmul.f32 %v2213, %v3274
    %v3276 = vrcp.pop %v3268
    %v3277 = vmul.f32 %v2350, %v3276
    %v3278 = vrcp.pop %v3269
    %v3279 = vmul.f32 %v2487, %v3278
    %v3280 = vrcp.pop %v3270
    %v3281 = vmul.f32 %v2624, %v3280
    %v3282 = vrcp.pop %v3271
    %v3283 = vmul.f32 %v2761, %v3282
    %v3284 = vmul.f32 %v3239, 0.5
    %v3285 = vmul.f32 %v3243, 0.5
    %v3286 = vmul.f32 %v3247, 0.5
    %v3287 = vmul.f32 %v3251, 0.5
    %v3288 = vmul.f32 %v3255, 0.5
    %v3289 = vmul.f32 %v3259, 0.5
    %v3290 = vstv %s3232
    %v3291 = vadd.f32 %v3290, %v3284
    %v3292 = vadd.f32 %v3290, %v3285
    %v3293 = vadd.f32 %v3290, %v3286
    %v3294 = vadd.f32 %v3290, %v3287
    %v3295 = vadd.f32 %v3290, %v3288
    %v3296 = vadd.f32 %v3290, %v3289
    %v3297 = vstv %s3235
    %v3298 = vadd.f32 %v3297, %v3239
    %v3299 = vadd.f32 %v3297, %v3243
    %v3300 = vadd.f32 %v3297, %v3247
    %v3301 = vadd.f32 %v3297, %v3251
    %v3302 = vadd.f32 %v3297, %v3255
    %v3303 = vadd.f32 %v3297, %v3259
    %s3304 = smul.f32 %s3234, %s3235
    %v3305 = vstv %s3304
    %v3306 = vadd.f32 %v3305, %v2076
    %v3307 = vadd.f32 %v3305, %v2213
    %v3308 = vadd.f32 %v3305, %v2350
    %v3309 = vadd.f32 %v3305, %v2487
    %v3310 = vadd.f32 %v3305, %v2624
    %v3311 = vadd.f32 %v3305, %v2761
    %v3312 = vrcp.pop %v3298
    %v3313 = vmul.f32 %v3306, %v3312
    %v3314 = vrcp.pop %v3299
    %v3315 = vmul.f32 %v3307, %v3314
    %v3316 = vrcp.pop %v3300
    %v3317 = vmul.f32 %v3308, %v3316
    %v3318 = vrcp.pop %v3301
    %v3319 = vmul.f32 %v3309, %v3318
    %v3320 = vrcp.pop %v3302
    %v3321 = vmul.f32 %v3310, %v3320
    %v3322 = vrcp.pop %v3303
    %v3323 = vmul.f32 %v3311, %v3322
    %v3324 = vmul.f32 %v3273, %v3273
    %v3325 = vmul.f32 %v3275, %v3275
    %v3326 = vmul.f32 %v3277, %v3277
    %v3327 = vmul.f32 %v3279, %v3279
    %v3328 = vmul.f32 %v3281, %v3281
    %v3329 = vmul.f32 %v3283, %v3283
    %v3330 = vmul.f32 %v3324, %v3239
    %v3331 = vmul.f32 %v3325, %v3243
    %v3332 = vmul.f32 %v3326, %v3247
    %v3333 = vmul.f32 %v3327, %v3251
    %v3334 = vmul.f32 %v3328, %v3255
    %v3335 = vmul.f32 %v3329, %v3259
    %v3336 = vsub.f32 %v2879, %v3330
    %v3337 = vsub.f32 %v2949, %v3331
    %v3338 = vsub.f32 %v3019, %v3332
    %v3339 = vsub.f32 %v3089, %v3333
    %v3340 = vsub.f32 %v3159, %v3334
    %v3341 = vsub.f32 %v3229, %v3335
    %v3342 = vmul.f32 %v3336, 0.5
    %v3343 = vmul.f32 %v3337, 0.5
    %v3344 = vmul.f32 %v3338, 0.5
    %v3345 = vmul.f32 %v3339, 0.5
    %v3346 = vmul.f32 %v3340, 0.5
    %v3347 = vmul.f32 %v3341, 0.5
    %v3348 = vstv %s3233
    %v3349 = vadd.f32 %v3348, %v3342
    %v3350 = vadd.f32 %v3348, %v3343
    %v3351 = vadd.f32 %v3348, %v3344
    %v3352 = vadd.f32 %v3348, %v3345
    %v3353 = vadd.f32 %v3348, %v3346
    %v3354 = vadd.f32 %v3348, %v3347
    %v3355 = vmul.f32 %v3239, %v3297
    %v3356 = vmul.f32 %v3243, %v3297
    %v3357 = vmul.f32 %v3247, %v3297
    %v3358 = vmul.f32 %v3251, %v3297
    %v3359 = vmul.f32 %v3255, %v3297
    %v3360 = vmul.f32 %v3259, %v3297
    %v3361 = vmul.f32 %v3355, %v3312
    %v3362 = vmul.f32 %v3356, %v3314
    %v3363 = vmul.f32 %v3357, %v3316
    %v3364 = vmul.f32 %v3358, %v3318
    %v3365 = vmul.f32 %v3359, %v3320
    %v3366 = vmul.f32 %v3360, %v3322
    %v3367 = vmul.f32 %v3361, 0.5
    %v3368 = vmul.f32 %v3362, 0.5
    %v3369 = vmul.f32 %v3363, 0.5
    %v3370 = vmul.f32 %v3364, 0.5
    %v3371 = vmul.f32 %v3365, 0.5
    %v3372 = vmul.f32 %v3366, 0.5
    %v3373 = vstv %s3234
    %v3374 = vsub.f32 %v3273, %v3373
    %v3375 = vsub.f32 %v3275, %v3373
    %v3376 = vsub.f32 %v3277, %v3373
    %v3377 = vsub.f32 %v3279, %v3373
    %v3378 = vsub.f32 %v3281, %v3373
    %v3379 = vsub.f32 %v3283, %v3373
    %v3380 = vmul.f32 %v3374, %v3374
    %v3381 = vmul.f32 %v3375, %v3375
    %v3382 = vmul.f32 %v3376, %v3376
    %v3383 = vmul.f32 %v3377, %v3377
    %v3384 = vmul.f32 %v3378, %v3378
    %v3385 = vmul.f32 %v3379, %v3379
    %v3386 = vmul.f32 %v3367, %v3380
    %v3387 = vmul.f32 %v3368, %v3381
    %v3388 = vmul.f32 %v3369, %v3382
    %v3389 = vmul.f32 %v3370, %v3383
    %v3390 = vmul.f32 %v3371, %v3384
    %v3391 = vmul.f32 %v3372, %v3385
    %v3392 = vadd.f32 %v3349, %v3386
    %v3393 = vadd.f32 %v3350, %v3387
    %v3394 = vadd.f32 %v3351, %v3388
    %v3395 = vadd.f32 %v3352, %v3389
    %v3396 = vadd.f32 %v3353, %v3390
    %v3397 = vadd.f32 %v3354, %v3391
    %v3398 = vcombine.low %v3291, %v3293
    %v3399 = vcombine.high %v3291, %v3293
    %v3401 = vunpack.c.l.s4 1983009808
    %v3402 = vunpack.c.0.s8 %v3401
    %v3403 = vlaneseq
    %v3404 = vshrl.u32 %v3403, 7
    %v3405 = vsub.s32 %v3402, %v3404
    %v3406 = vrot.slane %v3398, %v3405
    %v3408 = vunpack.c.l.s4 1983009808
    %v3409 = vunpack.c.0.s8 %v3408
    %v3410 = vlaneseq
    %v3411 = vshrl.u32 %v3410, 7
    %v3412 = vsub.s32 %v3409, %v3411
    %v3413 = vrot.slane %v3399, %v3412
    %v3414 = vcombine.low %v3292, %v3294
    %v3415 = vcombine.high %v3292, %v3294
    %v3417 = vunpack.c.l.s4 1983009808
    %v3418 = vunpack.c.0.s8 %v3417
    %v3419 = vlaneseq
    %v3420 = vshrl.u32 %v3419, 7
    %v3421 = vsub.s32 %v3418, %v3420
    %v3422 = vrot.slane %v3414, %v3421
    %v3424 = vunpack.c.l.s4 1983009808
    %v3425 = vunpack.c.0.s8 %v3424
    %v3426 = vlaneseq
    %v3427 = vshrl.u32 %v3426, 7
    %v3428 = vsub.s32 %v3425, %v3427
    %v3429 = vrot.slane %v3415, %v3428
    %v3430 = vcombine.high %v3295, 0.0
    %v3432 = vunpack.c.l.s4 1983009808
    %v3433 = vunpack.c.0.s8 %v3432
    %v3434 = vlaneseq
    %v3435 = vshrl.u32 %v3434, 7
    %v3436 = vsub.s32 %v3433, %v3435
    %v3437 = vrot.slane %v3295, %v3436
    %v3439 = vunpack.c.l.s4 1983009808
    %v3440 = vunpack.c.0.s8 %v3439
    %v3441 = vlaneseq
    %v3442 = vshrl.u32 %v3441, 7
    %v3443 = vsub.s32 %v3440, %v3442
    %v3444 = vrot.slane %v3430, %v3443
    %v3445 = vcombine.high %v3296, 0.0
    %v3447 = vunpack.c.l.s4 1983009808
    %v3448 = vunpack.c.0.s8 %v3447
    %v3449 = vlaneseq
    %v3450 = vshrl.u32 %v3449, 7
    %v3451 = vsub.s32 %v3448, %v3450
    %v3452 = vrot.slane %v3296, %v3451
    %v3454 = vunpack.c.l.s4 1983009808
    %v3455 = vunpack.c.0.s8 %v3454
    %v3456 = vlaneseq
    %v3457 = vshrl.u32 %v3456, 7
    %v3458 = vsub.s32 %v3455, %v3457
    %v3459 = vrot.slane %v3445, %v3458
    %v3460 = vcombine.low %v3406, %v3422
    %v3461 = vcombine.high %v3406, %v3422
    %v3463 = vunpack.c.l.s4 1934713408
    %v3464 = vunpack.c.0.s8 %v3463
    %v3465 = vlaneseq
    %v3466 = vshrl.u32 %v3465, 7
    %v3467 = vsub.s32 %v3464, %v3466
    %v3468 = vrot.slane %v3460, %v3467
    %v3470 = vunpack.c.l.s4 1934713408
    %v3471 = vunpack.c.0.s8 %v3470
    %v3472 = vlaneseq
    %v3473 = vshrl.u32 %v3472, 7
    %v3474 = vsub.s32 %v3471, %v3473
    %v3475 = vrot.slane %v3461, %v3474
    %v3476 = vcombine.low %v3413, %v3429
    %v3477 = vcombine.high %v3413, %v3429
    %v3479 = vunpack.c.l.s4 1934713408
    %v3480 = vunpack.c.0.s8 %v3479
    %v3481 = vlaneseq
    %v3482 = vshrl.u32 %v3481, 7
    %v3483 = vsub.s32 %v3480, %v3482
    %v3484 = vrot.slane %v3476, %v3483
    %v3486 = vunpack.c.l.s4 1934713408
    %v3487 = vunpack.c.0.s8 %v3486
    %v3488 = vlaneseq
    %v3489 = vshrl.u32 %v3488, 7
    %v3490 = vsub.s32 %v3487, %v3489
    %v3491 = vrot.slane %v3477, %v3490
    %v3492 = vcombine.low %v3437, %v3452
    %v3493 = vcombine.high %v3437, %v3452
    %v3495 = vunpack.c.l.s4 1934713408
    %v3496 = vunpack.c.0.s8 %v3495
    %v3497 = vlaneseq
    %v3498 = vshrl.u32 %v3497, 7
    %v3499 = vsub.s32 %v3496, %v3498
    %v3500 = vrot.slane %v3492, %v3499
    %v3502 = vunpack.c.l.s4 1934713408
    %v3503 = vunpack.c.0.s8 %v3502
    %v3504 = vlaneseq
    %v3505 = vshrl.u32 %v3504, 7
    %v3506 = vsub.s32 %v3503, %v3505
    %v3507 = vrot.slane %v3493, %v3506
    %v3508 = vcombine.low %v3444, %v3459
    %v3509 = vcombine.high %v3444, %v3459
    %v3511 = vunpack.c.l.s4 1934713408
    %v3512 = vunpack.c.0.s8 %v3511
    %v3513 = vlaneseq
    %v3514 = vshrl.u32 %v3513, 7
    %v3515 = vsub.s32 %v3512, %v3514
    %v3516 = vrot.slane %v3508, %v3515
    %v3518 = vunpack.c.l.s4 1934713408
    %v3519 = vunpack.c.0.s8 %v3518
    %v3520 = vlaneseq
    %v3521 = vshrl.u32 %v3520, 7
    %v3522 = vsub.s32 %v3519, %v3521
    %v3523 = vrot.slane %v3509, %v3522
    %v3524 = vcombine.low %v3468, %v3500
    %v3525 = vcombine.high %v3468, %v3500
    %v3526 = vcombine.low %v3475, %v3507
    %v3527 = vcombine.high %v3475, %v3507
    %v3528 = vcombine.low %v3484, %v3516
    %v3529 = vcombine.high %v3484, %v3516
    %v3530 = vcombine.low %v3491, %v3523
    %v3531 = vcombine.high %v3491, %v3523
    %3533 = vrot.lane.b32.xlu0 %v3525, 4
    %v3534 = vpop.permute.xlu0 %3533
    %3537 = vrot.lane.b32.xlu0 %v3526, 8
    %v3538 = vpop.permute.xlu0 %3537
    %3541 = vrot.lane.b32.xlu0 %v3527, 12
    %v3542 = vpop.permute.xlu0 %3541
    %3545 = vrot.lane.b32.xlu0 %v3528, 16
    %v3546 = vpop.permute.xlu0 %3545
    %3549 = vrot.lane.b32.xlu0 %v3529, 20
    %v3550 = vpop.permute.xlu0 %3549
    %3553 = vrot.lane.b32.xlu0 %v3530, 24
    %v3554 = vpop.permute.xlu0 %3553
    %3557 = vrot.lane.b32.xlu0 %v3531, 28
    %v3558 = vpop.permute.xlu0 %3557
    %v3560 = vsel %vm585, %v3524, %v3534
    %v3561 = vsel %vm135, %v3560, %v3538
    %vm3562 = vcmask 97280
    %v3563 = vsel %vm3562, %v3561, %v3542
    %vm3564 = vcmask 130048
    %v3565 = vsel %vm3564, %v3563, %v3546
    %vm3566 = vcmask 162816
    %v3567 = vsel %vm3566, %v3565, %v3550
    %vm3568 = vcmask 195584
    %v3569 = vsel %vm3568, %v3567, %v3554
    %vm3570 = vcmask 228352
    %v3571 = vsel %vm3570, %v3569, %v3558
    %v3572 = vcombine.low %v3392, %v3394
    %v3573 = vcombine.high %v3392, %v3394
    %v3575 = vunpack.c.l.s4 1983009808
    %v3576 = vunpack.c.0.s8 %v3575
    %v3577 = vlaneseq
    %v3578 = vshrl.u32 %v3577, 7
    %v3579 = vsub.s32 %v3576, %v3578
    %v3580 = vrot.slane %v3572, %v3579
    %v3582 = vunpack.c.l.s4 1983009808
    %v3583 = vunpack.c.0.s8 %v3582
    %v3584 = vlaneseq
    %v3585 = vshrl.u32 %v3584, 7
    %v3586 = vsub.s32 %v3583, %v3585
    %v3587 = vrot.slane %v3573, %v3586
    %v3588 = vcombine.low %v3393, %v3395
    %v3589 = vcombine.high %v3393, %v3395
    %v3591 = vunpack.c.l.s4 1983009808
    %v3592 = vunpack.c.0.s8 %v3591
    %v3593 = vlaneseq
    %v3594 = vshrl.u32 %v3593, 7
    %v3595 = vsub.s32 %v3592, %v3594
    %v3596 = vrot.slane %v3588, %v3595
    %v3598 = vunpack.c.l.s4 1983009808
    %v3599 = vunpack.c.0.s8 %v3598
    %v3600 = vlaneseq
    %v3601 = vshrl.u32 %v3600, 7
    %v3602 = vsub.s32 %v3599, %v3601
    %v3603 = vrot.slane %v3589, %v3602
    %v3604 = vcombine.high %v3396, 0.0
    %v3606 = vunpack.c.l.s4 1983009808
    %v3607 = vunpack.c.0.s8 %v3606
    %v3608 = vlaneseq
    %v3609 = vshrl.u32 %v3608, 7
    %v3610 = vsub.s32 %v3607, %v3609
    %v3611 = vrot.slane %v3396, %v3610
    %v3613 = vunpack.c.l.s4 1983009808
    %v3614 = vunpack.c.0.s8 %v3613
    %v3615 = vlaneseq
    %v3616 = vshrl.u32 %v3615, 7
    %v3617 = vsub.s32 %v3614, %v3616
    %v3618 = vrot.slane %v3604, %v3617
    %v3619 = vcombine.high %v3397, 0.0
    %v3621 = vunpack.c.l.s4 1983009808
    %v3622 = vunpack.c.0.s8 %v3621
    %v3623 = vlaneseq
    %v3624 = vshrl.u32 %v3623, 7
    %v3625 = vsub.s32 %v3622, %v3624
    %v3626 = vrot.slane %v3397, %v3625
    %v3628 = vunpack.c.l.s4 1983009808
    %v3629 = vunpack.c.0.s8 %v3628
    %v3630 = vlaneseq
    %v3631 = vshrl.u32 %v3630, 7
    %v3632 = vsub.s32 %v3629, %v3631
    %v3633 = vrot.slane %v3619, %v3632
    %v3634 = vcombine.low %v3580, %v3596
    %v3635 = vcombine.high %v3580, %v3596
    %v3637 = vunpack.c.l.s4 1934713408
    %v3638 = vunpack.c.0.s8 %v3637
    %v3639 = vlaneseq
    %v3640 = vshrl.u32 %v3639, 7
    %v3641 = vsub.s32 %v3638, %v3640
    %v3642 = vrot.slane %v3634, %v3641
    %v3644 = vunpack.c.l.s4 1934713408
    %v3645 = vunpack.c.0.s8 %v3644
    %v3646 = vlaneseq
    %v3647 = vshrl.u32 %v3646, 7
    %v3648 = vsub.s32 %v3645, %v3647
    %v3649 = vrot.slane %v3635, %v3648
    %v3650 = vcombine.low %v3587, %v3603
    %v3651 = vcombine.high %v3587, %v3603
    %v3653 = vunpack.c.l.s4 1934713408
    %v3654 = vunpack.c.0.s8 %v3653
    %v3655 = vlaneseq
    %v3656 = vshrl.u32 %v3655, 7
    %v3657 = vsub.s32 %v3654, %v3656
    %v3658 = vrot.slane %v3650, %v3657
    %v3660 = vunpack.c.l.s4 1934713408
    %v3661 = vunpack.c.0.s8 %v3660
    %v3662 = vlaneseq
    %v3663 = vshrl.u32 %v3662, 7
    %v3664 = vsub.s32 %v3661, %v3663
    %v3665 = vrot.slane %v3651, %v3664
    %v3666 = vcombine.low %v3611, %v3626
    %v3667 = vcombine.high %v3611, %v3626
    %v3669 = vunpack.c.l.s4 1934713408
    %v3670 = vunpack.c.0.s8 %v3669
    %v3671 = vlaneseq
    %v3672 = vshrl.u32 %v3671, 7
    %v3673 = vsub.s32 %v3670, %v3672
    %v3674 = vrot.slane %v3666, %v3673
    %v3676 = vunpack.c.l.s4 1934713408
    %v3677 = vunpack.c.0.s8 %v3676
    %v3678 = vlaneseq
    %v3679 = vshrl.u32 %v3678, 7
    %v3680 = vsub.s32 %v3677, %v3679
    %v3681 = vrot.slane %v3667, %v3680
    %v3682 = vcombine.low %v3618, %v3633
    %v3683 = vcombine.high %v3618, %v3633
    %v3685 = vunpack.c.l.s4 1934713408
    %v3686 = vunpack.c.0.s8 %v3685
    %v3687 = vlaneseq
    %v3688 = vshrl.u32 %v3687, 7
    %v3689 = vsub.s32 %v3686, %v3688
    %v3690 = vrot.slane %v3682, %v3689
    %v3692 = vunpack.c.l.s4 1934713408
    %v3693 = vunpack.c.0.s8 %v3692
    %v3694 = vlaneseq
    %v3695 = vshrl.u32 %v3694, 7
    %v3696 = vsub.s32 %v3693, %v3695
    %v3697 = vrot.slane %v3683, %v3696
    %v3698 = vcombine.low %v3642, %v3674
    %v3699 = vcombine.high %v3642, %v3674
    %v3700 = vcombine.low %v3649, %v3681
    %v3701 = vcombine.high %v3649, %v3681
    %v3702 = vcombine.low %v3658, %v3690
    %v3703 = vcombine.high %v3658, %v3690
    %v3704 = vcombine.low %v3665, %v3697
    %v3705 = vcombine.high %v3665, %v3697
    %3707 = vrot.lane.b32.xlu0 %v3699, 4
    %v3708 = vpop.permute.xlu0 %3707
    %3711 = vrot.lane.b32.xlu0 %v3700, 8
    %v3712 = vpop.permute.xlu0 %3711
    %3715 = vrot.lane.b32.xlu0 %v3701, 12
    %v3716 = vpop.permute.xlu0 %3715
    %3719 = vrot.lane.b32.xlu0 %v3702, 16
    %v3720 = vpop.permute.xlu0 %3719
    %3723 = vrot.lane.b32.xlu0 %v3703, 20
    %v3724 = vpop.permute.xlu0 %3723
    %3727 = vrot.lane.b32.xlu0 %v3704, 24
    %v3728 = vpop.permute.xlu0 %3727
    %3731 = vrot.lane.b32.xlu0 %v3705, 28
    %v3732 = vpop.permute.xlu0 %3731
    %v3734 = vsel %vm585, %v3698, %v3708
    %v3735 = vsel %vm135, %v3734, %v3712
    %v3736 = vsel %vm3562, %v3735, %v3716
    %v3737 = vsel %vm3564, %v3736, %v3720
    %v3738 = vsel %vm3566, %v3737, %v3724
    %v3739 = vsel %vm3568, %v3738, %v3728
    %v3740 = vsel %vm3570, %v3739, %v3732
    %v3741 = vcombine.low %v3313, %v3317
    %v3742 = vcombine.high %v3313, %v3317
    %v3744 = vunpack.c.l.s4 1983009808
    %v3745 = vunpack.c.0.s8 %v3744
    %v3746 = vlaneseq
    %v3747 = vshrl.u32 %v3746, 7
    %v3748 = vsub.s32 %v3745, %v3747
    %v3749 = vrot.slane %v3741, %v3748
    %v3751 = vunpack.c.l.s4 1983009808
    %v3752 = vunpack.c.0.s8 %v3751
    %v3753 = vlaneseq
    %v3754 = vshrl.u32 %v3753, 7
    %v3755 = vsub.s32 %v3752, %v3754
    %v3756 = vrot.slane %v3742, %v3755
    %v3757 = vcombine.low %v3315, %v3319
    %v3758 = vcombine.high %v3315, %v3319
    %v3760 = vunpack.c.l.s4 1983009808
    %v3761 = vunpack.c.0.s8 %v3760
    %v3762 = vlaneseq
    %v3763 = vshrl.u32 %v3762, 7
    %v3764 = vsub.s32 %v3761, %v3763
    %v3765 = vrot.slane %v3757, %v3764
    %v3767 = vunpack.c.l.s4 1983009808
    %v3768 = vunpack.c.0.s8 %v3767
    %v3769 = vlaneseq
    %v3770 = vshrl.u32 %v3769, 7
    %v3771 = vsub.s32 %v3768, %v3770
    %v3772 = vrot.slane %v3758, %v3771
    %v3773 = vcombine.high %v3321, 0.0
    %v3775 = vunpack.c.l.s4 1983009808
    %v3776 = vunpack.c.0.s8 %v3775
    %v3777 = vlaneseq
    %v3778 = vshrl.u32 %v3777, 7
    %v3779 = vsub.s32 %v3776, %v3778
    %v3780 = vrot.slane %v3321, %v3779
    %v3782 = vunpack.c.l.s4 1983009808
    %v3783 = vunpack.c.0.s8 %v3782
    %v3784 = vlaneseq
    %v3785 = vshrl.u32 %v3784, 7
    %v3786 = vsub.s32 %v3783, %v3785
    %v3787 = vrot.slane %v3773, %v3786
    %v3788 = vcombine.high %v3323, 0.0
    %v3790 = vunpack.c.l.s4 1983009808
    %v3791 = vunpack.c.0.s8 %v3790
    %v3792 = vlaneseq
    %v3793 = vshrl.u32 %v3792, 7
    %v3794 = vsub.s32 %v3791, %v3793
    %v3795 = vrot.slane %v3323, %v3794
    %v3797 = vunpack.c.l.s4 1983009808
    %v3798 = vunpack.c.0.s8 %v3797
    %v3799 = vlaneseq
    %v3800 = vshrl.u32 %v3799, 7
    %v3801 = vsub.s32 %v3798, %v3800
    %v3802 = vrot.slane %v3788, %v3801
    %v3803 = vcombine.low %v3749, %v3765
    %v3804 = vcombine.high %v3749, %v3765
    %v3806 = vunpack.c.l.s4 1934713408
    %v3807 = vunpack.c.0.s8 %v3806
    %v3808 = vlaneseq
    %v3809 = vshrl.u32 %v3808, 7
    %v3810 = vsub.s32 %v3807, %v3809
    %v3811 = vrot.slane %v3803, %v3810
    %v3813 = vunpack.c.l.s4 1934713408
    %v3814 = vunpack.c.0.s8 %v3813
    %v3815 = vlaneseq
    %v3816 = vshrl.u32 %v3815, 7
    %v3817 = vsub.s32 %v3814, %v3816
    %v3818 = vrot.slane %v3804, %v3817
    %v3819 = vcombine.low %v3756, %v3772
    %v3820 = vcombine.high %v3756, %v3772
    %v3822 = vunpack.c.l.s4 1934713408
    %v3823 = vunpack.c.0.s8 %v3822
    %v3824 = vlaneseq
    %v3825 = vshrl.u32 %v3824, 7
    %v3826 = vsub.s32 %v3823, %v3825
    %v3827 = vrot.slane %v3819, %v3826
    %v3829 = vunpack.c.l.s4 1934713408
    %v3830 = vunpack.c.0.s8 %v3829
    %v3831 = vlaneseq
    %v3832 = vshrl.u32 %v3831, 7
    %v3833 = vsub.s32 %v3830, %v3832
    %v3834 = vrot.slane %v3820, %v3833
    %v3835 = vcombine.low %v3780, %v3795
    %v3836 = vcombine.high %v3780, %v3795
    %v3838 = vunpack.c.l.s4 1934713408
    %v3839 = vunpack.c.0.s8 %v3838
    %v3840 = vlaneseq
    %v3841 = vshrl.u32 %v3840, 7
    %v3842 = vsub.s32 %v3839, %v3841
    %v3843 = vrot.slane %v3835, %v3842
    %v3845 = vunpack.c.l.s4 1934713408
    %v3846 = vunpack.c.0.s8 %v3845
    %v3847 = vlaneseq
    %v3848 = vshrl.u32 %v3847, 7
    %v3849 = vsub.s32 %v3846, %v3848
    %v3850 = vrot.slane %v3836, %v3849
    %v3851 = vcombine.low %v3787, %v3802
    %v3852 = vcombine.high %v3787, %v3802
    %v3854 = vunpack.c.l.s4 1934713408
    %v3855 = vunpack.c.0.s8 %v3854
    %v3856 = vlaneseq
    %v3857 = vshrl.u32 %v3856, 7
    %v3858 = vsub.s32 %v3855, %v3857
    %v3859 = vrot.slane %v3851, %v3858
    %v3861 = vunpack.c.l.s4 1934713408
    %v3862 = vunpack.c.0.s8 %v3861
    %v3863 = vlaneseq
    %v3864 = vshrl.u32 %v3863, 7
    %v3865 = vsub.s32 %v3862, %v3864
    %v3866 = vrot.slane %v3852, %v3865
    %v3867 = vcombine.low %v3811, %v3843
    %v3868 = vcombine.high %v3811, %v3843
    %v3869 = vcombine.low %v3818, %v3850
    %v3870 = vcombine.high %v3818, %v3850
    %v3871 = vcombine.low %v3827, %v3859
    %v3872 = vcombine.high %v3827, %v3859
    %v3873 = vcombine.low %v3834, %v3866
    %v3874 = vcombine.high %v3834, %v3866
    %3876 = vrot.lane.b32.xlu0 %v3868, 4
    %v3877 = vpop.permute.xlu0 %3876
    %3880 = vrot.lane.b32.xlu0 %v3869, 8
    %v3881 = vpop.permute.xlu0 %3880
    %3884 = vrot.lane.b32.xlu0 %v3870, 12
    %v3885 = vpop.permute.xlu0 %3884
    %3888 = vrot.lane.b32.xlu0 %v3871, 16
    %v3889 = vpop.permute.xlu0 %3888
    %3892 = vrot.lane.b32.xlu0 %v3872, 20
    %v3893 = vpop.permute.xlu0 %3892
    %3896 = vrot.lane.b32.xlu0 %v3873, 24
    %v3897 = vpop.permute.xlu0 %3896
    %3900 = vrot.lane.b32.xlu0 %v3874, 28
    %v3901 = vpop.permute.xlu0 %3900
    %v3903 = vsel %vm585, %v3867, %v3877
    %v3904 = vsel %vm135, %v3903, %v3881
    %v3905 = vsel %vm3562, %v3904, %v3885
    %v3906 = vsel %vm3564, %v3905, %v3889
    %v3907 = vsel %vm3566, %v3906, %v3893
    %v3908 = vsel %vm3568, %v3907, %v3897
    %v3909 = vsel %vm3570, %v3908, %v3901
    %v3910 = vcombine.low %v3298, %v3300
    %v3911 = vcombine.high %v3298, %v3300
    %v3913 = vunpack.c.l.s4 1983009808
    %v3914 = vunpack.c.0.s8 %v3913
    %v3915 = vlaneseq
    %v3916 = vshrl.u32 %v3915, 7
    %v3917 = vsub.s32 %v3914, %v3916
    %v3918 = vrot.slane %v3910, %v3917
    %v3920 = vunpack.c.l.s4 1983009808
    %v3921 = vunpack.c.0.s8 %v3920
    %v3922 = vlaneseq
    %v3923 = vshrl.u32 %v3922, 7
    %v3924 = vsub.s32 %v3921, %v3923
    %v3925 = vrot.slane %v3911, %v3924
    %v3926 = vcombine.low %v3299, %v3301
    %v3927 = vcombine.high %v3299, %v3301
    %v3929 = vunpack.c.l.s4 1983009808
    %v3930 = vunpack.c.0.s8 %v3929
    %v3931 = vlaneseq
    %v3932 = vshrl.u32 %v3931, 7
    %v3933 = vsub.s32 %v3930, %v3932
    %v3934 = vrot.slane %v3926, %v3933
    %v3936 = vunpack.c.l.s4 1983009808
    %v3937 = vunpack.c.0.s8 %v3936
    %v3938 = vlaneseq
    %v3939 = vshrl.u32 %v3938, 7
    %v3940 = vsub.s32 %v3937, %v3939
    %v3941 = vrot.slane %v3927, %v3940
    %v3942 = vcombine.high %v3302, 0.0
    %v3944 = vunpack.c.l.s4 1983009808
    %v3945 = vunpack.c.0.s8 %v3944
    %v3946 = vlaneseq
    %v3947 = vshrl.u32 %v3946, 7
    %v3948 = vsub.s32 %v3945, %v3947
    %v3949 = vrot.slane %v3302, %v3948
    %v3951 = vunpack.c.l.s4 1983009808
    %v3952 = vunpack.c.0.s8 %v3951
    %v3953 = vlaneseq
    %v3954 = vshrl.u32 %v3953, 7
    %v3955 = vsub.s32 %v3952, %v3954
    %v3956 = vrot.slane %v3942, %v3955
    %v3957 = vcombine.high %v3303, 0.0
    %v3959 = vunpack.c.l.s4 1983009808
    %v3960 = vunpack.c.0.s8 %v3959
    %v3961 = vlaneseq
    %v3962 = vshrl.u32 %v3961, 7
    %v3963 = vsub.s32 %v3960, %v3962
    %v3964 = vrot.slane %v3303, %v3963
    %v3966 = vunpack.c.l.s4 1983009808
    %v3967 = vunpack.c.0.s8 %v3966
    %v3968 = vlaneseq
    %v3969 = vshrl.u32 %v3968, 7
    %v3970 = vsub.s32 %v3967, %v3969
    %v3971 = vrot.slane %v3957, %v3970
    %v3972 = vcombine.low %v3918, %v3934
    %v3973 = vcombine.high %v3918, %v3934
    %v3975 = vunpack.c.l.s4 1934713408
    %v3976 = vunpack.c.0.s8 %v3975
    %v3977 = vlaneseq
    %v3978 = vshrl.u32 %v3977, 7
    %v3979 = vsub.s32 %v3976, %v3978
    %v3980 = vrot.slane %v3972, %v3979
    %v3982 = vunpack.c.l.s4 1934713408
    %v3983 = vunpack.c.0.s8 %v3982
    %v3984 = vlaneseq
    %v3985 = vshrl.u32 %v3984, 7
    %v3986 = vsub.s32 %v3983, %v3985
    %v3987 = vrot.slane %v3973, %v3986
    %v3988 = vcombine.low %v3925, %v3941
    %v3989 = vcombine.high %v3925, %v3941
    %v3991 = vunpack.c.l.s4 1934713408
    %v3992 = vunpack.c.0.s8 %v3991
    %v3993 = vlaneseq
    %v3994 = vshrl.u32 %v3993, 7
    %v3995 = vsub.s32 %v3992, %v3994
    %v3996 = vrot.slane %v3988, %v3995
    %v3998 = vunpack.c.l.s4 1934713408
    %v3999 = vunpack.c.0.s8 %v3998
    %v4000 = vlaneseq
    %v4001 = vshrl.u32 %v4000, 7
    %v4002 = vsub.s32 %v3999, %v4001
    %v4003 = vrot.slane %v3989, %v4002
    %v4004 = vcombine.low %v3949, %v3964
    %v4005 = vcombine.high %v3949, %v3964
    %v4007 = vunpack.c.l.s4 1934713408
    %v4008 = vunpack.c.0.s8 %v4007
    %v4009 = vlaneseq
    %v4010 = vshrl.u32 %v4009, 7
    %v4011 = vsub.s32 %v4008, %v4010
    %v4012 = vrot.slane %v4004, %v4011
    %v4014 = vunpack.c.l.s4 1934713408
    %v4015 = vunpack.c.0.s8 %v4014
    %v4016 = vlaneseq
    %v4017 = vshrl.u32 %v4016, 7
    %v4018 = vsub.s32 %v4015, %v4017
    %v4019 = vrot.slane %v4005, %v4018
    %v4020 = vcombine.low %v3956, %v3971
    %v4021 = vcombine.high %v3956, %v3971
    %v4023 = vunpack.c.l.s4 1934713408
    %v4024 = vunpack.c.0.s8 %v4023
    %v4025 = vlaneseq
    %v4026 = vshrl.u32 %v4025, 7
    %v4027 = vsub.s32 %v4024, %v4026
    %v4028 = vrot.slane %v4020, %v4027
    %v4030 = vunpack.c.l.s4 1934713408
    %v4031 = vunpack.c.0.s8 %v4030
    %v4032 = vlaneseq
    %v4033 = vshrl.u32 %v4032, 7
    %v4034 = vsub.s32 %v4031, %v4033
    %v4035 = vrot.slane %v4021, %v4034
    %v4036 = vcombine.low %v3980, %v4012
    %v4037 = vcombine.high %v3980, %v4012
    %v4038 = vcombine.low %v3987, %v4019
    %v4039 = vcombine.high %v3987, %v4019
    %v4040 = vcombine.low %v3996, %v4028
    %v4041 = vcombine.high %v3996, %v4028
    %v4042 = vcombine.low %v4003, %v4035
    %v4043 = vcombine.high %v4003, %v4035
    %4045 = vrot.lane.b32.xlu0 %v4037, 4
    %v4046 = vpop.permute.xlu0 %4045
    %4049 = vrot.lane.b32.xlu0 %v4038, 8
    %v4050 = vpop.permute.xlu0 %4049
    %4053 = vrot.lane.b32.xlu0 %v4039, 12
    %v4054 = vpop.permute.xlu0 %4053
    %4057 = vrot.lane.b32.xlu0 %v4040, 16
    %v4058 = vpop.permute.xlu0 %4057
    %4061 = vrot.lane.b32.xlu0 %v4041, 20
    %v4062 = vpop.permute.xlu0 %4061
    %4065 = vrot.lane.b32.xlu0 %v4042, 24
    %v4066 = vpop.permute.xlu0 %4065
    %4069 = vrot.lane.b32.xlu0 %v4043, 28
    %v4070 = vpop.permute.xlu0 %4069
    %v4072 = vsel %vm585, %v4036, %v4046
    %v4073 = vsel %vm135, %v4072, %v4050
    %v4074 = vsel %vm3562, %v4073, %v4054
    %v4075 = vsel %vm3564, %v4074, %v4058
    %v4076 = vsel %vm3566, %v4075, %v4062
    %v4077 = vsel %vm3568, %v4076, %v4066
    %v4078 = vsel %vm3570, %v4077, %v4070
    %4080 = vrot.lane.b32.xlu0 %v3740, 32
    %v4081 = vpop.permute.xlu0 %4080
    %4084 = vrot.lane.b32.xlu0 %v3909, 64
    %v4085 = vpop.permute.xlu0 %4084
    %4088 = vrot.lane.b32.xlu0 %v4078, 96
    %v4089 = vpop.permute.xlu0 %4088
    %vm4091 = vcmask 261120
    %v4092 = vsel %vm4091, %v3571, %v4081
    %v4093 = vsel %vm2005, %v4092, %v4085
    %vm4094 = vcmask 785408
    %v4095 = vsel %vm4094, %v4093, %v4089
    %4096 = vst [vmem:[#allocation5] sm:$0x3f] %v4095
    // Predicated region
    $region30: #{tpu_custom_call.1} parent=1 // pred_check
      _
    $region31: #{tpu_custom_call.1} parent=1 // pred_check_branch
      %4098 = sbr.rel (0) target = $region33
    $region32: #{tpu_custom_call.1} parent=1 // pred_region
      %s4100 = ssub.s32 128, 128
      %4101 = vsyncadd [#allocation3], %s4100
      %s4103 = sshll.u32 [#allocation5], 4
      %s4104 = int_to_ptr.vmem [resolvable:$true] %s4103
      %4106 = dma.vmem_to_hbm [thread:$0]  %s4104, 128, %s6, [#allocation3]
    $region33: #{tpu_custom_call.1} parent=1 // pred_fallthru
      _
    // Predicated region
    $region34: #{tpu_custom_call.1} parent=1 // pred_check
      _
    $region35: #{tpu_custom_call.1} parent=1 // pred_check_branch
      %4108 = sbr.rel (0) target = $region37
    $region36: #{tpu_custom_call.1} parent=1 // pred_region
      %4109 = dma.done [#allocation3], 128
    $region37: #{tpu_custom_call.1} parent=1 // pred_fallthru
      _
    %4110 = vsyncpa [#allocation3], 1
    %4111 = vsyncpa [#allocation4], 1

</llo_original>
